<compile_context>
chip_gen: v7x
topology: tpu7x:2x2x1
jax: 0.10.0
libtpu: 0.0.40
codegen_flags: <defaults>
</compile_context>

<pallas_src>
import functools

import jax
import jax.numpy as jnp
from jax import lax
from jax.experimental import pallas as pl
from jax.experimental.pallas import tpu as pltpu


# ----------------------------------------------------------------------------- helpers
def _vmem_full(shape):
    """One whole-array block per grid step (grid=(1,)) -> satisfies the full-dims rule."""
    return pl.BlockSpec(shape, lambda i: (0,) * len(shape))


_UNROLL_LIMIT = 128   # fully unroll the GRU recurrence when the (static) seq-len is small


# ----------------------------------------------------------------------------- fused kernel
def fused_kernel(num_gcn_layers, hidden, *refs):
    """relu(BN(A_hat @ x @ W + b)) x L  ->  BiGRU  ->  (identity attention)  ->  Linear."""
    H = hidden
    n_in = 2 + 4 * num_gcn_layers + 8 + 3
    adj_ref, x_ref = refs[0], refs[1]
    gcn_refs = refs[2:2 + 4 * num_gcn_layers]
    (wih_f_ref, whh_f_ref, bih_f_ref, bhh_f_ref,
     wih_b_ref, whh_b_ref, bih_b_ref, bhh_b_ref,
     wo_f_ref, wo_b_ref, bo_ref) = refs[2 + 4 * num_gcn_layers:n_in]
    out_ref = refs[n_in]
    gi_f_ref, gi_b_ref, fwd_ref, bwd_ref = refs[n_in + 1:]

    # ------------------------------ GCN stack (all layers VMEM-resident) ---------------
    adj = adj_ref[...]                                    # bf16 [N, N]
    h = x_ref[...]                                        # bf16 [N, Cin]
    inv_n = 1.0 / adj.shape[0]
    for l in range(num_gcn_layers):
        w = gcn_refs[4 * l][...]                          # bf16 [Cin_l, H]
        b = gcn_refs[4 * l + 1][...]                      # f32  [1, H]
        gamma = gcn_refs[4 * l + 2][...]                  # f32  [1, H]
        beta = gcn_refs[4 * l + 3][...]                   # f32  [1, H]
        agg = jnp.dot(adj, h, preferred_element_type=jnp.float32)              # [N, Cin_l]
        z = jnp.dot(agg.astype(jnp.bfloat16), w,
                    preferred_element_type=jnp.float32) + b                    # [N, H]
        # BatchNorm1d with batch statistics (training-mode, biased variance):
        # one sum / sum-of-squares pass + a single fused affine, then relu (dropout=0).
        mean = jnp.sum(z, axis=0, keepdims=True) * inv_n
        var = jnp.sum(z * z, axis=0, keepdims=True) * inv_n - mean * mean
        scale = gamma * lax.rsqrt(var + 1e-5)
        shift = beta - mean * scale
        h = jnp.maximum(z * scale + shift, 0.0).astype(jnp.bfloat16)

    # ------------------------------ Bidirectional GRU ----------------------------------
    T = h.shape[0]
    # Input projections for the whole sequence at once (MXU), parked in VMEM scratch.
    gi_f_ref[...] = jnp.dot(h, wih_f_ref[...], preferred_element_type=jnp.float32) + bih_f_ref[...]
    gi_b_ref[...] = jnp.dot(h, wih_b_ref[...], preferred_element_type=jnp.float32) + bih_b_ref[...]

    # Hoisted: recurrent weights (already transposed on host) + biases read ONCE.
    whh_f = whh_f_ref[...]                                # bf16 [H, 3H]
    whh_b = whh_b_ref[...]
    bhh_f = bhh_f_ref[...]                                # f32 [1, 3H]
    bhh_b = bhh_b_ref[...]

    def step(i, carry):
        """One timestep of BOTH directions, interleaved so MXU/EUP/VPU work co-issues."""
        hf, hb = carry                                    # f32 [1, H] each
        tb = T - 1 - i
        ghf = jnp.dot(hf.astype(jnp.bfloat16), whh_f,
                      preferred_element_type=jnp.float32) + bhh_f
        ghb = jnp.dot(hb.astype(jnp.bfloat16), whh_b,
                      preferred_element_type=jnp.float32) + bhh_b
        gif = gi_f_ref[pl.ds(i, 1), :]
        gib = gi_b_ref[pl.ds(tb, 1), :]
        # PyTorch GRU gate order (r, z, n); n uses r * (W_hn h + b_hn).
        rf = jax.nn.sigmoid(gif[:, 0:H] + ghf[:, 0:H])
        zf = jax.nn.sigmoid(gif[:, H:2 * H] + ghf[:, H:2 * H])
        nf = jnp.tanh(gif[:, 2 * H:3 * H] + rf * ghf[:, 2 * H:3 * H])
        hf = (1.0 - zf) * nf + zf * hf
        rb = jax.nn.sigmoid(gib[:, 0:H] + ghb[:, 0:H])
        zb = jax.nn.sigmoid(gib[:, H:2 * H] + ghb[:, H:2 * H])
        nb = jnp.tanh(gib[:, 2 * H:3 * H] + rb * ghb[:, 2 * H:3 * H])
        hb = (1.0 - zb) * nb + zb * hb
        fwd_ref[pl.ds(i, 1), :] = hf                      # single row store into VMEM scratch
        bwd_ref[pl.ds(tb, 1), :] = hb
        return (hf, hb)

    h0 = jnp.zeros((1, H), jnp.float32)
    if T <= _UNROLL_LIMIT:
        carry = (h0, h0)
        for i in range(T):                                # static full unroll (LLO visibility)
            carry = step(i, carry)
    else:
        lax.fori_loop(0, T, step, (h0, h0))

    # ------------------------------ Attention + output Linear --------------------------
    # Attention over the singleton sequence dim of [N,1,2H]: softmax over a length-1
    # axis is identically 1 -> identity pooling (wa/ba never affect the output).
    # The [N,2H] concat is folded into two half-matmuls against the split Wo.
    fwd = fwd_ref[...].astype(jnp.bfloat16)
    bwd = bwd_ref[...].astype(jnp.bfloat16)
    out_ref[...] = (jnp.dot(fwd, wo_f_ref[...], preferred_element_type=jnp.float32)
                    + jnp.dot(bwd, wo_b_ref[...], preferred_element_type=jnp.float32)
                    + bo_ref[...])


# ----------------------------------------------------------------------------- glue
def build_norm_adj(edge_index, edge_weight, n):
    src, dst = edge_index[0], edge_index[1]
    a = jnp.zeros((n, n), jnp.float32).at[dst, src].add(edge_weight)
    a = a + jnp.eye(n, dtype=jnp.float32)                 # self loops
    deg = a.sum(axis=1)
    dinv = jnp.where(deg > 0, 1.0 / jnp.sqrt(deg), 0.0)
    return dinv[:, None] * a * dinv[None, :]


def init_params(key, in_channels, hidden, num_gcn_layers, num_predictions):
    n_layers = 1 + max(num_gcn_layers - 2, 0)
    keys = iter(jax.random.split(key, 64))
    p = {"gcn": []}
    c_in = in_channels
    for _ in range(n_layers):
        p["gcn"].append(dict(
            w=0.1 * jax.random.normal(next(keys), (c_in, hidden), jnp.float32),
            b=0.1 * jax.random.normal(next(keys), (1, hidden), jnp.float32),
            gamma=jnp.ones((1, hidden), jnp.float32),
            beta=jnp.zeros((1, hidden), jnp.float32),
        ))
        c_in = hidden
    for d in ("f", "b"):
        p[f"wih_{d}"] = 0.1 * jax.random.normal(next(keys), (3 * hidden, hidden), jnp.float32)
        p[f"whh_{d}"] = 0.1 * jax.random.normal(next(keys), (3 * hidden, hidden), jnp.float32)
        p[f"bih_{d}"] = 0.1 * jax.random.normal(next(keys), (1, 3 * hidden), jnp.float32)
        p[f"bhh_{d}"] = 0.1 * jax.random.normal(next(keys), (1, 3 * hidden), jnp.float32)
    two_h = 2 * hidden
    # Attention linear params kept for module fidelity -- they mathematically never
    # affect the output (softmax over a length-1 dim), so the kernel never reads them.
    p["wa"] = 0.1 * jax.random.normal(next(keys), (two_h, 1), jnp.float32)
    p["ba"] = 0.1 * jax.random.normal(next(keys), (1, 1), jnp.float32)
    p["wo"] = 0.1 * jax.random.normal(next(keys), (two_h, num_predictions), jnp.float32)
    p["bo"] = 0.1 * jax.random.normal(next(keys), (1, num_predictions), jnp.float32)
    return p


@functools.partial(jax.jit, static_argnames=("hidden", "num_predictions"))
def forward(params, x, edge_index, edge_weight, *, hidden, num_predictions):
    n = x.shape[0]
    adj = build_norm_adj(edge_index, edge_weight, n).astype(jnp.bfloat16)

    num_gcn_layers = len(params["gcn"])
    args = [adj, x.astype(jnp.bfloat16)]
    for lp in params["gcn"]:
        args += [lp["w"].astype(jnp.bfloat16), lp["b"], lp["gamma"], lp["beta"]]
    for d in ("f", "b"):
        args += [params[f"wih_{d}"].T.astype(jnp.bfloat16),   # pre-transposed on host
                 params[f"whh_{d}"].T.astype(jnp.bfloat16),   # -> no in-loop transpose
                 params[f"bih_{d}"], params[f"bhh_{d}"]]
    args += [params["wo"][:hidden].astype(jnp.bfloat16),      # forward half of Wo
             params["wo"][hidden:].astype(jnp.bfloat16),      # backward half of Wo
             params["bo"]]

    out = pl.pallas_call(
        functools.partial(fused_kernel, num_gcn_layers, hidden),
        grid=(1,),
        in_specs=[_vmem_full(a.shape) for a in args],
        out_specs=_vmem_full((n, num_predictions)),
        out_shape=jax.ShapeDtypeStruct((n, num_predictions), jnp.float32),
        scratch_shapes=[
            pltpu.VMEM((n, 3 * hidden), jnp.float32),   # gi forward  (seq x 3H)
            pltpu.VMEM((n, 3 * hidden), jnp.float32),   # gi backward (seq x 3H)
            pltpu.VMEM((n, hidden), jnp.float32),       # forward hidden states
            pltpu.VMEM((n, hidden), jnp.float32),       # backward hidden states
        ],
        compiler_params=pltpu.CompilerParams(
            dimension_semantics=("arbitrary",),
            vmem_limit_bytes=64 << 20,
        ),
    )(*args)
    return jnp.squeeze(out)


# ----------------------------------------------------------------------------- main
if __name__ == "__main__":
    N = 16            # number of graph nodes (also the GRU sequence length)
    IN_CH = 4
    HIDDEN = 32
    NUM_GCN_LAYERS = 3      # -> 2 GCN layers in the ModuleList
    NUM_PRED = 4

    key = jax.random.PRNGKey(0)
    k_x, k_w, k_p = jax.random.split(key, 3)

    x = jax.random.normal(k_x, (N, IN_CH), jnp.float32)

    # deterministic ring graph (both directions) with random positive weights
    idx = jnp.arange(N, dtype=jnp.int32)
    src = jnp.concatenate([idx, (idx + 1) % N])
    dst = jnp.concatenate([(idx + 1) % N, idx])
    edge_index = jnp.stack([src, dst], axis=0)                      # [2, 2N]
    edge_weight = jax.random.uniform(k_w, (2 * N,), jnp.float32, 0.5, 1.5)

    params = init_params(k_p, IN_CH, HIDDEN, NUM_GCN_LAYERS, NUM_PRED)

    out = forward(params, x, edge_index, edge_weight,
                  hidden=HIDDEN, num_predictions=NUM_PRED)
    jax.block_until_ready(out)
    assert out.shape == (N, NUM_PRED), out.shape
    assert bool(jnp.all(jnp.isfinite(out)))
    print("KERNEL_OK")
</pallas_src>

<mosaic_0001>
module attributes {stable_mosaic.version = 11 : i64} {
  func.func private @main(%arg0: i32) attributes {dimension_semantics = [#tpu.dimension_semantics<core_parallel>], iteration_bounds = array<i64: 2>, tpu.core_type = #tpu.core_type<sc_scalar_subcore>, window_params = []} {
    return
  }
}

module attributes {stable_mosaic.version = 11 : i64} {
  func.func private @main(%arg0: i32) attributes {dimension_semantics = [#tpu.dimension_semantics<core_parallel>], iteration_bounds = array<i64: 2>, tpu.core_type = #tpu.core_type<sc_scalar_subcore>, window_params = []} {
    return
  }
}

module attributes {stable_mosaic.version = 11 : i64} {
  func.func @fused_kernel(%arg0: i32, %arg1: memref<16x16xbf16, #tpu.memory_space<vmem>>, %arg2: memref<16x4xbf16, #tpu.memory_space<vmem>>, %arg3: memref<4x32xbf16, #tpu.memory_space<vmem>>, %arg4: memref<1x32xf32, #tpu.memory_space<vmem>>, %arg5: memref<1x32xf32, #tpu.memory_space<vmem>>, %arg6: memref<1x32xf32, #tpu.memory_space<vmem>>, %arg7: memref<32x32xbf16, #tpu.memory_space<vmem>>, %arg8: memref<1x32xf32, #tpu.memory_space<vmem>>, %arg9: memref<1x32xf32, #tpu.memory_space<vmem>>, %arg10: memref<1x32xf32, #tpu.memory_space<vmem>>, %arg11: memref<32x96xbf16, #tpu.memory_space<vmem>>, %arg12: memref<32x96xbf16, #tpu.memory_space<vmem>>, %arg13: memref<1x96xf32, #tpu.memory_space<vmem>>, %arg14: memref<1x96xf32, #tpu.memory_space<vmem>>, %arg15: memref<32x96xbf16, #tpu.memory_space<vmem>>, %arg16: memref<32x96xbf16, #tpu.memory_space<vmem>>, %arg17: memref<1x96xf32, #tpu.memory_space<vmem>>, %arg18: memref<1x96xf32, #tpu.memory_space<vmem>>, %arg19: memref<32x4xbf16, #tpu.memory_space<vmem>>, %arg20: memref<32x4xbf16, #tpu.memory_space<vmem>>, %arg21: memref<1x4xf32, #tpu.memory_space<vmem>>, %arg22: memref<16x4xf32, #tpu.memory_space<vmem>>, %arg23: memref<16x96xf32, #tpu.memory_space<vmem>>, %arg24: memref<16x96xf32, #tpu.memory_space<vmem>>, %arg25: memref<16x32xf32, #tpu.memory_space<vmem>>, %arg26: memref<16x32xf32, #tpu.memory_space<vmem>>) attributes {dimension_semantics = [#tpu.dimension_semantics<arbitrary>], iteration_bounds = array<i64: 1>, scalar_prefetch = 0 : i64, scratch_operands = 4 : i64, tpu.core_type = #tpu.core_type<tc>, window_params = [{pipeline_mode = #tpu.pipeline_mode<synchronous>, transform_indices = @transform_0, window_bounds = array<i64: 16, 16>}, {pipeline_mode = #tpu.pipeline_mode<synchronous>, transform_indices = @transform_1, window_bounds = array<i64: 16, 4>}, {pipeline_mode = #tpu.pipeline_mode<synchronous>, transform_indices = @transform_2, window_bounds = array<i64: 4, 32>}, {pipeline_mode = #tpu.pipeline_mode<synchronous>, transform_indices = @transform_3, window_bounds = array<i64: 1, 32>}, {pipeline_mode = #tpu.pipeline_mode<synchronous>, transform_indices = @transform_4, window_bounds = array<i64: 1, 32>}, {pipeline_mode = #tpu.pipeline_mode<synchronous>, transform_indices = @transform_5, window_bounds = array<i64: 1, 32>}, {pipeline_mode = #tpu.pipeline_mode<synchronous>, transform_indices = @transform_6, window_bounds = array<i64: 32, 32>}, {pipeline_mode = #tpu.pipeline_mode<synchronous>, transform_indices = @transform_7, window_bounds = array<i64: 1, 32>}, {pipeline_mode = #tpu.pipeline_mode<synchronous>, transform_indices = @transform_8, window_bounds = array<i64: 1, 32>}, {pipeline_mode = #tpu.pipeline_mode<synchronous>, transform_indices = @transform_9, window_bounds = array<i64: 1, 32>}, {pipeline_mode = #tpu.pipeline_mode<synchronous>, transform_indices = @transform_10, window_bounds = array<i64: 32, 96>}, {pipeline_mode = #tpu.pipeline_mode<synchronous>, transform_indices = @transform_11, window_bounds = array<i64: 32, 96>}, {pipeline_mode = #tpu.pipeline_mode<synchronous>, transform_indices = @transform_12, window_bounds = array<i64: 1, 96>}, {pipeline_mode = #tpu.pipeline_mode<synchronous>, transform_indices = @transform_13, window_bounds = array<i64: 1, 96>}, {pipeline_mode = #tpu.pipeline_mode<synchronous>, transform_indices = @transform_14, window_bounds = array<i64: 32, 96>}, {pipeline_mode = #tpu.pipeline_mode<synchronous>, transform_indices = @transform_15, window_bounds = array<i64: 32, 96>}, {pipeline_mode = #tpu.pipeline_mode<synchronous>, transform_indices = @transform_16, window_bounds = array<i64: 1, 96>}, {pipeline_mode = #tpu.pipeline_mode<synchronous>, transform_indices = @transform_17, window_bounds = array<i64: 1, 96>}, {pipeline_mode = #tpu.pipeline_mode<synchronous>, transform_indices = @transform_18, window_bounds = array<i64: 32, 4>}, {pipeline_mode = #tpu.pipeline_mode<synchronous>, transform_indices = @transform_19, window_bounds = array<i64: 32, 4>}, {pipeline_mode = #tpu.pipeline_mode<synchronous>, transform_indices = @transform_20, window_bounds = array<i64: 1, 4>}, {pipeline_mode = #tpu.pipeline_mode<synchronous>, transform_indices = @transform_21, window_bounds = array<i64: 16, 4>}]} {
    %c0 = arith.constant 0 : index
    %c0_0 = arith.constant 0 : index
    %0 = vector.load %arg1[%c0, %c0_0] : memref<16x16xbf16, #tpu.memory_space<vmem>>, vector<16x16xbf16>
    %c0_1 = arith.constant 0 : index
    %c0_2 = arith.constant 0 : index
    %1 = vector.load %arg2[%c0_1, %c0_2] : memref<16x4xbf16, #tpu.memory_space<vmem>>, vector<16x4xbf16>
    %c0_3 = arith.constant 0 : index
    %c0_4 = arith.constant 0 : index
    %2 = vector.load %arg3[%c0_3, %c0_4] : memref<4x32xbf16, #tpu.memory_space<vmem>>, vector<4x32xbf16>
    %c0_5 = arith.constant 0 : index
    %c0_6 = arith.constant 0 : index
    %3 = vector.load %arg4[%c0_5, %c0_6] : memref<1x32xf32, #tpu.memory_space<vmem>>, vector<1x32xf32>
    %c0_7 = arith.constant 0 : index
    %c0_8 = arith.constant 0 : index
    %4 = vector.load %arg5[%c0_7, %c0_8] : memref<1x32xf32, #tpu.memory_space<vmem>>, vector<1x32xf32>
    %c0_9 = arith.constant 0 : index
    %c0_10 = arith.constant 0 : index
    %5 = vector.load %arg6[%c0_9, %c0_10] : memref<1x32xf32, #tpu.memory_space<vmem>>, vector<1x32xf32>
    %cst = arith.constant dense<0.000000e+00> : vector<16x4xf32>
    %6 = tpu.matmul %0, %1, %cst {dimension_numbers = #tpu.dot_dimension_numbers<[1], [0], [0], [1], [0, 0, 1, 1], [], []>} : vector<16x16xbf16>, vector<16x4xbf16>, vector<16x4xf32> -> vector<16x4xf32>
    %7 = arith.truncf %6 : vector<16x4xf32> to vector<16x4xbf16>
    %cst_11 = arith.constant dense<0.000000e+00> : vector<16x32xf32>
    %8 = tpu.matmul %7, %2, %cst_11 {dimension_numbers = #tpu.dot_dimension_numbers<[1], [0], [0], [1], [0, 0, 1, 1], [], []>} : vector<16x4xbf16>, vector<4x32xbf16>, vector<16x32xf32> -> vector<16x32xf32>
    %9 = vector.broadcast %3 : vector<1x32xf32> to vector<16x32xf32>
    %10 = arith.addf %8, %9 : vector<16x32xf32>
    %cst_12 = arith.constant dense<0.000000e+00> : vector<32xf32>
    %11 = vector.multi_reduction <add>, %10, %cst_12 [0] : vector<16x32xf32> to vector<32xf32>
    %12 = vector.shape_cast %11 : vector<32xf32> to vector<1x32xf32>
    %cst_13 = arith.constant 6.250000e-02 : f32
    %13 = vector.broadcast %cst_13 : f32 to vector<1x32xf32>
    %14 = arith.mulf %12, %13 : vector<1x32xf32>
    %15 = arith.mulf %10, %10 : vector<16x32xf32>
    %cst_14 = arith.constant dense<0.000000e+00> : vector<32xf32>
    %16 = vector.multi_reduction <add>, %15, %cst_14 [0] : vector<16x32xf32> to vector<32xf32>
    %17 = vector.shape_cast %16 : vector<32xf32> to vector<1x32xf32>
    %cst_15 = arith.constant 6.250000e-02 : f32
    %18 = vector.broadcast %cst_15 : f32 to vector<1x32xf32>
    %19 = arith.mulf %17, %18 : vector<1x32xf32>
    %20 = arith.mulf %14, %14 : vector<1x32xf32>
    %21 = arith.subf %19, %20 : vector<1x32xf32>
    %cst_16 = arith.constant 9.99999974E-6 : f32
    %22 = vector.broadcast %cst_16 : f32 to vector<1x32xf32>
    %23 = arith.addf %21, %22 : vector<1x32xf32>
    %24 = math.rsqrt %23 : vector<1x32xf32>
    %25 = arith.mulf %4, %24 : vector<1x32xf32>
    %26 = arith.mulf %14, %25 : vector<1x32xf32>
    %27 = arith.subf %5, %26 : vector<1x32xf32>
    %28 = vector.broadcast %25 : vector<1x32xf32> to vector<16x32xf32>
    %29 = arith.mulf %10, %28 : vector<16x32xf32>
    %30 = vector.broadcast %27 : vector<1x32xf32> to vector<16x32xf32>
    %31 = arith.addf %29, %30 : vector<16x32xf32>
    %cst_17 = arith.constant 0.000000e+00 : f32
    %32 = vector.broadcast %cst_17 : f32 to vector<16x32xf32>
    %33 = arith.maximumf %31, %32 : vector<16x32xf32>
    %34 = arith.truncf %33 : vector<16x32xf32> to vector<16x32xbf16>
    %c0_18 = arith.constant 0 : index
    %c0_19 = arith.constant 0 : index
    %35 = vector.load %arg7[%c0_18, %c0_19] : memref<32x32xbf16, #tpu.memory_space<vmem>>, vector<32x32xbf16>
    %c0_20 = arith.constant 0 : index
    %c0_21 = arith.constant 0 : index
    %36 = vector.load %arg8[%c0_20, %c0_21] : memref<1x32xf32, #tpu.memory_space<vmem>>, vector<1x32xf32>
    %c0_22 = arith.constant 0 : index
    %c0_23 = arith.constant 0 : index
    %37 = vector.load %arg9[%c0_22, %c0_23] : memref<1x32xf32, #tpu.memory_space<vmem>>, vector<1x32xf32>
    %c0_24 = arith.constant 0 : index
    %c0_25 = arith.constant 0 : index
    %38 = vector.load %arg10[%c0_24, %c0_25] : memref<1x32xf32, #tpu.memory_space<vmem>>, vector<1x32xf32>
    %cst_26 = arith.constant dense<0.000000e+00> : vector<16x32xf32>
    %39 = tpu.matmul %0, %34, %cst_26 {dimension_numbers = #tpu.dot_dimension_numbers<[1], [0], [0], [1], [0, 0, 1, 1], [], []>} : vector<16x16xbf16>, vector<16x32xbf16>, vector<16x32xf32> -> vector<16x32xf32>
    %40 = arith.truncf %39 : vector<16x32xf32> to vector<16x32xbf16>
    %cst_27 = arith.constant dense<0.000000e+00> : vector<16x32xf32>
    %41 = tpu.matmul %40, %35, %cst_27 {dimension_numbers = #tpu.dot_dimension_numbers<[1], [0], [0], [1], [0, 0, 1, 1], [], []>} : vector<16x32xbf16>, vector<32x32xbf16>, vector<16x32xf32> -> vector<16x32xf32>
    %42 = vector.broadcast %36 : vector<1x32xf32> to vector<16x32xf32>
    %43 = arith.addf %41, %42 : vector<16x32xf32>
    %cst_28 = arith.constant dense<0.000000e+00> : vector<32xf32>
    %44 = vector.multi_reduction <add>, %43, %cst_28 [0] : vector<16x32xf32> to vector<32xf32>
    %45 = vector.shape_cast %44 : vector<32xf32> to vector<1x32xf32>
    %cst_29 = arith.constant 6.250000e-02 : f32
    %46 = vector.broadcast %cst_29 : f32 to vector<1x32xf32>
    %47 = arith.mulf %45, %46 : vector<1x32xf32>
    %48 = arith.mulf %43, %43 : vector<16x32xf32>
    %cst_30 = arith.constant dense<0.000000e+00> : vector<32xf32>
    %49 = vector.multi_reduction <add>, %48, %cst_30 [0] : vector<16x32xf32> to vector<32xf32>
    %50 = vector.shape_cast %49 : vector<32xf32> to vector<1x32xf32>
    %cst_31 = arith.constant 6.250000e-02 : f32
    %51 = vector.broadcast %cst_31 : f32 to vector<1x32xf32>
    %52 = arith.mulf %50, %51 : vector<1x32xf32>
    %53 = arith.mulf %47, %47 : vector<1x32xf32>
    %54 = arith.subf %52, %53 : vector<1x32xf32>
    %cst_32 = arith.constant 9.99999974E-6 : f32
    %55 = vector.broadcast %cst_32 : f32 to vector<1x32xf32>
    %56 = arith.addf %54, %55 : vector<1x32xf32>
    %57 = math.rsqrt %56 : vector<1x32xf32>
    %58 = arith.mulf %37, %57 : vector<1x32xf32>
    %59 = arith.mulf %47, %58 : vector<1x32xf32>
    %60 = arith.subf %38, %59 : vector<1x32xf32>
    %61 = vector.broadcast %58 : vector<1x32xf32> to vector<16x32xf32>
    %62 = arith.mulf %43, %61 : vector<16x32xf32>
    %63 = vector.broadcast %60 : vector<1x32xf32> to vector<16x32xf32>
    %64 = arith.addf %62, %63 : vector<16x32xf32>
    %cst_33 = arith.constant 0.000000e+00 : f32
    %65 = vector.broadcast %cst_33 : f32 to vector<16x32xf32>
    %66 = arith.maximumf %64, %65 : vector<16x32xf32>
    %67 = arith.truncf %66 : vector<16x32xf32> to vector<16x32xbf16>
    %c0_34 = arith.constant 0 : index
    %c0_35 = arith.constant 0 : index
    %68 = vector.load %arg11[%c0_34, %c0_35] : memref<32x96xbf16, #tpu.memory_space<vmem>>, vector<32x96xbf16>
    %cst_36 = arith.constant dense<0.000000e+00> : vector<16x96xf32>
    %69 = tpu.matmul %67, %68, %cst_36 {dimension_numbers = #tpu.dot_dimension_numbers<[1], [0], [0], [1], [0, 0, 1, 1], [], []>} : vector<16x32xbf16>, vector<32x96xbf16>, vector<16x96xf32> -> vector<16x96xf32>
    %c0_37 = arith.constant 0 : index
    %c0_38 = arith.constant 0 : index
    %70 = vector.load %arg13[%c0_37, %c0_38] : memref<1x96xf32, #tpu.memory_space<vmem>>, vector<1x96xf32>
    %71 = vector.broadcast %70 : vector<1x96xf32> to vector<16x96xf32>
    %72 = arith.addf %69, %71 : vector<16x96xf32>
    %c0_39 = arith.constant 0 : index
    %c0_40 = arith.constant 0 : index
    %73 = vector.load %arg23[%c0_39, %c0_40] : memref<16x96xf32, #tpu.memory_space<vmem>>, vector<16x96xf32>
    tpu.vector_store %arg23[%c0_39, %c0_40], %72 {strides = array<i32>} : memref<16x96xf32, #tpu.memory_space<vmem>>, vector<16x96xf32>,
    %c0_41 = arith.constant 0 : index
    %c0_42 = arith.constant 0 : index
    %74 = vector.load %arg15[%c0_41, %c0_42] : memref<32x96xbf16, #tpu.memory_space<vmem>>, vector<32x96xbf16>
    %cst_43 = arith.constant dense<0.000000e+00> : vector<16x96xf32>
    %75 = tpu.matmul %67, %74, %cst_43 {dimension_numbers = #tpu.dot_dimension_numbers<[1], [0], [0], [1], [0, 0, 1, 1], [], []>} : vector<16x32xbf16>, vector<32x96xbf16>, vector<16x96xf32> -> vector<16x96xf32>
    %c0_44 = arith.constant 0 : index
    %c0_45 = arith.constant 0 : index
    %76 = vector.load %arg17[%c0_44, %c0_45] : memref<1x96xf32, #tpu.memory_space<vmem>>, vector<1x96xf32>
    %77 = vector.broadcast %76 : vector<1x96xf32> to vector<16x96xf32>
    %78 = arith.addf %75, %77 : vector<16x96xf32>
    %c0_46 = arith.constant 0 : index
    %c0_47 = arith.constant 0 : index
    %79 = vector.load %arg24[%c0_46, %c0_47] : memref<16x96xf32, #tpu.memory_space<vmem>>, vector<16x96xf32>
    tpu.vector_store %arg24[%c0_46, %c0_47], %78 {strides = array<i32>} : memref<16x96xf32, #tpu.memory_space<vmem>>, vector<16x96xf32>,
    %c0_48 = arith.constant 0 : index
    %c0_49 = arith.constant 0 : index
    %80 = vector.load %arg12[%c0_48, %c0_49] : memref<32x96xbf16, #tpu.memory_space<vmem>>, vector<32x96xbf16>
    %c0_50 = arith.constant 0 : index
    %c0_51 = arith.constant 0 : index
    %81 = vector.load %arg16[%c0_50, %c0_51] : memref<32x96xbf16, #tpu.memory_space<vmem>>, vector<32x96xbf16>
    %c0_52 = arith.constant 0 : index
    %c0_53 = arith.constant 0 : index
    %82 = vector.load %arg14[%c0_52, %c0_53] : memref<1x96xf32, #tpu.memory_space<vmem>>, vector<1x96xf32>
    %c0_54 = arith.constant 0 : index
    %c0_55 = arith.constant 0 : index
    %83 = vector.load %arg18[%c0_54, %c0_55] : memref<1x96xf32, #tpu.memory_space<vmem>>, vector<1x96xf32>
    %cst_56 = arith.constant 0.000000e+00 : f32
    %84 = vector.broadcast %cst_56 : f32 to vector<1x32xf32>
    %85 = arith.truncf %84 : vector<1x32xf32> to vector<1x32xbf16>
    %cst_57 = arith.constant dense<0.000000e+00> : vector<1x96xf32>
    %86 = tpu.matmul %85, %80, %cst_57 {dimension_numbers = #tpu.dot_dimension_numbers<[1], [0], [0], [1], [0, 0, 1, 1], [], []>} : vector<1x32xbf16>, vector<32x96xbf16>, vector<1x96xf32> -> vector<1x96xf32>
    %87 = arith.addf %86, %82 : vector<1x96xf32>
    %88 = arith.truncf %84 : vector<1x32xf32> to vector<1x32xbf16>
    %cst_58 = arith.constant dense<0.000000e+00> : vector<1x96xf32>
    %89 = tpu.matmul %88, %81, %cst_58 {dimension_numbers = #tpu.dot_dimension_numbers<[1], [0], [0], [1], [0, 0, 1, 1], [], []>} : vector<1x32xbf16>, vector<32x96xbf16>, vector<1x96xf32> -> vector<1x96xf32>
    %90 = arith.addf %89, %83 : vector<1x96xf32>
    %c0_59 = arith.constant 0 : index
    %c0_60 = arith.constant 0 : index
    %91 = vector.load %arg23[%c0_59, %c0_60] : memref<16x96xf32, #tpu.memory_space<vmem>>, vector<1x96xf32>
    %c15 = arith.constant 15 : index
    %c0_61 = arith.constant 0 : index
    %92 = vector.load %arg24[%c15, %c0_61] : memref<16x96xf32, #tpu.memory_space<vmem>>, vector<1x96xf32>
    %93 = vector.extract_strided_slice %91 {offsets = [0, 0], sizes = [1, 32], strides = [1, 1]} : vector<1x96xf32> to vector<1x32xf32>
    %94 = vector.extract_strided_slice %87 {offsets = [0, 0], sizes = [1, 32], strides = [1, 1]} : vector<1x96xf32> to vector<1x32xf32>
    %95 = arith.addf %93, %94 : vector<1x32xf32>
    %96 = arith.negf %95 : vector<1x32xf32>
    %97 = math.exp %96 : vector<1x32xf32>
    %cst_62 = arith.constant 1.000000e+00 : f32
    %98 = vector.broadcast %cst_62 : f32 to vector<1x32xf32>
    %99 = arith.addf %98, %97 : vector<1x32xf32>
    %100 = arith.divf %98, %99 : vector<1x32xf32>
    %101 = vector.extract_strided_slice %91 {offsets = [0, 32], sizes = [1, 32], strides = [1, 1]} : vector<1x96xf32> to vector<1x32xf32>
    %102 = vector.extract_strided_slice %87 {offsets = [0, 32], sizes = [1, 32], strides = [1, 1]} : vector<1x96xf32> to vector<1x32xf32>
    %103 = arith.addf %101, %102 : vector<1x32xf32>
    %104 = arith.negf %103 : vector<1x32xf32>
    %105 = math.exp %104 : vector<1x32xf32>
    %cst_63 = arith.constant 1.000000e+00 : f32
    %106 = vector.broadcast %cst_63 : f32 to vector<1x32xf32>
    %107 = arith.addf %106, %105 : vector<1x32xf32>
    %108 = arith.divf %106, %107 : vector<1x32xf32>
    %109 = vector.extract_strided_slice %91 {offsets = [0, 64], sizes = [1, 32], strides = [1, 1]} : vector<1x96xf32> to vector<1x32xf32>
    %110 = vector.extract_strided_slice %87 {offsets = [0, 64], sizes = [1, 32], strides = [1, 1]} : vector<1x96xf32> to vector<1x32xf32>
    %111 = arith.mulf %100, %110 : vector<1x32xf32>
    %112 = arith.addf %109, %111 : vector<1x32xf32>
    %113 = math.tanh %112 : vector<1x32xf32>
    %cst_64 = arith.constant 1.000000e+00 : f32
    %114 = vector.broadcast %cst_64 : f32 to vector<1x32xf32>
    %115 = arith.subf %114, %108 : vector<1x32xf32>
    %116 = arith.mulf %115, %113 : vector<1x32xf32>
    %117 = arith.mulf %108, %84 : vector<1x32xf32>
    %118 = arith.addf %116, %117 : vector<1x32xf32>
    %119 = vector.extract_strided_slice %92 {offsets = [0, 0], sizes = [1, 32], strides = [1, 1]} : vector<1x96xf32> to vector<1x32xf32>
    %120 = vector.extract_strided_slice %90 {offsets = [0, 0], sizes = [1, 32], strides = [1, 1]} : vector<1x96xf32> to vector<1x32xf32>
    %121 = arith.addf %119, %120 : vector<1x32xf32>
    %122 = arith.negf %121 : vector<1x32xf32>
    %123 = math.exp %122 : vector<1x32xf32>
    %cst_65 = arith.constant 1.000000e+00 : f32
    %124 = vector.broadcast %cst_65 : f32 to vector<1x32xf32>
    %125 = arith.addf %124, %123 : vector<1x32xf32>
    %126 = arith.divf %124, %125 : vector<1x32xf32>
    %127 = vector.extract_strided_slice %92 {offsets = [0, 32], sizes = [1, 32], strides = [1, 1]} : vector<1x96xf32> to vector<1x32xf32>
    %128 = vector.extract_strided_slice %90 {offsets = [0, 32], sizes = [1, 32], strides = [1, 1]} : vector<1x96xf32> to vector<1x32xf32>
    %129 = arith.addf %127, %128 : vector<1x32xf32>
    %130 = arith.negf %129 : vector<1x32xf32>
    %131 = math.exp %130 : vector<1x32xf32>
    %cst_66 = arith.constant 1.000000e+00 : f32
    %132 = vector.broadcast %cst_66 : f32 to vector<1x32xf32>
    %133 = arith.addf %132, %131 : vector<1x32xf32>
    %134 = arith.divf %132, %133 : vector<1x32xf32>
    %135 = vector.extract_strided_slice %92 {offsets = [0, 64], sizes = [1, 32], strides = [1, 1]} : vector<1x96xf32> to vector<1x32xf32>
    %136 = vector.extract_strided_slice %90 {offsets = [0, 64], sizes = [1, 32], strides = [1, 1]} : vector<1x96xf32> to vector<1x32xf32>
    %137 = arith.mulf %126, %136 : vector<1x32xf32>
    %138 = arith.addf %135, %137 : vector<1x32xf32>
    %139 = math.tanh %138 : vector<1x32xf32>
    %cst_67 = arith.constant 1.000000e+00 : f32
    %140 = vector.broadcast %cst_67 : f32 to vector<1x32xf32>
    %141 = arith.subf %140, %134 : vector<1x32xf32>
    %142 = arith.mulf %141, %139 : vector<1x32xf32>
    %143 = arith.mulf %134, %84 : vector<1x32xf32>
    %144 = arith.addf %142, %143 : vector<1x32xf32>
    %c0_68 = arith.constant 0 : index
    %c0_69 = arith.constant 0 : index
    %145 = vector.load %arg25[%c0_68, %c0_69] : memref<16x32xf32, #tpu.memory_space<vmem>>, vector<1x32xf32>
    tpu.vector_store %arg25[%c0_68, %c0_69], %118 {strides = array<i32>} : memref<16x32xf32, #tpu.memory_space<vmem>>, vector<1x32xf32>,
    %c15_70 = arith.constant 15 : index
    %c0_71 = arith.constant 0 : index
    %146 = vector.load %arg26[%c15_70, %c0_71] : memref<16x32xf32, #tpu.memory_space<vmem>>, vector<1x32xf32>
    tpu.vector_store %arg26[%c15_70, %c0_71], %144 {strides = array<i32>} : memref<16x32xf32, #tpu.memory_space<vmem>>, vector<1x32xf32>,
    %147 = arith.truncf %118 : vector<1x32xf32> to vector<1x32xbf16>
    %cst_72 = arith.constant dense<0.000000e+00> : vector<1x96xf32>
    %148 = tpu.matmul %147, %80, %cst_72 {dimension_numbers = #tpu.dot_dimension_numbers<[1], [0], [0], [1], [0, 0, 1, 1], [], []>} : vector<1x32xbf16>, vector<32x96xbf16>, vector<1x96xf32> -> vector<1x96xf32>
    %149 = arith.addf %148, %82 : vector<1x96xf32>
    %150 = arith.truncf %144 : vector<1x32xf32> to vector<1x32xbf16>
    %cst_73 = arith.constant dense<0.000000e+00> : vector<1x96xf32>
    %151 = tpu.matmul %150, %81, %cst_73 {dimension_numbers = #tpu.dot_dimension_numbers<[1], [0], [0], [1], [0, 0, 1, 1], [], []>} : vector<1x32xbf16>, vector<32x96xbf16>, vector<1x96xf32> -> vector<1x96xf32>
    %152 = arith.addf %151, %83 : vector<1x96xf32>
    %c1 = arith.constant 1 : index
    %c0_74 = arith.constant 0 : index
    %153 = vector.load %arg23[%c1, %c0_74] : memref<16x96xf32, #tpu.memory_space<vmem>>, vector<1x96xf32>
    %c14 = arith.constant 14 : index
    %c0_75 = arith.constant 0 : index
    %154 = vector.load %arg24[%c14, %c0_75] : memref<16x96xf32, #tpu.memory_space<vmem>>, vector<1x96xf32>
    %155 = vector.extract_strided_slice %153 {offsets = [0, 0], sizes = [1, 32], strides = [1, 1]} : vector<1x96xf32> to vector<1x32xf32>
    %156 = vector.extract_strided_slice %149 {offsets = [0, 0], sizes = [1, 32], strides = [1, 1]} : vector<1x96xf32> to vector<1x32xf32>
    %157 = arith.addf %155, %156 : vector<1x32xf32>
    %158 = arith.negf %157 : vector<1x32xf32>
    %159 = math.exp %158 : vector<1x32xf32>
    %cst_76 = arith.constant 1.000000e+00 : f32
    %160 = vector.broadcast %cst_76 : f32 to vector<1x32xf32>
    %161 = arith.addf %160, %159 : vector<1x32xf32>
    %162 = arith.divf %160, %161 : vector<1x32xf32>
    %163 = vector.extract_strided_slice %153 {offsets = [0, 32], sizes = [1, 32], strides = [1, 1]} : vector<1x96xf32> to vector<1x32xf32>
    %164 = vector.extract_strided_slice %149 {offsets = [0, 32], sizes = [1, 32], strides = [1, 1]} : vector<1x96xf32> to vector<1x32xf32>
    %165 = arith.addf %163, %164 : vector<1x32xf32>
    %166 = arith.negf %165 : vector<1x32xf32>
    %167 = math.exp %166 : vector<1x32xf32>
    %cst_77 = arith.constant 1.000000e+00 : f32
    %168 = vector.broadcast %cst_77 : f32 to vector<1x32xf32>
    %169 = arith.addf %168, %167 : vector<1x32xf32>
    %170 = arith.divf %168, %169 : vector<1x32xf32>
    %171 = vector.extract_strided_slice %153 {offsets = [0, 64], sizes = [1, 32], strides = [1, 1]} : vector<1x96xf32> to vector<1x32xf32>
    %172 = vector.extract_strided_slice %149 {offsets = [0, 64], sizes = [1, 32], strides = [1, 1]} : vector<1x96xf32> to vector<1x32xf32>
    %173 = arith.mulf %162, %172 : vector<1x32xf32>
    %174 = arith.addf %171, %173 : vector<1x32xf32>
    %175 = math.tanh %174 : vector<1x32xf32>
    %cst_78 = arith.constant 1.000000e+00 : f32
    %176 = vector.broadcast %cst_78 : f32 to vector<1x32xf32>
    %177 = arith.subf %176, %170 : vector<1x32xf32>
    %178 = arith.mulf %177, %175 : vector<1x32xf32>
    %179 = arith.mulf %170, %118 : vector<1x32xf32>
    %180 = arith.addf %178, %179 : vector<1x32xf32>
    %181 = vector.extract_strided_slice %154 {offsets = [0, 0], sizes = [1, 32], strides = [1, 1]} : vector<1x96xf32> to vector<1x32xf32>
    %182 = vector.extract_strided_slice %152 {offsets = [0, 0], sizes = [1, 32], strides = [1, 1]} : vector<1x96xf32> to vector<1x32xf32>
    %183 = arith.addf %181, %182 : vector<1x32xf32>
    %184 = arith.negf %183 : vector<1x32xf32>
    %185 = math.exp %184 : vector<1x32xf32>
    %cst_79 = arith.constant 1.000000e+00 : f32
    %186 = vector.broadcast %cst_79 : f32 to vector<1x32xf32>
    %187 = arith.addf %186, %185 : vector<1x32xf32>
    %188 = arith.divf %186, %187 : vector<1x32xf32>
    %189 = vector.extract_strided_slice %154 {offsets = [0, 32], sizes = [1, 32], strides = [1, 1]} : vector<1x96xf32> to vector<1x32xf32>
    %190 = vector.extract_strided_slice %152 {offsets = [0, 32], sizes = [1, 32], strides = [1, 1]} : vector<1x96xf32> to vector<1x32xf32>
    %191 = arith.addf %189, %190 : vector<1x32xf32>
    %192 = arith.negf %191 : vector<1x32xf32>
    %193 = math.exp %192 : vector<1x32xf32>
    %cst_80 = arith.constant 1.000000e+00 : f32
    %194 = vector.broadcast %cst_80 : f32 to vector<1x32xf32>
    %195 = arith.addf %194, %193 : vector<1x32xf32>
    %196 = arith.divf %194, %195 : vector<1x32xf32>
    %197 = vector.extract_strided_slice %154 {offsets = [0, 64], sizes = [1, 32], strides = [1, 1]} : vector<1x96xf32> to vector<1x32xf32>
    %198 = vector.extract_strided_slice %152 {offsets = [0, 64], sizes = [1, 32], strides = [1, 1]} : vector<1x96xf32> to vector<1x32xf32>
    %199 = arith.mulf %188, %198 : vector<1x32xf32>
    %200 = arith.addf %197, %199 : vector<1x32xf32>
    %201 = math.tanh %200 : vector<1x32xf32>
    %cst_81 = arith.constant 1.000000e+00 : f32
    %202 = vector.broadcast %cst_81 : f32 to vector<1x32xf32>
    %203 = arith.subf %202, %196 : vector<1x32xf32>
    %204 = arith.mulf %203, %201 : vector<1x32xf32>
    %205 = arith.mulf %196, %144 : vector<1x32xf32>
    %206 = arith.addf %204, %205 : vector<1x32xf32>
    %c1_82 = arith.constant 1 : index
    %c0_83 = arith.constant 0 : index
    %207 = vector.load %arg25[%c1_82, %c0_83] : memref<16x32xf32, #tpu.memory_space<vmem>>, vector<1x32xf32>
    tpu.vector_store %arg25[%c1_82, %c0_83], %180 {strides = array<i32>} : memref<16x32xf32, #tpu.memory_space<vmem>>, vector<1x32xf32>,
    %c14_84 = arith.constant 14 : index
    %c0_85 = arith.constant 0 : index
    %208 = vector.load %arg26[%c14_84, %c0_85] : memref<16x32xf32, #tpu.memory_space<vmem>>, vector<1x32xf32>
    tpu.vector_store %arg26[%c14_84, %c0_85], %206 {strides = array<i32>} : memref<16x32xf32, #tpu.memory_space<vmem>>, vector<1x32xf32>,
    %209 = arith.truncf %180 : vector<1x32xf32> to vector<1x32xbf16>
    %cst_86 = arith.constant dense<0.000000e+00> : vector<1x96xf32>
    %210 = tpu.matmul %209, %80, %cst_86 {dimension_numbers = #tpu.dot_dimension_numbers<[1], [0], [0], [1], [0, 0, 1, 1], [], []>} : vector<1x32xbf16>, vector<32x96xbf16>, vector<1x96xf32> -> vector<1x96xf32>
    %211 = arith.addf %210, %82 : vector<1x96xf32>
    %212 = arith.truncf %206 : vector<1x32xf32> to vector<1x32xbf16>
    %cst_87 = arith.constant dense<0.000000e+00> : vector<1x96xf32>
    %213 = tpu.matmul %212, %81, %cst_87 {dimension_numbers = #tpu.dot_dimension_numbers<[1], [0], [0], [1], [0, 0, 1, 1], [], []>} : vector<1x32xbf16>, vector<32x96xbf16>, vector<1x96xf32> -> vector<1x96xf32>
    %214 = arith.addf %213, %83 : vector<1x96xf32>
    %c2 = arith.constant 2 : index
    %c0_88 = arith.constant 0 : index
    %215 = vector.load %arg23[%c2, %c0_88] : memref<16x96xf32, #tpu.memory_space<vmem>>, vector<1x96xf32>
    %c13 = arith.constant 13 : index
    %c0_89 = arith.constant 0 : index
    %216 = vector.load %arg24[%c13, %c0_89] : memref<16x96xf32, #tpu.memory_space<vmem>>, vector<1x96xf32>
    %217 = vector.extract_strided_slice %215 {offsets = [0, 0], sizes = [1, 32], strides = [1, 1]} : vector<1x96xf32> to vector<1x32xf32>
    %218 = vector.extract_strided_slice %211 {offsets = [0, 0], sizes = [1, 32], strides = [1, 1]} : vector<1x96xf32> to vector<1x32xf32>
    %219 = arith.addf %217, %218 : vector<1x32xf32>
    %220 = arith.negf %219 : vector<1x32xf32>
    %221 = math.exp %220 : vector<1x32xf32>
    %cst_90 = arith.constant 1.000000e+00 : f32
    %222 = vector.broadcast %cst_90 : f32 to vector<1x32xf32>
    %223 = arith.addf %222, %221 : vector<1x32xf32>
    %224 = arith.divf %222, %223 : vector<1x32xf32>
    %225 = vector.extract_strided_slice %215 {offsets = [0, 32], sizes = [1, 32], strides = [1, 1]} : vector<1x96xf32> to vector<1x32xf32>
    %226 = vector.extract_strided_slice %211 {offsets = [0, 32], sizes = [1, 32], strides = [1, 1]} : vector<1x96xf32> to vector<1x32xf32>
    %227 = arith.addf %225, %226 : vector<1x32xf32>
    %228 = arith.negf %227 : vector<1x32xf32>
    %229 = math.exp %228 : vector<1x32xf32>
    %cst_91 = arith.constant 1.000000e+00 : f32
    %230 = vector.broadcast %cst_91 : f32 to vector<1x32xf32>
    %231 = arith.addf %230, %229 : vector<1x32xf32>
    %232 = arith.divf %230, %231 : vector<1x32xf32>
    %233 = vector.extract_strided_slice %215 {offsets = [0, 64], sizes = [1, 32], strides = [1, 1]} : vector<1x96xf32> to vector<1x32xf32>
    %234 = vector.extract_strided_slice %211 {offsets = [0, 64], sizes = [1, 32], strides = [1, 1]} : vector<1x96xf32> to vector<1x32xf32>
    %235 = arith.mulf %224, %234 : vector<1x32xf32>
    %236 = arith.addf %233, %235 : vector<1x32xf32>
    %237 = math.tanh %236 : vector<1x32xf32>
    %cst_92 = arith.constant 1.000000e+00 : f32
    %238 = vector.broadcast %cst_92 : f32 to vector<1x32xf32>
    %239 = arith.subf %238, %232 : vector<1x32xf32>
    %240 = arith.mulf %239, %237 : vector<1x32xf32>
    %241 = arith.mulf %232, %180 : vector<1x32xf32>
    %242 = arith.addf %240, %241 : vector<1x32xf32>
    %243 = vector.extract_strided_slice %216 {offsets = [0, 0], sizes = [1, 32], strides = [1, 1]} : vector<1x96xf32> to vector<1x32xf32>
    %244 = vector.extract_strided_slice %214 {offsets = [0, 0], sizes = [1, 32], strides = [1, 1]} : vector<1x96xf32> to vector<1x32xf32>
    %245 = arith.addf %243, %244 : vector<1x32xf32>
    %246 = arith.negf %245 : vector<1x32xf32>
    %247 = math.exp %246 : vector<1x32xf32>
    %cst_93 = arith.constant 1.000000e+00 : f32
    %248 = vector.broadcast %cst_93 : f32 to vector<1x32xf32>
    %249 = arith.addf %248, %247 : vector<1x32xf32>
    %250 = arith.divf %248, %249 : vector<1x32xf32>
    %251 = vector.extract_strided_slice %216 {offsets = [0, 32], sizes = [1, 32], strides = [1, 1]} : vector<1x96xf32> to vector<1x32xf32>
    %252 = vector.extract_strided_slice %214 {offsets = [0, 32], sizes = [1, 32], strides = [1, 1]} : vector<1x96xf32> to vector<1x32xf32>
    %253 = arith.addf %251, %252 : vector<1x32xf32>
    %254 = arith.negf %253 : vector<1x32xf32>
    %255 = math.exp %254 : vector<1x32xf32>
    %cst_94 = arith.constant 1.000000e+00 : f32
    %256 = vector.broadcast %cst_94 : f32 to vector<1x32xf32>
    %257 = arith.addf %256, %255 : vector<1x32xf32>
    %258 = arith.divf %256, %257 : vector<1x32xf32>
    %259 = vector.extract_strided_slice %216 {offsets = [0, 64], sizes = [1, 32], strides = [1, 1]} : vector<1x96xf32> to vector<1x32xf32>
    %260 = vector.extract_strided_slice %214 {offsets = [0, 64], sizes = [1, 32], strides = [1, 1]} : vector<1x96xf32> to vector<1x32xf32>
    %261 = arith.mulf %250, %260 : vector<1x32xf32>
    %262 = arith.addf %259, %261 : vector<1x32xf32>
    %263 = math.tanh %262 : vector<1x32xf32>
    %cst_95 = arith.constant 1.000000e+00 : f32
    %264 = vector.broadcast %cst_95 : f32 to vector<1x32xf32>
    %265 = arith.subf %264, %258 : vector<1x32xf32>
    %266 = arith.mulf %265, %263 : vector<1x32xf32>
    %267 = arith.mulf %258, %206 : vector<1x32xf32>
    %268 = arith.addf %266, %267 : vector<1x32xf32>
    %c2_96 = arith.constant 2 : index
    %c0_97 = arith.constant 0 : index
    %269 = vector.load %arg25[%c2_96, %c0_97] : memref<16x32xf32, #tpu.memory_space<vmem>>, vector<1x32xf32>
    tpu.vector_store %arg25[%c2_96, %c0_97], %242 {strides = array<i32>} : memref<16x32xf32, #tpu.memory_space<vmem>>, vector<1x32xf32>,
    %c13_98 = arith.constant 13 : index
    %c0_99 = arith.constant 0 : index
    %270 = vector.load %arg26[%c13_98, %c0_99] : memref<16x32xf32, #tpu.memory_space<vmem>>, vector<1x32xf32>
    tpu.vector_store %arg26[%c13_98, %c0_99], %268 {strides = array<i32>} : memref<16x32xf32, #tpu.memory_space<vmem>>, vector<1x32xf32>,
    %271 = arith.truncf %242 : vector<1x32xf32> to vector<1x32xbf16>
    %cst_100 = arith.constant dense<0.000000e+00> : vector<1x96xf32>
    %272 = tpu.matmul %271, %80, %cst_100 {dimension_numbers = #tpu.dot_dimension_numbers<[1], [0], [0], [1], [0, 0, 1, 1], [], []>} : vector<1x32xbf16>, vector<32x96xbf16>, vector<1x96xf32> -> vector<1x96xf32>
    %273 = arith.addf %272, %82 : vector<1x96xf32>
    %274 = arith.truncf %268 : vector<1x32xf32> to vector<1x32xbf16>
    %cst_101 = arith.constant dense<0.000000e+00> : vector<1x96xf32>
    %275 = tpu.matmul %274, %81, %cst_101 {dimension_numbers = #tpu.dot_dimension_numbers<[1], [0], [0], [1], [0, 0, 1, 1], [], []>} : vector<1x32xbf16>, vector<32x96xbf16>, vector<1x96xf32> -> vector<1x96xf32>
    %276 = arith.addf %275, %83 : vector<1x96xf32>
    %c3 = arith.constant 3 : index
    %c0_102 = arith.constant 0 : index
    %277 = vector.load %arg23[%c3, %c0_102] : memref<16x96xf32, #tpu.memory_space<vmem>>, vector<1x96xf32>
    %c12 = arith.constant 12 : index
    %c0_103 = arith.constant 0 : index
    %278 = vector.load %arg24[%c12, %c0_103] : memref<16x96xf32, #tpu.memory_space<vmem>>, vector<1x96xf32>
    %279 = vector.extract_strided_slice %277 {offsets = [0, 0], sizes = [1, 32], strides = [1, 1]} : vector<1x96xf32> to vector<1x32xf32>
    %280 = vector.extract_strided_slice %273 {offsets = [0, 0], sizes = [1, 32], strides = [1, 1]} : vector<1x96xf32> to vector<1x32xf32>
    %281 = arith.addf %279, %280 : vector<1x32xf32>
    %282 = arith.negf %281 : vector<1x32xf32>
    %283 = math.exp %282 : vector<1x32xf32>
    %cst_104 = arith.constant 1.000000e+00 : f32
    %284 = vector.broadcast %cst_104 : f32 to vector<1x32xf32>
    %285 = arith.addf %284, %283 : vector<1x32xf32>
    %286 = arith.divf %284, %285 : vector<1x32xf32>
    %287 = vector.extract_strided_slice %277 {offsets = [0, 32], sizes = [1, 32], strides = [1, 1]} : vector<1x96xf32> to vector<1x32xf32>
    %288 = vector.extract_strided_slice %273 {offsets = [0, 32], sizes = [1, 32], strides = [1, 1]} : vector<1x96xf32> to vector<1x32xf32>
    %289 = arith.addf %287, %288 : vector<1x32xf32>
    %290 = arith.negf %289 : vector<1x32xf32>
    %291 = math.exp %290 : vector<1x32xf32>
    %cst_105 = arith.constant 1.000000e+00 : f32
    %292 = vector.broadcast %cst_105 : f32 to vector<1x32xf32>
    %293 = arith.addf %292, %291 : vector<1x32xf32>
    %294 = arith.divf %292, %293 : vector<1x32xf32>
    %295 = vector.extract_strided_slice %277 {offsets = [0, 64], sizes = [1, 32], strides = [1, 1]} : vector<1x96xf32> to vector<1x32xf32>
    %296 = vector.extract_strided_slice %273 {offsets = [0, 64], sizes = [1, 32], strides = [1, 1]} : vector<1x96xf32> to vector<1x32xf32>
    %297 = arith.mulf %286, %296 : vector<1x32xf32>
    %298 = arith.addf %295, %297 : vector<1x32xf32>
    %299 = math.tanh %298 : vector<1x32xf32>
    %cst_106 = arith.constant 1.000000e+00 : f32
    %300 = vector.broadcast %cst_106 : f32 to vector<1x32xf32>
    %301 = arith.subf %300, %294 : vector<1x32xf32>
    %302 = arith.mulf %301, %299 : vector<1x32xf32>
    %303 = arith.mulf %294, %242 : vector<1x32xf32>
    %304 = arith.addf %302, %303 : vector<1x32xf32>
    %305 = vector.extract_strided_slice %278 {offsets = [0, 0], sizes = [1, 32], strides = [1, 1]} : vector<1x96xf32> to vector<1x32xf32>
    %306 = vector.extract_strided_slice %276 {offsets = [0, 0], sizes = [1, 32], strides = [1, 1]} : vector<1x96xf32> to vector<1x32xf32>
    %307 = arith.addf %305, %306 : vector<1x32xf32>
    %308 = arith.negf %307 : vector<1x32xf32>
    %309 = math.exp %308 : vector<1x32xf32>
    %cst_107 = arith.constant 1.000000e+00 : f32
    %310 = vector.broadcast %cst_107 : f32 to vector<1x32xf32>
    %311 = arith.addf %310, %309 : vector<1x32xf32>
    %312 = arith.divf %310, %311 : vector<1x32xf32>
    %313 = vector.extract_strided_slice %278 {offsets = [0, 32], sizes = [1, 32], strides = [1, 1]} : vector<1x96xf32> to vector<1x32xf32>
    %314 = vector.extract_strided_slice %276 {offsets = [0, 32], sizes = [1, 32], strides = [1, 1]} : vector<1x96xf32> to vector<1x32xf32>
    %315 = arith.addf %313, %314 : vector<1x32xf32>
    %316 = arith.negf %315 : vector<1x32xf32>
    %317 = math.exp %316 : vector<1x32xf32>
    %cst_108 = arith.constant 1.000000e+00 : f32
    %318 = vector.broadcast %cst_108 : f32 to vector<1x32xf32>
    %319 = arith.addf %318, %317 : vector<1x32xf32>
    %320 = arith.divf %318, %319 : vector<1x32xf32>
    %321 = vector.extract_strided_slice %278 {offsets = [0, 64], sizes = [1, 32], strides = [1, 1]} : vector<1x96xf32> to vector<1x32xf32>
    %322 = vector.extract_strided_slice %276 {offsets = [0, 64], sizes = [1, 32], strides = [1, 1]} : vector<1x96xf32> to vector<1x32xf32>
    %323 = arith.mulf %312, %322 : vector<1x32xf32>
    %324 = arith.addf %321, %323 : vector<1x32xf32>
    %325 = math.tanh %324 : vector<1x32xf32>
    %cst_109 = arith.constant 1.000000e+00 : f32
    %326 = vector.broadcast %cst_109 : f32 to vector<1x32xf32>
    %327 = arith.subf %326, %320 : vector<1x32xf32>
    %328 = arith.mulf %327, %325 : vector<1x32xf32>
    %329 = arith.mulf %320, %268 : vector<1x32xf32>
    %330 = arith.addf %328, %329 : vector<1x32xf32>
    %c3_110 = arith.constant 3 : index
    %c0_111 = arith.constant 0 : index
    %331 = vector.load %arg25[%c3_110, %c0_111] : memref<16x32xf32, #tpu.memory_space<vmem>>, vector<1x32xf32>
    tpu.vector_store %arg25[%c3_110, %c0_111], %304 {strides = array<i32>} : memref<16x32xf32, #tpu.memory_space<vmem>>, vector<1x32xf32>,
    %c12_112 = arith.constant 12 : index
    %c0_113 = arith.constant 0 : index
    %332 = vector.load %arg26[%c12_112, %c0_113] : memref<16x32xf32, #tpu.memory_space<vmem>>, vector<1x32xf32>
    tpu.vector_store %arg26[%c12_112, %c0_113], %330 {strides = array<i32>} : memref<16x32xf32, #tpu.memory_space<vmem>>, vector<1x32xf32>,
    %333 = arith.truncf %304 : vector<1x32xf32> to vector<1x32xbf16>
    %cst_114 = arith.constant dense<0.000000e+00> : vector<1x96xf32>
    %334 = tpu.matmul %333, %80, %cst_114 {dimension_numbers = #tpu.dot_dimension_numbers<[1], [0], [0], [1], [0, 0, 1, 1], [], []>} : vector<1x32xbf16>, vector<32x96xbf16>, vector<1x96xf32> -> vector<1x96xf32>
    %335 = arith.addf %334, %82 : vector<1x96xf32>
    %336 = arith.truncf %330 : vector<1x32xf32> to vector<1x32xbf16>
    %cst_115 = arith.constant dense<0.000000e+00> : vector<1x96xf32>
    %337 = tpu.matmul %336, %81, %cst_115 {dimension_numbers = #tpu.dot_dimension_numbers<[1], [0], [0], [1], [0, 0, 1, 1], [], []>} : vector<1x32xbf16>, vector<32x96xbf16>, vector<1x96xf32> -> vector<1x96xf32>
    %338 = arith.addf %337, %83 : vector<1x96xf32>
    %c4 = arith.constant 4 : index
    %c0_116 = arith.constant 0 : index
    %339 = vector.load %arg23[%c4, %c0_116] : memref<16x96xf32, #tpu.memory_space<vmem>>, vector<1x96xf32>
    %c11 = arith.constant 11 : index
    %c0_117 = arith.constant 0 : index
    %340 = vector.load %arg24[%c11, %c0_117] : memref<16x96xf32, #tpu.memory_space<vmem>>, vector<1x96xf32>
    %341 = vector.extract_strided_slice %339 {offsets = [0, 0], sizes = [1, 32], strides = [1, 1]} : vector<1x96xf32> to vector<1x32xf32>
    %342 = vector.extract_strided_slice %335 {offsets = [0, 0], sizes = [1, 32], strides = [1, 1]} : vector<1x96xf32> to vector<1x32xf32>
    %343 = arith.addf %341, %342 : vector<1x32xf32>
    %344 = arith.negf %343 : vector<1x32xf32>
    %345 = math.exp %344 : vector<1x32xf32>
    %cst_118 = arith.constant 1.000000e+00 : f32
    %346 = vector.broadcast %cst_118 : f32 to vector<1x32xf32>
    %347 = arith.addf %346, %345 : vector<1x32xf32>
    %348 = arith.divf %346, %347 : vector<1x32xf32>
    %349 = vector.extract_strided_slice %339 {offsets = [0, 32], sizes = [1, 32], strides = [1, 1]} : vector<1x96xf32> to vector<1x32xf32>
    %350 = vector.extract_strided_slice %335 {offsets = [0, 32], sizes = [1, 32], strides = [1, 1]} : vector<1x96xf32> to vector<1x32xf32>
    %351 = arith.addf %349, %350 : vector<1x32xf32>
    %352 = arith.negf %351 : vector<1x32xf32>
    %353 = math.exp %352 : vector<1x32xf32>
    %cst_119 = arith.constant 1.000000e+00 : f32
    %354 = vector.broadcast %cst_119 : f32 to vector<1x32xf32>
    %355 = arith.addf %354, %353 : vector<1x32xf32>
    %356 = arith.divf %354, %355 : vector<1x32xf32>
    %357 = vector.extract_strided_slice %339 {offsets = [0, 64], sizes = [1, 32], strides = [1, 1]} : vector<1x96xf32> to vector<1x32xf32>
    %358 = vector.extract_strided_slice %335 {offsets = [0, 64], sizes = [1, 32], strides = [1, 1]} : vector<1x96xf32> to vector<1x32xf32>
    %359 = arith.mulf %348, %358 : vector<1x32xf32>
    %360 = arith.addf %357, %359 : vector<1x32xf32>
    %361 = math.tanh %360 : vector<1x32xf32>
    %cst_120 = arith.constant 1.000000e+00 : f32
    %362 = vector.broadcast %cst_120 : f32 to vector<1x32xf32>
    %363 = arith.subf %362, %356 : vector<1x32xf32>
    %364 = arith.mulf %363, %361 : vector<1x32xf32>
    %365 = arith.mulf %356, %304 : vector<1x32xf32>
    %366 = arith.addf %364, %365 : vector<1x32xf32>
    %367 = vector.extract_strided_slice %340 {offsets = [0, 0], sizes = [1, 32], strides = [1, 1]} : vector<1x96xf32> to vector<1x32xf32>
    %368 = vector.extract_strided_slice %338 {offsets = [0, 0], sizes = [1, 32], strides = [1, 1]} : vector<1x96xf32> to vector<1x32xf32>
    %369 = arith.addf %367, %368 : vector<1x32xf32>
    %370 = arith.negf %369 : vector<1x32xf32>
    %371 = math.exp %370 : vector<1x32xf32>
    %cst_121 = arith.constant 1.000000e+00 : f32
    %372 = vector.broadcast %cst_121 : f32 to vector<1x32xf32>
    %373 = arith.addf %372, %371 : vector<1x32xf32>
    %374 = arith.divf %372, %373 : vector<1x32xf32>
    %375 = vector.extract_strided_slice %340 {offsets = [0, 32], sizes = [1, 32], strides = [1, 1]} : vector<1x96xf32> to vector<1x32xf32>
    %376 = vector.extract_strided_slice %338 {offsets = [0, 32], sizes = [1, 32], strides = [1, 1]} : vector<1x96xf32> to vector<1x32xf32>
    %377 = arith.addf %375, %376 : vector<1x32xf32>
    %378 = arith.negf %377 : vector<1x32xf32>
    %379 = math.exp %378 : vector<1x32xf32>
    %cst_122 = arith.constant 1.000000e+00 : f32
    %380 = vector.broadcast %cst_122 : f32 to vector<1x32xf32>
    %381 = arith.addf %380, %379 : vector<1x32xf32>
    %382 = arith.divf %380, %381 : vector<1x32xf32>
    %383 = vector.extract_strided_slice %340 {offsets = [0, 64], sizes = [1, 32], strides = [1, 1]} : vector<1x96xf32> to vector<1x32xf32>
    %384 = vector.extract_strided_slice %338 {offsets = [0, 64], sizes = [1, 32], strides = [1, 1]} : vector<1x96xf32> to vector<1x32xf32>
    %385 = arith.mulf %374, %384 : vector<1x32xf32>
    %386 = arith.addf %383, %385 : vector<1x32xf32>
    %387 = math.tanh %386 : vector<1x32xf32>
    %cst_123 = arith.constant 1.000000e+00 : f32
    %388 = vector.broadcast %cst_123 : f32 to vector<1x32xf32>
    %389 = arith.subf %388, %382 : vector<1x32xf32>
    %390 = arith.mulf %389, %387 : vector<1x32xf32>
    %391 = arith.mulf %382, %330 : vector<1x32xf32>
    %392 = arith.addf %390, %391 : vector<1x32xf32>
    %c4_124 = arith.constant 4 : index
    %c0_125 = arith.constant 0 : index
    %393 = vector.load %arg25[%c4_124, %c0_125] : memref<16x32xf32, #tpu.memory_space<vmem>>, vector<1x32xf32>
    tpu.vector_store %arg25[%c4_124, %c0_125], %366 {strides = array<i32>} : memref<16x32xf32, #tpu.memory_space<vmem>>, vector<1x32xf32>,
    %c11_126 = arith.constant 11 : index
    %c0_127 = arith.constant 0 : index
    %394 = vector.load %arg26[%c11_126, %c0_127] : memref<16x32xf32, #tpu.memory_space<vmem>>, vector<1x32xf32>
    tpu.vector_store %arg26[%c11_126, %c0_127], %392 {strides = array<i32>} : memref<16x32xf32, #tpu.memory_space<vmem>>, vector<1x32xf32>,
    %395 = arith.truncf %366 : vector<1x32xf32> to vector<1x32xbf16>
    %cst_128 = arith.constant dense<0.000000e+00> : vector<1x96xf32>
    %396 = tpu.matmul %395, %80, %cst_128 {dimension_numbers = #tpu.dot_dimension_numbers<[1], [0], [0], [1], [0, 0, 1, 1], [], []>} : vector<1x32xbf16>, vector<32x96xbf16>, vector<1x96xf32> -> vector<1x96xf32>
    %397 = arith.addf %396, %82 : vector<1x96xf32>
    %398 = arith.truncf %392 : vector<1x32xf32> to vector<1x32xbf16>
    %cst_129 = arith.constant dense<0.000000e+00> : vector<1x96xf32>
    %399 = tpu.matmul %398, %81, %cst_129 {dimension_numbers = #tpu.dot_dimension_numbers<[1], [0], [0], [1], [0, 0, 1, 1], [], []>} : vector<1x32xbf16>, vector<32x96xbf16>, vector<1x96xf32> -> vector<1x96xf32>
    %400 = arith.addf %399, %83 : vector<1x96xf32>
    %c5 = arith.constant 5 : index
    %c0_130 = arith.constant 0 : index
    %401 = vector.load %arg23[%c5, %c0_130] : memref<16x96xf32, #tpu.memory_space<vmem>>, vector<1x96xf32>
    %c10 = arith.constant 10 : index
    %c0_131 = arith.constant 0 : index
    %402 = vector.load %arg24[%c10, %c0_131] : memref<16x96xf32, #tpu.memory_space<vmem>>, vector<1x96xf32>
    %403 = vector.extract_strided_slice %401 {offsets = [0, 0], sizes = [1, 32], strides = [1, 1]} : vector<1x96xf32> to vector<1x32xf32>
    %404 = vector.extract_strided_slice %397 {offsets = [0, 0], sizes = [1, 32], strides = [1, 1]} : vector<1x96xf32> to vector<1x32xf32>
    %405 = arith.addf %403, %404 : vector<1x32xf32>
    %406 = arith.negf %405 : vector<1x32xf32>
    %407 = math.exp %406 : vector<1x32xf32>
    %cst_132 = arith.constant 1.000000e+00 : f32
    %408 = vector.broadcast %cst_132 : f32 to vector<1x32xf32>
    %409 = arith.addf %408, %407 : vector<1x32xf32>
    %410 = arith.divf %408, %409 : vector<1x32xf32>
    %411 = vector.extract_strided_slice %401 {offsets = [0, 32], sizes = [1, 32], strides = [1, 1]} : vector<1x96xf32> to vector<1x32xf32>
    %412 = vector.extract_strided_slice %397 {offsets = [0, 32], sizes = [1, 32], strides = [1, 1]} : vector<1x96xf32> to vector<1x32xf32>
    %413 = arith.addf %411, %412 : vector<1x32xf32>
    %414 = arith.negf %413 : vector<1x32xf32>
    %415 = math.exp %414 : vector<1x32xf32>
    %cst_133 = arith.constant 1.000000e+00 : f32
    %416 = vector.broadcast %cst_133 : f32 to vector<1x32xf32>
    %417 = arith.addf %416, %415 : vector<1x32xf32>
    %418 = arith.divf %416, %417 : vector<1x32xf32>
    %419 = vector.extract_strided_slice %401 {offsets = [0, 64], sizes = [1, 32], strides = [1, 1]} : vector<1x96xf32> to vector<1x32xf32>
    %420 = vector.extract_strided_slice %397 {offsets = [0, 64], sizes = [1, 32], strides = [1, 1]} : vector<1x96xf32> to vector<1x32xf32>
    %421 = arith.mulf %410, %420 : vector<1x32xf32>
    %422 = arith.addf %419, %421 : vector<1x32xf32>
    %423 = math.tanh %422 : vector<1x32xf32>
    %cst_134 = arith.constant 1.000000e+00 : f32
    %424 = vector.broadcast %cst_134 : f32 to vector<1x32xf32>
    %425 = arith.subf %424, %418 : vector<1x32xf32>
    %426 = arith.mulf %425, %423 : vector<1x32xf32>
    %427 = arith.mulf %418, %366 : vector<1x32xf32>
    %428 = arith.addf %426, %427 : vector<1x32xf32>
    %429 = vector.extract_strided_slice %402 {offsets = [0, 0], sizes = [1, 32], strides = [1, 1]} : vector<1x96xf32> to vector<1x32xf32>
    %430 = vector.extract_strided_slice %400 {offsets = [0, 0], sizes = [1, 32], strides = [1, 1]} : vector<1x96xf32> to vector<1x32xf32>
    %431 = arith.addf %429, %430 : vector<1x32xf32>
    %432 = arith.negf %431 : vector<1x32xf32>
    %433 = math.exp %432 : vector<1x32xf32>
    %cst_135 = arith.constant 1.000000e+00 : f32
    %434 = vector.broadcast %cst_135 : f32 to vector<1x32xf32>
    %435 = arith.addf %434, %433 : vector<1x32xf32>
    %436 = arith.divf %434, %435 : vector<1x32xf32>
    %437 = vector.extract_strided_slice %402 {offsets = [0, 32], sizes = [1, 32], strides = [1, 1]} : vector<1x96xf32> to vector<1x32xf32>
    %438 = vector.extract_strided_slice %400 {offsets = [0, 32], sizes = [1, 32], strides = [1, 1]} : vector<1x96xf32> to vector<1x32xf32>
    %439 = arith.addf %437, %438 : vector<1x32xf32>
    %440 = arith.negf %439 : vector<1x32xf32>
    %441 = math.exp %440 : vector<1x32xf32>
    %cst_136 = arith.constant 1.000000e+00 : f32
    %442 = vector.broadcast %cst_136 : f32 to vector<1x32xf32>
    %443 = arith.addf %442, %441 : vector<1x32xf32>
    %444 = arith.divf %442, %443 : vector<1x32xf32>
    %445 = vector.extract_strided_slice %402 {offsets = [0, 64], sizes = [1, 32], strides = [1, 1]} : vector<1x96xf32> to vector<1x32xf32>
    %446 = vector.extract_strided_slice %400 {offsets = [0, 64], sizes = [1, 32], strides = [1, 1]} : vector<1x96xf32> to vector<1x32xf32>
    %447 = arith.mulf %436, %446 : vector<1x32xf32>
    %448 = arith.addf %445, %447 : vector<1x32xf32>
    %449 = math.tanh %448 : vector<1x32xf32>
    %cst_137 = arith.constant 1.000000e+00 : f32
    %450 = vector.broadcast %cst_137 : f32 to vector<1x32xf32>
    %451 = arith.subf %450, %444 : vector<1x32xf32>
    %452 = arith.mulf %451, %449 : vector<1x32xf32>
    %453 = arith.mulf %444, %392 : vector<1x32xf32>
    %454 = arith.addf %452, %453 : vector<1x32xf32>
    %c5_138 = arith.constant 5 : index
    %c0_139 = arith.constant 0 : index
    %455 = vector.load %arg25[%c5_138, %c0_139] : memref<16x32xf32, #tpu.memory_space<vmem>>, vector<1x32xf32>
    tpu.vector_store %arg25[%c5_138, %c0_139], %428 {strides = array<i32>} : memref<16x32xf32, #tpu.memory_space<vmem>>, vector<1x32xf32>,
    %c10_140 = arith.constant 10 : index
    %c0_141 = arith.constant 0 : index
    %456 = vector.load %arg26[%c10_140, %c0_141] : memref<16x32xf32, #tpu.memory_space<vmem>>, vector<1x32xf32>
    tpu.vector_store %arg26[%c10_140, %c0_141], %454 {strides = array<i32>} : memref<16x32xf32, #tpu.memory_space<vmem>>, vector<1x32xf32>,
    %457 = arith.truncf %428 : vector<1x32xf32> to vector<1x32xbf16>
    %cst_142 = arith.constant dense<0.000000e+00> : vector<1x96xf32>
    %458 = tpu.matmul %457, %80, %cst_142 {dimension_numbers = #tpu.dot_dimension_numbers<[1], [0], [0], [1], [0, 0, 1, 1], [], []>} : vector<1x32xbf16>, vector<32x96xbf16>, vector<1x96xf32> -> vector<1x96xf32>
    %459 = arith.addf %458, %82 : vector<1x96xf32>
    %460 = arith.truncf %454 : vector<1x32xf32> to vector<1x32xbf16>
    %cst_143 = arith.constant dense<0.000000e+00> : vector<1x96xf32>
    %461 = tpu.matmul %460, %81, %cst_143 {dimension_numbers = #tpu.dot_dimension_numbers<[1], [0], [0], [1], [0, 0, 1, 1], [], []>} : vector<1x32xbf16>, vector<32x96xbf16>, vector<1x96xf32> -> vector<1x96xf32>
    %462 = arith.addf %461, %83 : vector<1x96xf32>
    %c6 = arith.constant 6 : index
    %c0_144 = arith.constant 0 : index
    %463 = vector.load %arg23[%c6, %c0_144] : memref<16x96xf32, #tpu.memory_space<vmem>>, vector<1x96xf32>
    %c9 = arith.constant 9 : index
    %c0_145 = arith.constant 0 : index
    %464 = vector.load %arg24[%c9, %c0_145] : memref<16x96xf32, #tpu.memory_space<vmem>>, vector<1x96xf32>
    %465 = vector.extract_strided_slice %463 {offsets = [0, 0], sizes = [1, 32], strides = [1, 1]} : vector<1x96xf32> to vector<1x32xf32>
    %466 = vector.extract_strided_slice %459 {offsets = [0, 0], sizes = [1, 32], strides = [1, 1]} : vector<1x96xf32> to vector<1x32xf32>
    %467 = arith.addf %465, %466 : vector<1x32xf32>
    %468 = arith.negf %467 : vector<1x32xf32>
    %469 = math.exp %468 : vector<1x32xf32>
    %cst_146 = arith.constant 1.000000e+00 : f32
    %470 = vector.broadcast %cst_146 : f32 to vector<1x32xf32>
    %471 = arith.addf %470, %469 : vector<1x32xf32>
    %472 = arith.divf %470, %471 : vector<1x32xf32>
    %473 = vector.extract_strided_slice %463 {offsets = [0, 32], sizes = [1, 32], strides = [1, 1]} : vector<1x96xf32> to vector<1x32xf32>
    %474 = vector.extract_strided_slice %459 {offsets = [0, 32], sizes = [1, 32], strides = [1, 1]} : vector<1x96xf32> to vector<1x32xf32>
    %475 = arith.addf %473, %474 : vector<1x32xf32>
    %476 = arith.negf %475 : vector<1x32xf32>
    %477 = math.exp %476 : vector<1x32xf32>
    %cst_147 = arith.constant 1.000000e+00 : f32
    %478 = vector.broadcast %cst_147 : f32 to vector<1x32xf32>
    %479 = arith.addf %478, %477 : vector<1x32xf32>
    %480 = arith.divf %478, %479 : vector<1x32xf32>
    %481 = vector.extract_strided_slice %463 {offsets = [0, 64], sizes = [1, 32], strides = [1, 1]} : vector<1x96xf32> to vector<1x32xf32>
    %482 = vector.extract_strided_slice %459 {offsets = [0, 64], sizes = [1, 32], strides = [1, 1]} : vector<1x96xf32> to vector<1x32xf32>
    %483 = arith.mulf %472, %482 : vector<1x32xf32>
    %484 = arith.addf %481, %483 : vector<1x32xf32>
    %485 = math.tanh %484 : vector<1x32xf32>
    %cst_148 = arith.constant 1.000000e+00 : f32
    %486 = vector.broadcast %cst_148 : f32 to vector<1x32xf32>
    %487 = arith.subf %486, %480 : vector<1x32xf32>
    %488 = arith.mulf %487, %485 : vector<1x32xf32>
    %489 = arith.mulf %480, %428 : vector<1x32xf32>
    %490 = arith.addf %488, %489 : vector<1x32xf32>
    %491 = vector.extract_strided_slice %464 {offsets = [0, 0], sizes = [1, 32], strides = [1, 1]} : vector<1x96xf32> to vector<1x32xf32>
    %492 = vector.extract_strided_slice %462 {offsets = [0, 0], sizes = [1, 32], strides = [1, 1]} : vector<1x96xf32> to vector<1x32xf32>
    %493 = arith.addf %491, %492 : vector<1x32xf32>
    %494 = arith.negf %493 : vector<1x32xf32>
    %495 = math.exp %494 : vector<1x32xf32>
    %cst_149 = arith.constant 1.000000e+00 : f32
    %496 = vector.broadcast %cst_149 : f32 to vector<1x32xf32>
    %497 = arith.addf %496, %495 : vector<1x32xf32>
    %498 = arith.divf %496, %497 : vector<1x32xf32>
    %499 = vector.extract_strided_slice %464 {offsets = [0, 32], sizes = [1, 32], strides = [1, 1]} : vector<1x96xf32> to vector<1x32xf32>
    %500 = vector.extract_strided_slice %462 {offsets = [0, 32], sizes = [1, 32], strides = [1, 1]} : vector<1x96xf32> to vector<1x32xf32>
    %501 = arith.addf %499, %500 : vector<1x32xf32>
    %502 = arith.negf %501 : vector<1x32xf32>
    %503 = math.exp %502 : vector<1x32xf32>
    %cst_150 = arith.constant 1.000000e+00 : f32
    %504 = vector.broadcast %cst_150 : f32 to vector<1x32xf32>
    %505 = arith.addf %504, %503 : vector<1x32xf32>
    %506 = arith.divf %504, %505 : vector<1x32xf32>
    %507 = vector.extract_strided_slice %464 {offsets = [0, 64], sizes = [1, 32], strides = [1, 1]} : vector<1x96xf32> to vector<1x32xf32>
    %508 = vector.extract_strided_slice %462 {offsets = [0, 64], sizes = [1, 32], strides = [1, 1]} : vector<1x96xf32> to vector<1x32xf32>
    %509 = arith.mulf %498, %508 : vector<1x32xf32>
    %510 = arith.addf %507, %509 : vector<1x32xf32>
    %511 = math.tanh %510 : vector<1x32xf32>
    %cst_151 = arith.constant 1.000000e+00 : f32
    %512 = vector.broadcast %cst_151 : f32 to vector<1x32xf32>
    %513 = arith.subf %512, %506 : vector<1x32xf32>
    %514 = arith.mulf %513, %511 : vector<1x32xf32>
    %515 = arith.mulf %506, %454 : vector<1x32xf32>
    %516 = arith.addf %514, %515 : vector<1x32xf32>
    %c6_152 = arith.constant 6 : index
    %c0_153 = arith.constant 0 : index
    %517 = vector.load %arg25[%c6_152, %c0_153] : memref<16x32xf32, #tpu.memory_space<vmem>>, vector<1x32xf32>
    tpu.vector_store %arg25[%c6_152, %c0_153], %490 {strides = array<i32>} : memref<16x32xf32, #tpu.memory_space<vmem>>, vector<1x32xf32>,
    %c9_154 = arith.constant 9 : index
    %c0_155 = arith.constant 0 : index
    %518 = vector.load %arg26[%c9_154, %c0_155] : memref<16x32xf32, #tpu.memory_space<vmem>>, vector<1x32xf32>
    tpu.vector_store %arg26[%c9_154, %c0_155], %516 {strides = array<i32>} : memref<16x32xf32, #tpu.memory_space<vmem>>, vector<1x32xf32>,
    %519 = arith.truncf %490 : vector<1x32xf32> to vector<1x32xbf16>
    %cst_156 = arith.constant dense<0.000000e+00> : vector<1x96xf32>
    %520 = tpu.matmul %519, %80, %cst_156 {dimension_numbers = #tpu.dot_dimension_numbers<[1], [0], [0], [1], [0, 0, 1, 1], [], []>} : vector<1x32xbf16>, vector<32x96xbf16>, vector<1x96xf32> -> vector<1x96xf32>
    %521 = arith.addf %520, %82 : vector<1x96xf32>
    %522 = arith.truncf %516 : vector<1x32xf32> to vector<1x32xbf16>
    %cst_157 = arith.constant dense<0.000000e+00> : vector<1x96xf32>
    %523 = tpu.matmul %522, %81, %cst_157 {dimension_numbers = #tpu.dot_dimension_numbers<[1], [0], [0], [1], [0, 0, 1, 1], [], []>} : vector<1x32xbf16>, vector<32x96xbf16>, vector<1x96xf32> -> vector<1x96xf32>
    %524 = arith.addf %523, %83 : vector<1x96xf32>
    %c7 = arith.constant 7 : index
    %c0_158 = arith.constant 0 : index
    %525 = vector.load %arg23[%c7, %c0_158] : memref<16x96xf32, #tpu.memory_space<vmem>>, vector<1x96xf32>
    %c8 = arith.constant 8 : index
    %c0_159 = arith.constant 0 : index
    %526 = vector.load %arg24[%c8, %c0_159] : memref<16x96xf32, #tpu.memory_space<vmem>>, vector<1x96xf32>
    %527 = vector.extract_strided_slice %525 {offsets = [0, 0], sizes = [1, 32], strides = [1, 1]} : vector<1x96xf32> to vector<1x32xf32>
    %528 = vector.extract_strided_slice %521 {offsets = [0, 0], sizes = [1, 32], strides = [1, 1]} : vector<1x96xf32> to vector<1x32xf32>
    %529 = arith.addf %527, %528 : vector<1x32xf32>
    %530 = arith.negf %529 : vector<1x32xf32>
    %531 = math.exp %530 : vector<1x32xf32>
    %cst_160 = arith.constant 1.000000e+00 : f32
    %532 = vector.broadcast %cst_160 : f32 to vector<1x32xf32>
    %533 = arith.addf %532, %531 : vector<1x32xf32>
    %534 = arith.divf %532, %533 : vector<1x32xf32>
    %535 = vector.extract_strided_slice %525 {offsets = [0, 32], sizes = [1, 32], strides = [1, 1]} : vector<1x96xf32> to vector<1x32xf32>
    %536 = vector.extract_strided_slice %521 {offsets = [0, 32], sizes = [1, 32], strides = [1, 1]} : vector<1x96xf32> to vector<1x32xf32>
    %537 = arith.addf %535, %536 : vector<1x32xf32>
    %538 = arith.negf %537 : vector<1x32xf32>
    %539 = math.exp %538 : vector<1x32xf32>
    %cst_161 = arith.constant 1.000000e+00 : f32
    %540 = vector.broadcast %cst_161 : f32 to vector<1x32xf32>
    %541 = arith.addf %540, %539 : vector<1x32xf32>
    %542 = arith.divf %540, %541 : vector<1x32xf32>
    %543 = vector.extract_strided_slice %525 {offsets = [0, 64], sizes = [1, 32], strides = [1, 1]} : vector<1x96xf32> to vector<1x32xf32>
    %544 = vector.extract_strided_slice %521 {offsets = [0, 64], sizes = [1, 32], strides = [1, 1]} : vector<1x96xf32> to vector<1x32xf32>
    %545 = arith.mulf %534, %544 : vector<1x32xf32>
    %546 = arith.addf %543, %545 : vector<1x32xf32>
    %547 = math.tanh %546 : vector<1x32xf32>
    %cst_162 = arith.constant 1.000000e+00 : f32
    %548 = vector.broadcast %cst_162 : f32 to vector<1x32xf32>
    %549 = arith.subf %548, %542 : vector<1x32xf32>
    %550 = arith.mulf %549, %547 : vector<1x32xf32>
    %551 = arith.mulf %542, %490 : vector<1x32xf32>
    %552 = arith.addf %550, %551 : vector<1x32xf32>
    %553 = vector.extract_strided_slice %526 {offsets = [0, 0], sizes = [1, 32], strides = [1, 1]} : vector<1x96xf32> to vector<1x32xf32>
    %554 = vector.extract_strided_slice %524 {offsets = [0, 0], sizes = [1, 32], strides = [1, 1]} : vector<1x96xf32> to vector<1x32xf32>
    %555 = arith.addf %553, %554 : vector<1x32xf32>
    %556 = arith.negf %555 : vector<1x32xf32>
    %557 = math.exp %556 : vector<1x32xf32>
    %cst_163 = arith.constant 1.000000e+00 : f32
    %558 = vector.broadcast %cst_163 : f32 to vector<1x32xf32>
    %559 = arith.addf %558, %557 : vector<1x32xf32>
    %560 = arith.divf %558, %559 : vector<1x32xf32>
    %561 = vector.extract_strided_slice %526 {offsets = [0, 32], sizes = [1, 32], strides = [1, 1]} : vector<1x96xf32> to vector<1x32xf32>
    %562 = vector.extract_strided_slice %524 {offsets = [0, 32], sizes = [1, 32], strides = [1, 1]} : vector<1x96xf32> to vector<1x32xf32>
    %563 = arith.addf %561, %562 : vector<1x32xf32>
    %564 = arith.negf %563 : vector<1x32xf32>
    %565 = math.exp %564 : vector<1x32xf32>
    %cst_164 = arith.constant 1.000000e+00 : f32
    %566 = vector.broadcast %cst_164 : f32 to vector<1x32xf32>
    %567 = arith.addf %566, %565 : vector<1x32xf32>
    %568 = arith.divf %566, %567 : vector<1x32xf32>
    %569 = vector.extract_strided_slice %526 {offsets = [0, 64], sizes = [1, 32], strides = [1, 1]} : vector<1x96xf32> to vector<1x32xf32>
    %570 = vector.extract_strided_slice %524 {offsets = [0, 64], sizes = [1, 32], strides = [1, 1]} : vector<1x96xf32> to vector<1x32xf32>
    %571 = arith.mulf %560, %570 : vector<1x32xf32>
    %572 = arith.addf %569, %571 : vector<1x32xf32>
    %573 = math.tanh %572 : vector<1x32xf32>
    %cst_165 = arith.constant 1.000000e+00 : f32
    %574 = vector.broadcast %cst_165 : f32 to vector<1x32xf32>
    %575 = arith.subf %574, %568 : vector<1x32xf32>
    %576 = arith.mulf %575, %573 : vector<1x32xf32>
    %577 = arith.mulf %568, %516 : vector<1x32xf32>
    %578 = arith.addf %576, %577 : vector<1x32xf32>
    %c7_166 = arith.constant 7 : index
    %c0_167 = arith.constant 0 : index
    %579 = vector.load %arg25[%c7_166, %c0_167] : memref<16x32xf32, #tpu.memory_space<vmem>>, vector<1x32xf32>
    tpu.vector_store %arg25[%c7_166, %c0_167], %552 {strides = array<i32>} : memref<16x32xf32, #tpu.memory_space<vmem>>, vector<1x32xf32>,
    %c8_168 = arith.constant 8 : index
    %c0_169 = arith.constant 0 : index
    %580 = vector.load %arg26[%c8_168, %c0_169] : memref<16x32xf32, #tpu.memory_space<vmem>>, vector<1x32xf32>
    tpu.vector_store %arg26[%c8_168, %c0_169], %578 {strides = array<i32>} : memref<16x32xf32, #tpu.memory_space<vmem>>, vector<1x32xf32>,
    %581 = arith.truncf %552 : vector<1x32xf32> to vector<1x32xbf16>
    %cst_170 = arith.constant dense<0.000000e+00> : vector<1x96xf32>
    %582 = tpu.matmul %581, %80, %cst_170 {dimension_numbers = #tpu.dot_dimension_numbers<[1], [0], [0], [1], [0, 0, 1, 1], [], []>} : vector<1x32xbf16>, vector<32x96xbf16>, vector<1x96xf32> -> vector<1x96xf32>
    %583 = arith.addf %582, %82 : vector<1x96xf32>
    %584 = arith.truncf %578 : vector<1x32xf32> to vector<1x32xbf16>
    %cst_171 = arith.constant dense<0.000000e+00> : vector<1x96xf32>
    %585 = tpu.matmul %584, %81, %cst_171 {dimension_numbers = #tpu.dot_dimension_numbers<[1], [0], [0], [1], [0, 0, 1, 1], [], []>} : vector<1x32xbf16>, vector<32x96xbf16>, vector<1x96xf32> -> vector<1x96xf32>
    %586 = arith.addf %585, %83 : vector<1x96xf32>
    %c8_172 = arith.constant 8 : index
    %c0_173 = arith.constant 0 : index
    %587 = vector.load %arg23[%c8_172, %c0_173] : memref<16x96xf32, #tpu.memory_space<vmem>>, vector<1x96xf32>
    %c7_174 = arith.constant 7 : index
    %c0_175 = arith.constant 0 : index
    %588 = vector.load %arg24[%c7_174, %c0_175] : memref<16x96xf32, #tpu.memory_space<vmem>>, vector<1x96xf32>
    %589 = vector.extract_strided_slice %587 {offsets = [0, 0], sizes = [1, 32], strides = [1, 1]} : vector<1x96xf32> to vector<1x32xf32>
    %590 = vector.extract_strided_slice %583 {offsets = [0, 0], sizes = [1, 32], strides = [1, 1]} : vector<1x96xf32> to vector<1x32xf32>
    %591 = arith.addf %589, %590 : vector<1x32xf32>
    %592 = arith.negf %591 : vector<1x32xf32>
    %593 = math.exp %592 : vector<1x32xf32>
    %cst_176 = arith.constant 1.000000e+00 : f32
    %594 = vector.broadcast %cst_176 : f32 to vector<1x32xf32>
    %595 = arith.addf %594, %593 : vector<1x32xf32>
    %596 = arith.divf %594, %595 : vector<1x32xf32>
    %597 = vector.extract_strided_slice %587 {offsets = [0, 32], sizes = [1, 32], strides = [1, 1]} : vector<1x96xf32> to vector<1x32xf32>
    %598 = vector.extract_strided_slice %583 {offsets = [0, 32], sizes = [1, 32], strides = [1, 1]} : vector<1x96xf32> to vector<1x32xf32>
    %599 = arith.addf %597, %598 : vector<1x32xf32>
    %600 = arith.negf %599 : vector<1x32xf32>
    %601 = math.exp %600 : vector<1x32xf32>
    %cst_177 = arith.constant 1.000000e+00 : f32
    %602 = vector.broadcast %cst_177 : f32 to vector<1x32xf32>
    %603 = arith.addf %602, %601 : vector<1x32xf32>
    %604 = arith.divf %602, %603 : vector<1x32xf32>
    %605 = vector.extract_strided_slice %587 {offsets = [0, 64], sizes = [1, 32], strides = [1, 1]} : vector<1x96xf32> to vector<1x32xf32>
    %606 = vector.extract_strided_slice %583 {offsets = [0, 64], sizes = [1, 32], strides = [1, 1]} : vector<1x96xf32> to vector<1x32xf32>
    %607 = arith.mulf %596, %606 : vector<1x32xf32>
    %608 = arith.addf %605, %607 : vector<1x32xf32>
    %609 = math.tanh %608 : vector<1x32xf32>
    %cst_178 = arith.constant 1.000000e+00 : f32
    %610 = vector.broadcast %cst_178 : f32 to vector<1x32xf32>
    %611 = arith.subf %610, %604 : vector<1x32xf32>
    %612 = arith.mulf %611, %609 : vector<1x32xf32>
    %613 = arith.mulf %604, %552 : vector<1x32xf32>
    %614 = arith.addf %612, %613 : vector<1x32xf32>
    %615 = vector.extract_strided_slice %588 {offsets = [0, 0], sizes = [1, 32], strides = [1, 1]} : vector<1x96xf32> to vector<1x32xf32>
    %616 = vector.extract_strided_slice %586 {offsets = [0, 0], sizes = [1, 32], strides = [1, 1]} : vector<1x96xf32> to vector<1x32xf32>
    %617 = arith.addf %615, %616 : vector<1x32xf32>
    %618 = arith.negf %617 : vector<1x32xf32>
    %619 = math.exp %618 : vector<1x32xf32>
    %cst_179 = arith.constant 1.000000e+00 : f32
    %620 = vector.broadcast %cst_179 : f32 to vector<1x32xf32>
    %621 = arith.addf %620, %619 : vector<1x32xf32>
    %622 = arith.divf %620, %621 : vector<1x32xf32>
    %623 = vector.extract_strided_slice %588 {offsets = [0, 32], sizes = [1, 32], strides = [1, 1]} : vector<1x96xf32> to vector<1x32xf32>
    %624 = vector.extract_strided_slice %586 {offsets = [0, 32], sizes = [1, 32], strides = [1, 1]} : vector<1x96xf32> to vector<1x32xf32>
    %625 = arith.addf %623, %624 : vector<1x32xf32>
    %626 = arith.negf %625 : vector<1x32xf32>
    %627 = math.exp %626 : vector<1x32xf32>
    %cst_180 = arith.constant 1.000000e+00 : f32
    %628 = vector.broadcast %cst_180 : f32 to vector<1x32xf32>
    %629 = arith.addf %628, %627 : vector<1x32xf32>
    %630 = arith.divf %628, %629 : vector<1x32xf32>
    %631 = vector.extract_strided_slice %588 {offsets = [0, 64], sizes = [1, 32], strides = [1, 1]} : vector<1x96xf32> to vector<1x32xf32>
    %632 = vector.extract_strided_slice %586 {offsets = [0, 64], sizes = [1, 32], strides = [1, 1]} : vector<1x96xf32> to vector<1x32xf32>
    %633 = arith.mulf %622, %632 : vector<1x32xf32>
    %634 = arith.addf %631, %633 : vector<1x32xf32>
    %635 = math.tanh %634 : vector<1x32xf32>
    %cst_181 = arith.constant 1.000000e+00 : f32
    %636 = vector.broadcast %cst_181 : f32 to vector<1x32xf32>
    %637 = arith.subf %636, %630 : vector<1x32xf32>
    %638 = arith.mulf %637, %635 : vector<1x32xf32>
    %639 = arith.mulf %630, %578 : vector<1x32xf32>
    %640 = arith.addf %638, %639 : vector<1x32xf32>
    %c8_182 = arith.constant 8 : index
    %c0_183 = arith.constant 0 : index
    %641 = vector.load %arg25[%c8_182, %c0_183] : memref<16x32xf32, #tpu.memory_space<vmem>>, vector<1x32xf32>
    tpu.vector_store %arg25[%c8_182, %c0_183], %614 {strides = array<i32>} : memref<16x32xf32, #tpu.memory_space<vmem>>, vector<1x32xf32>,
    %c7_184 = arith.constant 7 : index
    %c0_185 = arith.constant 0 : index
    %642 = vector.load %arg26[%c7_184, %c0_185] : memref<16x32xf32, #tpu.memory_space<vmem>>, vector<1x32xf32>
    tpu.vector_store %arg26[%c7_184, %c0_185], %640 {strides = array<i32>} : memref<16x32xf32, #tpu.memory_space<vmem>>, vector<1x32xf32>,
    %643 = arith.truncf %614 : vector<1x32xf32> to vector<1x32xbf16>
    %cst_186 = arith.constant dense<0.000000e+00> : vector<1x96xf32>
    %644 = tpu.matmul %643, %80, %cst_186 {dimension_numbers = #tpu.dot_dimension_numbers<[1], [0], [0], [1], [0, 0, 1, 1], [], []>} : vector<1x32xbf16>, vector<32x96xbf16>, vector<1x96xf32> -> vector<1x96xf32>
    %645 = arith.addf %644, %82 : vector<1x96xf32>
    %646 = arith.truncf %640 : vector<1x32xf32> to vector<1x32xbf16>
    %cst_187 = arith.constant dense<0.000000e+00> : vector<1x96xf32>
    %647 = tpu.matmul %646, %81, %cst_187 {dimension_numbers = #tpu.dot_dimension_numbers<[1], [0], [0], [1], [0, 0, 1, 1], [], []>} : vector<1x32xbf16>, vector<32x96xbf16>, vector<1x96xf32> -> vector<1x96xf32>
    %648 = arith.addf %647, %83 : vector<1x96xf32>
    %c9_188 = arith.constant 9 : index
    %c0_189 = arith.constant 0 : index
    %649 = vector.load %arg23[%c9_188, %c0_189] : memref<16x96xf32, #tpu.memory_space<vmem>>, vector<1x96xf32>
    %c6_190 = arith.constant 6 : index
    %c0_191 = arith.constant 0 : index
    %650 = vector.load %arg24[%c6_190, %c0_191] : memref<16x96xf32, #tpu.memory_space<vmem>>, vector<1x96xf32>
    %651 = vector.extract_strided_slice %649 {offsets = [0, 0], sizes = [1, 32], strides = [1, 1]} : vector<1x96xf32> to vector<1x32xf32>
    %652 = vector.extract_strided_slice %645 {offsets = [0, 0], sizes = [1, 32], strides = [1, 1]} : vector<1x96xf32> to vector<1x32xf32>
    %653 = arith.addf %651, %652 : vector<1x32xf32>
    %654 = arith.negf %653 : vector<1x32xf32>
    %655 = math.exp %654 : vector<1x32xf32>
    %cst_192 = arith.constant 1.000000e+00 : f32
    %656 = vector.broadcast %cst_192 : f32 to vector<1x32xf32>
    %657 = arith.addf %656, %655 : vector<1x32xf32>
    %658 = arith.divf %656, %657 : vector<1x32xf32>
    %659 = vector.extract_strided_slice %649 {offsets = [0, 32], sizes = [1, 32], strides = [1, 1]} : vector<1x96xf32> to vector<1x32xf32>
    %660 = vector.extract_strided_slice %645 {offsets = [0, 32], sizes = [1, 32], strides = [1, 1]} : vector<1x96xf32> to vector<1x32xf32>
    %661 = arith.addf %659, %660 : vector<1x32xf32>
    %662 = arith.negf %661 : vector<1x32xf32>
    %663 = math.exp %662 : vector<1x32xf32>
    %cst_193 = arith.constant 1.000000e+00 : f32
    %664 = vector.broadcast %cst_193 : f32 to vector<1x32xf32>
    %665 = arith.addf %664, %663 : vector<1x32xf32>
    %666 = arith.divf %664, %665 : vector<1x32xf32>
    %667 = vector.extract_strided_slice %649 {offsets = [0, 64], sizes = [1, 32], strides = [1, 1]} : vector<1x96xf32> to vector<1x32xf32>
    %668 = vector.extract_strided_slice %645 {offsets = [0, 64], sizes = [1, 32], strides = [1, 1]} : vector<1x96xf32> to vector<1x32xf32>
    %669 = arith.mulf %658, %668 : vector<1x32xf32>
    %670 = arith.addf %667, %669 : vector<1x32xf32>
    %671 = math.tanh %670 : vector<1x32xf32>
    %cst_194 = arith.constant 1.000000e+00 : f32
    %672 = vector.broadcast %cst_194 : f32 to vector<1x32xf32>
    %673 = arith.subf %672, %666 : vector<1x32xf32>
    %674 = arith.mulf %673, %671 : vector<1x32xf32>
    %675 = arith.mulf %666, %614 : vector<1x32xf32>
    %676 = arith.addf %674, %675 : vector<1x32xf32>
    %677 = vector.extract_strided_slice %650 {offsets = [0, 0], sizes = [1, 32], strides = [1, 1]} : vector<1x96xf32> to vector<1x32xf32>
    %678 = vector.extract_strided_slice %648 {offsets = [0, 0], sizes = [1, 32], strides = [1, 1]} : vector<1x96xf32> to vector<1x32xf32>
    %679 = arith.addf %677, %678 : vector<1x32xf32>
    %680 = arith.negf %679 : vector<1x32xf32>
    %681 = math.exp %680 : vector<1x32xf32>
    %cst_195 = arith.constant 1.000000e+00 : f32
    %682 = vector.broadcast %cst_195 : f32 to vector<1x32xf32>
    %683 = arith.addf %682, %681 : vector<1x32xf32>
    %684 = arith.divf %682, %683 : vector<1x32xf32>
    %685 = vector.extract_strided_slice %650 {offsets = [0, 32], sizes = [1, 32], strides = [1, 1]} : vector<1x96xf32> to vector<1x32xf32>
    %686 = vector.extract_strided_slice %648 {offsets = [0, 32], sizes = [1, 32], strides = [1, 1]} : vector<1x96xf32> to vector<1x32xf32>
    %687 = arith.addf %685, %686 : vector<1x32xf32>
    %688 = arith.negf %687 : vector<1x32xf32>
    %689 = math.exp %688 : vector<1x32xf32>
    %cst_196 = arith.constant 1.000000e+00 : f32
    %690 = vector.broadcast %cst_196 : f32 to vector<1x32xf32>
    %691 = arith.addf %690, %689 : vector<1x32xf32>
    %692 = arith.divf %690, %691 : vector<1x32xf32>
    %693 = vector.extract_strided_slice %650 {offsets = [0, 64], sizes = [1, 32], strides = [1, 1]} : vector<1x96xf32> to vector<1x32xf32>
    %694 = vector.extract_strided_slice %648 {offsets = [0, 64], sizes = [1, 32], strides = [1, 1]} : vector<1x96xf32> to vector<1x32xf32>
    %695 = arith.mulf %684, %694 : vector<1x32xf32>
    %696 = arith.addf %693, %695 : vector<1x32xf32>
    %697 = math.tanh %696 : vector<1x32xf32>
    %cst_197 = arith.constant 1.000000e+00 : f32
    %698 = vector.broadcast %cst_197 : f32 to vector<1x32xf32>
    %699 = arith.subf %698, %692 : vector<1x32xf32>
    %700 = arith.mulf %699, %697 : vector<1x32xf32>
    %701 = arith.mulf %692, %640 : vector<1x32xf32>
    %702 = arith.addf %700, %701 : vector<1x32xf32>
    %c9_198 = arith.constant 9 : index
    %c0_199 = arith.constant 0 : index
    %703 = vector.load %arg25[%c9_198, %c0_199] : memref<16x32xf32, #tpu.memory_space<vmem>>, vector<1x32xf32>
    tpu.vector_store %arg25[%c9_198, %c0_199], %676 {strides = array<i32>} : memref<16x32xf32, #tpu.memory_space<vmem>>, vector<1x32xf32>,
    %c6_200 = arith.constant 6 : index
    %c0_201 = arith.constant 0 : index
    %704 = vector.load %arg26[%c6_200, %c0_201] : memref<16x32xf32, #tpu.memory_space<vmem>>, vector<1x32xf32>
    tpu.vector_store %arg26[%c6_200, %c0_201], %702 {strides = array<i32>} : memref<16x32xf32, #tpu.memory_space<vmem>>, vector<1x32xf32>,
    %705 = arith.truncf %676 : vector<1x32xf32> to vector<1x32xbf16>
    %cst_202 = arith.constant dense<0.000000e+00> : vector<1x96xf32>
    %706 = tpu.matmul %705, %80, %cst_202 {dimension_numbers = #tpu.dot_dimension_numbers<[1], [0], [0], [1], [0, 0, 1, 1], [], []>} : vector<1x32xbf16>, vector<32x96xbf16>, vector<1x96xf32> -> vector<1x96xf32>
    %707 = arith.addf %706, %82 : vector<1x96xf32>
    %708 = arith.truncf %702 : vector<1x32xf32> to vector<1x32xbf16>
    %cst_203 = arith.constant dense<0.000000e+00> : vector<1x96xf32>
    %709 = tpu.matmul %708, %81, %cst_203 {dimension_numbers = #tpu.dot_dimension_numbers<[1], [0], [0], [1], [0, 0, 1, 1], [], []>} : vector<1x32xbf16>, vector<32x96xbf16>, vector<1x96xf32> -> vector<1x96xf32>
    %710 = arith.addf %709, %83 : vector<1x96xf32>
    %c10_204 = arith.constant 10 : index
    %c0_205 = arith.constant 0 : index
    %711 = vector.load %arg23[%c10_204, %c0_205] : memref<16x96xf32, #tpu.memory_space<vmem>>, vector<1x96xf32>
    %c5_206 = arith.constant 5 : index
    %c0_207 = arith.constant 0 : index
    %712 = vector.load %arg24[%c5_206, %c0_207] : memref<16x96xf32, #tpu.memory_space<vmem>>, vector<1x96xf32>
    %713 = vector.extract_strided_slice %711 {offsets = [0, 0], sizes = [1, 32], strides = [1, 1]} : vector<1x96xf32> to vector<1x32xf32>
    %714 = vector.extract_strided_slice %707 {offsets = [0, 0], sizes = [1, 32], strides = [1, 1]} : vector<1x96xf32> to vector<1x32xf32>
    %715 = arith.addf %713, %714 : vector<1x32xf32>
    %716 = arith.negf %715 : vector<1x32xf32>
    %717 = math.exp %716 : vector<1x32xf32>
    %cst_208 = arith.constant 1.000000e+00 : f32
    %718 = vector.broadcast %cst_208 : f32 to vector<1x32xf32>
    %719 = arith.addf %718, %717 : vector<1x32xf32>
    %720 = arith.divf %718, %719 : vector<1x32xf32>
    %721 = vector.extract_strided_slice %711 {offsets = [0, 32], sizes = [1, 32], strides = [1, 1]} : vector<1x96xf32> to vector<1x32xf32>
    %722 = vector.extract_strided_slice %707 {offsets = [0, 32], sizes = [1, 32], strides = [1, 1]} : vector<1x96xf32> to vector<1x32xf32>
    %723 = arith.addf %721, %722 : vector<1x32xf32>
    %724 = arith.negf %723 : vector<1x32xf32>
    %725 = math.exp %724 : vector<1x32xf32>
    %cst_209 = arith.constant 1.000000e+00 : f32
    %726 = vector.broadcast %cst_209 : f32 to vector<1x32xf32>
    %727 = arith.addf %726, %725 : vector<1x32xf32>
    %728 = arith.divf %726, %727 : vector<1x32xf32>
    %729 = vector.extract_strided_slice %711 {offsets = [0, 64], sizes = [1, 32], strides = [1, 1]} : vector<1x96xf32> to vector<1x32xf32>
    %730 = vector.extract_strided_slice %707 {offsets = [0, 64], sizes = [1, 32], strides = [1, 1]} : vector<1x96xf32> to vector<1x32xf32>
    %731 = arith.mulf %720, %730 : vector<1x32xf32>
    %732 = arith.addf %729, %731 : vector<1x32xf32>
    %733 = math.tanh %732 : vector<1x32xf32>
    %cst_210 = arith.constant 1.000000e+00 : f32
    %734 = vector.broadcast %cst_210 : f32 to vector<1x32xf32>
    %735 = arith.subf %734, %728 : vector<1x32xf32>
    %736 = arith.mulf %735, %733 : vector<1x32xf32>
    %737 = arith.mulf %728, %676 : vector<1x32xf32>
    %738 = arith.addf %736, %737 : vector<1x32xf32>
    %739 = vector.extract_strided_slice %712 {offsets = [0, 0], sizes = [1, 32], strides = [1, 1]} : vector<1x96xf32> to vector<1x32xf32>
    %740 = vector.extract_strided_slice %710 {offsets = [0, 0], sizes = [1, 32], strides = [1, 1]} : vector<1x96xf32> to vector<1x32xf32>
    %741 = arith.addf %739, %740 : vector<1x32xf32>
    %742 = arith.negf %741 : vector<1x32xf32>
    %743 = math.exp %742 : vector<1x32xf32>
    %cst_211 = arith.constant 1.000000e+00 : f32
    %744 = vector.broadcast %cst_211 : f32 to vector<1x32xf32>
    %745 = arith.addf %744, %743 : vector<1x32xf32>
    %746 = arith.divf %744, %745 : vector<1x32xf32>
    %747 = vector.extract_strided_slice %712 {offsets = [0, 32], sizes = [1, 32], strides = [1, 1]} : vector<1x96xf32> to vector<1x32xf32>
    %748 = vector.extract_strided_slice %710 {offsets = [0, 32], sizes = [1, 32], strides = [1, 1]} : vector<1x96xf32> to vector<1x32xf32>
    %749 = arith.addf %747, %748 : vector<1x32xf32>
    %750 = arith.negf %749 : vector<1x32xf32>
    %751 = math.exp %750 : vector<1x32xf32>
    %cst_212 = arith.constant 1.000000e+00 : f32
    %752 = vector.broadcast %cst_212 : f32 to vector<1x32xf32>
    %753 = arith.addf %752, %751 : vector<1x32xf32>
    %754 = arith.divf %752, %753 : vector<1x32xf32>
    %755 = vector.extract_strided_slice %712 {offsets = [0, 64], sizes = [1, 32], strides = [1, 1]} : vector<1x96xf32> to vector<1x32xf32>
    %756 = vector.extract_strided_slice %710 {offsets = [0, 64], sizes = [1, 32], strides = [1, 1]} : vector<1x96xf32> to vector<1x32xf32>
    %757 = arith.mulf %746, %756 : vector<1x32xf32>
    %758 = arith.addf %755, %757 : vector<1x32xf32>
    %759 = math.tanh %758 : vector<1x32xf32>
    %cst_213 = arith.constant 1.000000e+00 : f32
    %760 = vector.broadcast %cst_213 : f32 to vector<1x32xf32>
    %761 = arith.subf %760, %754 : vector<1x32xf32>
    %762 = arith.mulf %761, %759 : vector<1x32xf32>
    %763 = arith.mulf %754, %702 : vector<1x32xf32>
    %764 = arith.addf %762, %763 : vector<1x32xf32>
    %c10_214 = arith.constant 10 : index
    %c0_215 = arith.constant 0 : index
    %765 = vector.load %arg25[%c10_214, %c0_215] : memref<16x32xf32, #tpu.memory_space<vmem>>, vector<1x32xf32>
    tpu.vector_store %arg25[%c10_214, %c0_215], %738 {strides = array<i32>} : memref<16x32xf32, #tpu.memory_space<vmem>>, vector<1x32xf32>,
    %c5_216 = arith.constant 5 : index
    %c0_217 = arith.constant 0 : index
    %766 = vector.load %arg26[%c5_216, %c0_217] : memref<16x32xf32, #tpu.memory_space<vmem>>, vector<1x32xf32>
    tpu.vector_store %arg26[%c5_216, %c0_217], %764 {strides = array<i32>} : memref<16x32xf32, #tpu.memory_space<vmem>>, vector<1x32xf32>,
    %767 = arith.truncf %738 : vector<1x32xf32> to vector<1x32xbf16>
    %cst_218 = arith.constant dense<0.000000e+00> : vector<1x96xf32>
    %768 = tpu.matmul %767, %80, %cst_218 {dimension_numbers = #tpu.dot_dimension_numbers<[1], [0], [0], [1], [0, 0, 1, 1], [], []>} : vector<1x32xbf16>, vector<32x96xbf16>, vector<1x96xf32> -> vector<1x96xf32>
    %769 = arith.addf %768, %82 : vector<1x96xf32>
    %770 = arith.truncf %764 : vector<1x32xf32> to vector<1x32xbf16>
    %cst_219 = arith.constant dense<0.000000e+00> : vector<1x96xf32>
    %771 = tpu.matmul %770, %81, %cst_219 {dimension_numbers = #tpu.dot_dimension_numbers<[1], [0], [0], [1], [0, 0, 1, 1], [], []>} : vector<1x32xbf16>, vector<32x96xbf16>, vector<1x96xf32> -> vector<1x96xf32>
    %772 = arith.addf %771, %83 : vector<1x96xf32>
    %c11_220 = arith.constant 11 : index
    %c0_221 = arith.constant 0 : index
    %773 = vector.load %arg23[%c11_220, %c0_221] : memref<16x96xf32, #tpu.memory_space<vmem>>, vector<1x96xf32>
    %c4_222 = arith.constant 4 : index
    %c0_223 = arith.constant 0 : index
    %774 = vector.load %arg24[%c4_222, %c0_223] : memref<16x96xf32, #tpu.memory_space<vmem>>, vector<1x96xf32>
    %775 = vector.extract_strided_slice %773 {offsets = [0, 0], sizes = [1, 32], strides = [1, 1]} : vector<1x96xf32> to vector<1x32xf32>
    %776 = vector.extract_strided_slice %769 {offsets = [0, 0], sizes = [1, 32], strides = [1, 1]} : vector<1x96xf32> to vector<1x32xf32>
    %777 = arith.addf %775, %776 : vector<1x32xf32>
    %778 = arith.negf %777 : vector<1x32xf32>
    %779 = math.exp %778 : vector<1x32xf32>
    %cst_224 = arith.constant 1.000000e+00 : f32
    %780 = vector.broadcast %cst_224 : f32 to vector<1x32xf32>
    %781 = arith.addf %780, %779 : vector<1x32xf32>
    %782 = arith.divf %780, %781 : vector<1x32xf32>
    %783 = vector.extract_strided_slice %773 {offsets = [0, 32], sizes = [1, 32], strides = [1, 1]} : vector<1x96xf32> to vector<1x32xf32>
    %784 = vector.extract_strided_slice %769 {offsets = [0, 32], sizes = [1, 32], strides = [1, 1]} : vector<1x96xf32> to vector<1x32xf32>
    %785 = arith.addf %783, %784 : vector<1x32xf32>
    %786 = arith.negf %785 : vector<1x32xf32>
    %787 = math.exp %786 : vector<1x32xf32>
    %cst_225 = arith.constant 1.000000e+00 : f32
    %788 = vector.broadcast %cst_225 : f32 to vector<1x32xf32>
    %789 = arith.addf %788, %787 : vector<1x32xf32>
    %790 = arith.divf %788, %789 : vector<1x32xf32>
    %791 = vector.extract_strided_slice %773 {offsets = [0, 64], sizes = [1, 32], strides = [1, 1]} : vector<1x96xf32> to vector<1x32xf32>
    %792 = vector.extract_strided_slice %769 {offsets = [0, 64], sizes = [1, 32], strides = [1, 1]} : vector<1x96xf32> to vector<1x32xf32>
    %793 = arith.mulf %782, %792 : vector<1x32xf32>
    %794 = arith.addf %791, %793 : vector<1x32xf32>
    %795 = math.tanh %794 : vector<1x32xf32>
    %cst_226 = arith.constant 1.000000e+00 : f32
    %796 = vector.broadcast %cst_226 : f32 to vector<1x32xf32>
    %797 = arith.subf %796, %790 : vector<1x32xf32>
    %798 = arith.mulf %797, %795 : vector<1x32xf32>
    %799 = arith.mulf %790, %738 : vector<1x32xf32>
    %800 = arith.addf %798, %799 : vector<1x32xf32>
    %801 = vector.extract_strided_slice %774 {offsets = [0, 0], sizes = [1, 32], strides = [1, 1]} : vector<1x96xf32> to vector<1x32xf32>
    %802 = vector.extract_strided_slice %772 {offsets = [0, 0], sizes = [1, 32], strides = [1, 1]} : vector<1x96xf32> to vector<1x32xf32>
    %803 = arith.addf %801, %802 : vector<1x32xf32>
    %804 = arith.negf %803 : vector<1x32xf32>
    %805 = math.exp %804 : vector<1x32xf32>
    %cst_227 = arith.constant 1.000000e+00 : f32
    %806 = vector.broadcast %cst_227 : f32 to vector<1x32xf32>
    %807 = arith.addf %806, %805 : vector<1x32xf32>
    %808 = arith.divf %806, %807 : vector<1x32xf32>
    %809 = vector.extract_strided_slice %774 {offsets = [0, 32], sizes = [1, 32], strides = [1, 1]} : vector<1x96xf32> to vector<1x32xf32>
    %810 = vector.extract_strided_slice %772 {offsets = [0, 32], sizes = [1, 32], strides = [1, 1]} : vector<1x96xf32> to vector<1x32xf32>
    %811 = arith.addf %809, %810 : vector<1x32xf32>
    %812 = arith.negf %811 : vector<1x32xf32>
    %813 = math.exp %812 : vector<1x32xf32>
    %cst_228 = arith.constant 1.000000e+00 : f32
    %814 = vector.broadcast %cst_228 : f32 to vector<1x32xf32>
    %815 = arith.addf %814, %813 : vector<1x32xf32>
    %816 = arith.divf %814, %815 : vector<1x32xf32>
    %817 = vector.extract_strided_slice %774 {offsets = [0, 64], sizes = [1, 32], strides = [1, 1]} : vector<1x96xf32> to vector<1x32xf32>
    %818 = vector.extract_strided_slice %772 {offsets = [0, 64], sizes = [1, 32], strides = [1, 1]} : vector<1x96xf32> to vector<1x32xf32>
    %819 = arith.mulf %808, %818 : vector<1x32xf32>
    %820 = arith.addf %817, %819 : vector<1x32xf32>
    %821 = math.tanh %820 : vector<1x32xf32>
    %cst_229 = arith.constant 1.000000e+00 : f32
    %822 = vector.broadcast %cst_229 : f32 to vector<1x32xf32>
    %823 = arith.subf %822, %816 : vector<1x32xf32>
    %824 = arith.mulf %823, %821 : vector<1x32xf32>
    %825 = arith.mulf %816, %764 : vector<1x32xf32>
    %826 = arith.addf %824, %825 : vector<1x32xf32>
    %c11_230 = arith.constant 11 : index
    %c0_231 = arith.constant 0 : index
    %827 = vector.load %arg25[%c11_230, %c0_231] : memref<16x32xf32, #tpu.memory_space<vmem>>, vector<1x32xf32>
    tpu.vector_store %arg25[%c11_230, %c0_231], %800 {strides = array<i32>} : memref<16x32xf32, #tpu.memory_space<vmem>>, vector<1x32xf32>,
    %c4_232 = arith.constant 4 : index
    %c0_233 = arith.constant 0 : index
    %828 = vector.load %arg26[%c4_232, %c0_233] : memref<16x32xf32, #tpu.memory_space<vmem>>, vector<1x32xf32>
    tpu.vector_store %arg26[%c4_232, %c0_233], %826 {strides = array<i32>} : memref<16x32xf32, #tpu.memory_space<vmem>>, vector<1x32xf32>,
    %829 = arith.truncf %800 : vector<1x32xf32> to vector<1x32xbf16>
    %cst_234 = arith.constant dense<0.000000e+00> : vector<1x96xf32>
    %830 = tpu.matmul %829, %80, %cst_234 {dimension_numbers = #tpu.dot_dimension_numbers<[1], [0], [0], [1], [0, 0, 1, 1], [], []>} : vector<1x32xbf16>, vector<32x96xbf16>, vector<1x96xf32> -> vector<1x96xf32>
    %831 = arith.addf %830, %82 : vector<1x96xf32>
    %832 = arith.truncf %826 : vector<1x32xf32> to vector<1x32xbf16>
    %cst_235 = arith.constant dense<0.000000e+00> : vector<1x96xf32>
    %833 = tpu.matmul %832, %81, %cst_235 {dimension_numbers = #tpu.dot_dimension_numbers<[1], [0], [0], [1], [0, 0, 1, 1], [], []>} : vector<1x32xbf16>, vector<32x96xbf16>, vector<1x96xf32> -> vector<1x96xf32>
    %834 = arith.addf %833, %83 : vector<1x96xf32>
    %c12_236 = arith.constant 12 : index
    %c0_237 = arith.constant 0 : index
    %835 = vector.load %arg23[%c12_236, %c0_237] : memref<16x96xf32, #tpu.memory_space<vmem>>, vector<1x96xf32>
    %c3_238 = arith.constant 3 : index
    %c0_239 = arith.constant 0 : index
    %836 = vector.load %arg24[%c3_238, %c0_239] : memref<16x96xf32, #tpu.memory_space<vmem>>, vector<1x96xf32>
    %837 = vector.extract_strided_slice %835 {offsets = [0, 0], sizes = [1, 32], strides = [1, 1]} : vector<1x96xf32> to vector<1x32xf32>
    %838 = vector.extract_strided_slice %831 {offsets = [0, 0], sizes = [1, 32], strides = [1, 1]} : vector<1x96xf32> to vector<1x32xf32>
    %839 = arith.addf %837, %838 : vector<1x32xf32>
    %840 = arith.negf %839 : vector<1x32xf32>
    %841 = math.exp %840 : vector<1x32xf32>
    %cst_240 = arith.constant 1.000000e+00 : f32
    %842 = vector.broadcast %cst_240 : f32 to vector<1x32xf32>
    %843 = arith.addf %842, %841 : vector<1x32xf32>
    %844 = arith.divf %842, %843 : vector<1x32xf32>
    %845 = vector.extract_strided_slice %835 {offsets = [0, 32], sizes = [1, 32], strides = [1, 1]} : vector<1x96xf32> to vector<1x32xf32>
    %846 = vector.extract_strided_slice %831 {offsets = [0, 32], sizes = [1, 32], strides = [1, 1]} : vector<1x96xf32> to vector<1x32xf32>
    %847 = arith.addf %845, %846 : vector<1x32xf32>
    %848 = arith.negf %847 : vector<1x32xf32>
    %849 = math.exp %848 : vector<1x32xf32>
    %cst_241 = arith.constant 1.000000e+00 : f32
    %850 = vector.broadcast %cst_241 : f32 to vector<1x32xf32>
    %851 = arith.addf %850, %849 : vector<1x32xf32>
    %852 = arith.divf %850, %851 : vector<1x32xf32>
    %853 = vector.extract_strided_slice %835 {offsets = [0, 64], sizes = [1, 32], strides = [1, 1]} : vector<1x96xf32> to vector<1x32xf32>
    %854 = vector.extract_strided_slice %831 {offsets = [0, 64], sizes = [1, 32], strides = [1, 1]} : vector<1x96xf32> to vector<1x32xf32>
    %855 = arith.mulf %844, %854 : vector<1x32xf32>
    %856 = arith.addf %853, %855 : vector<1x32xf32>
    %857 = math.tanh %856 : vector<1x32xf32>
    %cst_242 = arith.constant 1.000000e+00 : f32
    %858 = vector.broadcast %cst_242 : f32 to vector<1x32xf32>
    %859 = arith.subf %858, %852 : vector<1x32xf32>
    %860 = arith.mulf %859, %857 : vector<1x32xf32>
    %861 = arith.mulf %852, %800 : vector<1x32xf32>
    %862 = arith.addf %860, %861 : vector<1x32xf32>
    %863 = vector.extract_strided_slice %836 {offsets = [0, 0], sizes = [1, 32], strides = [1, 1]} : vector<1x96xf32> to vector<1x32xf32>
    %864 = vector.extract_strided_slice %834 {offsets = [0, 0], sizes = [1, 32], strides = [1, 1]} : vector<1x96xf32> to vector<1x32xf32>
    %865 = arith.addf %863, %864 : vector<1x32xf32>
    %866 = arith.negf %865 : vector<1x32xf32>
    %867 = math.exp %866 : vector<1x32xf32>
    %cst_243 = arith.constant 1.000000e+00 : f32
    %868 = vector.broadcast %cst_243 : f32 to vector<1x32xf32>
    %869 = arith.addf %868, %867 : vector<1x32xf32>
    %870 = arith.divf %868, %869 : vector<1x32xf32>
    %871 = vector.extract_strided_slice %836 {offsets = [0, 32], sizes = [1, 32], strides = [1, 1]} : vector<1x96xf32> to vector<1x32xf32>
    %872 = vector.extract_strided_slice %834 {offsets = [0, 32], sizes = [1, 32], strides = [1, 1]} : vector<1x96xf32> to vector<1x32xf32>
    %873 = arith.addf %871, %872 : vector<1x32xf32>
    %874 = arith.negf %873 : vector<1x32xf32>
    %875 = math.exp %874 : vector<1x32xf32>
    %cst_244 = arith.constant 1.000000e+00 : f32
    %876 = vector.broadcast %cst_244 : f32 to vector<1x32xf32>
    %877 = arith.addf %876, %875 : vector<1x32xf32>
    %878 = arith.divf %876, %877 : vector<1x32xf32>
    %879 = vector.extract_strided_slice %836 {offsets = [0, 64], sizes = [1, 32], strides = [1, 1]} : vector<1x96xf32> to vector<1x32xf32>
    %880 = vector.extract_strided_slice %834 {offsets = [0, 64], sizes = [1, 32], strides = [1, 1]} : vector<1x96xf32> to vector<1x32xf32>
    %881 = arith.mulf %870, %880 : vector<1x32xf32>
    %882 = arith.addf %879, %881 : vector<1x32xf32>
    %883 = math.tanh %882 : vector<1x32xf32>
    %cst_245 = arith.constant 1.000000e+00 : f32
    %884 = vector.broadcast %cst_245 : f32 to vector<1x32xf32>
    %885 = arith.subf %884, %878 : vector<1x32xf32>
    %886 = arith.mulf %885, %883 : vector<1x32xf32>
    %887 = arith.mulf %878, %826 : vector<1x32xf32>
    %888 = arith.addf %886, %887 : vector<1x32xf32>
    %c12_246 = arith.constant 12 : index
    %c0_247 = arith.constant 0 : index
    %889 = vector.load %arg25[%c12_246, %c0_247] : memref<16x32xf32, #tpu.memory_space<vmem>>, vector<1x32xf32>
    tpu.vector_store %arg25[%c12_246, %c0_247], %862 {strides = array<i32>} : memref<16x32xf32, #tpu.memory_space<vmem>>, vector<1x32xf32>,
    %c3_248 = arith.constant 3 : index
    %c0_249 = arith.constant 0 : index
    %890 = vector.load %arg26[%c3_248, %c0_249] : memref<16x32xf32, #tpu.memory_space<vmem>>, vector<1x32xf32>
    tpu.vector_store %arg26[%c3_248, %c0_249], %888 {strides = array<i32>} : memref<16x32xf32, #tpu.memory_space<vmem>>, vector<1x32xf32>,
    %891 = arith.truncf %862 : vector<1x32xf32> to vector<1x32xbf16>
    %cst_250 = arith.constant dense<0.000000e+00> : vector<1x96xf32>
    %892 = tpu.matmul %891, %80, %cst_250 {dimension_numbers = #tpu.dot_dimension_numbers<[1], [0], [0], [1], [0, 0, 1, 1], [], []>} : vector<1x32xbf16>, vector<32x96xbf16>, vector<1x96xf32> -> vector<1x96xf32>
    %893 = arith.addf %892, %82 : vector<1x96xf32>
    %894 = arith.truncf %888 : vector<1x32xf32> to vector<1x32xbf16>
    %cst_251 = arith.constant dense<0.000000e+00> : vector<1x96xf32>
    %895 = tpu.matmul %894, %81, %cst_251 {dimension_numbers = #tpu.dot_dimension_numbers<[1], [0], [0], [1], [0, 0, 1, 1], [], []>} : vector<1x32xbf16>, vector<32x96xbf16>, vector<1x96xf32> -> vector<1x96xf32>
    %896 = arith.addf %895, %83 : vector<1x96xf32>
    %c13_252 = arith.constant 13 : index
    %c0_253 = arith.constant 0 : index
    %897 = vector.load %arg23[%c13_252, %c0_253] : memref<16x96xf32, #tpu.memory_space<vmem>>, vector<1x96xf32>
    %c2_254 = arith.constant 2 : index
    %c0_255 = arith.constant 0 : index
    %898 = vector.load %arg24[%c2_254, %c0_255] : memref<16x96xf32, #tpu.memory_space<vmem>>, vector<1x96xf32>
    %899 = vector.extract_strided_slice %897 {offsets = [0, 0], sizes = [1, 32], strides = [1, 1]} : vector<1x96xf32> to vector<1x32xf32>
    %900 = vector.extract_strided_slice %893 {offsets = [0, 0], sizes = [1, 32], strides = [1, 1]} : vector<1x96xf32> to vector<1x32xf32>
    %901 = arith.addf %899, %900 : vector<1x32xf32>
    %902 = arith.negf %901 : vector<1x32xf32>
    %903 = math.exp %902 : vector<1x32xf32>
    %cst_256 = arith.constant 1.000000e+00 : f32
    %904 = vector.broadcast %cst_256 : f32 to vector<1x32xf32>
    %905 = arith.addf %904, %903 : vector<1x32xf32>
    %906 = arith.divf %904, %905 : vector<1x32xf32>
    %907 = vector.extract_strided_slice %897 {offsets = [0, 32], sizes = [1, 32], strides = [1, 1]} : vector<1x96xf32> to vector<1x32xf32>
    %908 = vector.extract_strided_slice %893 {offsets = [0, 32], sizes = [1, 32], strides = [1, 1]} : vector<1x96xf32> to vector<1x32xf32>
    %909 = arith.addf %907, %908 : vector<1x32xf32>
    %910 = arith.negf %909 : vector<1x32xf32>
    %911 = math.exp %910 : vector<1x32xf32>
    %cst_257 = arith.constant 1.000000e+00 : f32
    %912 = vector.broadcast %cst_257 : f32 to vector<1x32xf32>
    %913 = arith.addf %912, %911 : vector<1x32xf32>
    %914 = arith.divf %912, %913 : vector<1x32xf32>
    %915 = vector.extract_strided_slice %897 {offsets = [0, 64], sizes = [1, 32], strides = [1, 1]} : vector<1x96xf32> to vector<1x32xf32>
    %916 = vector.extract_strided_slice %893 {offsets = [0, 64], sizes = [1, 32], strides = [1, 1]} : vector<1x96xf32> to vector<1x32xf32>
    %917 = arith.mulf %906, %916 : vector<1x32xf32>
    %918 = arith.addf %915, %917 : vector<1x32xf32>
    %919 = math.tanh %918 : vector<1x32xf32>
    %cst_258 = arith.constant 1.000000e+00 : f32
    %920 = vector.broadcast %cst_258 : f32 to vector<1x32xf32>
    %921 = arith.subf %920, %914 : vector<1x32xf32>
    %922 = arith.mulf %921, %919 : vector<1x32xf32>
    %923 = arith.mulf %914, %862 : vector<1x32xf32>
    %924 = arith.addf %922, %923 : vector<1x32xf32>
    %925 = vector.extract_strided_slice %898 {offsets = [0, 0], sizes = [1, 32], strides = [1, 1]} : vector<1x96xf32> to vector<1x32xf32>
    %926 = vector.extract_strided_slice %896 {offsets = [0, 0], sizes = [1, 32], strides = [1, 1]} : vector<1x96xf32> to vector<1x32xf32>
    %927 = arith.addf %925, %926 : vector<1x32xf32>
    %928 = arith.negf %927 : vector<1x32xf32>
    %929 = math.exp %928 : vector<1x32xf32>
    %cst_259 = arith.constant 1.000000e+00 : f32
    %930 = vector.broadcast %cst_259 : f32 to vector<1x32xf32>
    %931 = arith.addf %930, %929 : vector<1x32xf32>
    %932 = arith.divf %930, %931 : vector<1x32xf32>
    %933 = vector.extract_strided_slice %898 {offsets = [0, 32], sizes = [1, 32], strides = [1, 1]} : vector<1x96xf32> to vector<1x32xf32>
    %934 = vector.extract_strided_slice %896 {offsets = [0, 32], sizes = [1, 32], strides = [1, 1]} : vector<1x96xf32> to vector<1x32xf32>
    %935 = arith.addf %933, %934 : vector<1x32xf32>
    %936 = arith.negf %935 : vector<1x32xf32>
    %937 = math.exp %936 : vector<1x32xf32>
    %cst_260 = arith.constant 1.000000e+00 : f32
    %938 = vector.broadcast %cst_260 : f32 to vector<1x32xf32>
    %939 = arith.addf %938, %937 : vector<1x32xf32>
    %940 = arith.divf %938, %939 : vector<1x32xf32>
    %941 = vector.extract_strided_slice %898 {offsets = [0, 64], sizes = [1, 32], strides = [1, 1]} : vector<1x96xf32> to vector<1x32xf32>
    %942 = vector.extract_strided_slice %896 {offsets = [0, 64], sizes = [1, 32], strides = [1, 1]} : vector<1x96xf32> to vector<1x32xf32>
    %943 = arith.mulf %932, %942 : vector<1x32xf32>
    %944 = arith.addf %941, %943 : vector<1x32xf32>
    %945 = math.tanh %944 : vector<1x32xf32>
    %cst_261 = arith.constant 1.000000e+00 : f32
    %946 = vector.broadcast %cst_261 : f32 to vector<1x32xf32>
    %947 = arith.subf %946, %940 : vector<1x32xf32>
    %948 = arith.mulf %947, %945 : vector<1x32xf32>
    %949 = arith.mulf %940, %888 : vector<1x32xf32>
    %950 = arith.addf %948, %949 : vector<1x32xf32>
    %c13_262 = arith.constant 13 : index
    %c0_263 = arith.constant 0 : index
    %951 = vector.load %arg25[%c13_262, %c0_263] : memref<16x32xf32, #tpu.memory_space<vmem>>, vector<1x32xf32>
    tpu.vector_store %arg25[%c13_262, %c0_263], %924 {strides = array<i32>} : memref<16x32xf32, #tpu.memory_space<vmem>>, vector<1x32xf32>,
    %c2_264 = arith.constant 2 : index
    %c0_265 = arith.constant 0 : index
    %952 = vector.load %arg26[%c2_264, %c0_265] : memref<16x32xf32, #tpu.memory_space<vmem>>, vector<1x32xf32>
    tpu.vector_store %arg26[%c2_264, %c0_265], %950 {strides = array<i32>} : memref<16x32xf32, #tpu.memory_space<vmem>>, vector<1x32xf32>,
    %953 = arith.truncf %924 : vector<1x32xf32> to vector<1x32xbf16>
    %cst_266 = arith.constant dense<0.000000e+00> : vector<1x96xf32>
    %954 = tpu.matmul %953, %80, %cst_266 {dimension_numbers = #tpu.dot_dimension_numbers<[1], [0], [0], [1], [0, 0, 1, 1], [], []>} : vector<1x32xbf16>, vector<32x96xbf16>, vector<1x96xf32> -> vector<1x96xf32>
    %955 = arith.addf %954, %82 : vector<1x96xf32>
    %956 = arith.truncf %950 : vector<1x32xf32> to vector<1x32xbf16>
    %cst_267 = arith.constant dense<0.000000e+00> : vector<1x96xf32>
    %957 = tpu.matmul %956, %81, %cst_267 {dimension_numbers = #tpu.dot_dimension_numbers<[1], [0], [0], [1], [0, 0, 1, 1], [], []>} : vector<1x32xbf16>, vector<32x96xbf16>, vector<1x96xf32> -> vector<1x96xf32>
    %958 = arith.addf %957, %83 : vector<1x96xf32>
    %c14_268 = arith.constant 14 : index
    %c0_269 = arith.constant 0 : index
    %959 = vector.load %arg23[%c14_268, %c0_269] : memref<16x96xf32, #tpu.memory_space<vmem>>, vector<1x96xf32>
    %c1_270 = arith.constant 1 : index
    %c0_271 = arith.constant 0 : index
    %960 = vector.load %arg24[%c1_270, %c0_271] : memref<16x96xf32, #tpu.memory_space<vmem>>, vector<1x96xf32>
    %961 = vector.extract_strided_slice %959 {offsets = [0, 0], sizes = [1, 32], strides = [1, 1]} : vector<1x96xf32> to vector<1x32xf32>
    %962 = vector.extract_strided_slice %955 {offsets = [0, 0], sizes = [1, 32], strides = [1, 1]} : vector<1x96xf32> to vector<1x32xf32>
    %963 = arith.addf %961, %962 : vector<1x32xf32>
    %964 = arith.negf %963 : vector<1x32xf32>
    %965 = math.exp %964 : vector<1x32xf32>
    %cst_272 = arith.constant 1.000000e+00 : f32
    %966 = vector.broadcast %cst_272 : f32 to vector<1x32xf32>
    %967 = arith.addf %966, %965 : vector<1x32xf32>
    %968 = arith.divf %966, %967 : vector<1x32xf32>
    %969 = vector.extract_strided_slice %959 {offsets = [0, 32], sizes = [1, 32], strides = [1, 1]} : vector<1x96xf32> to vector<1x32xf32>
    %970 = vector.extract_strided_slice %955 {offsets = [0, 32], sizes = [1, 32], strides = [1, 1]} : vector<1x96xf32> to vector<1x32xf32>
    %971 = arith.addf %969, %970 : vector<1x32xf32>
    %972 = arith.negf %971 : vector<1x32xf32>
    %973 = math.exp %972 : vector<1x32xf32>
    %cst_273 = arith.constant 1.000000e+00 : f32
    %974 = vector.broadcast %cst_273 : f32 to vector<1x32xf32>
    %975 = arith.addf %974, %973 : vector<1x32xf32>
    %976 = arith.divf %974, %975 : vector<1x32xf32>
    %977 = vector.extract_strided_slice %959 {offsets = [0, 64], sizes = [1, 32], strides = [1, 1]} : vector<1x96xf32> to vector<1x32xf32>
    %978 = vector.extract_strided_slice %955 {offsets = [0, 64], sizes = [1, 32], strides = [1, 1]} : vector<1x96xf32> to vector<1x32xf32>
    %979 = arith.mulf %968, %978 : vector<1x32xf32>
    %980 = arith.addf %977, %979 : vector<1x32xf32>
    %981 = math.tanh %980 : vector<1x32xf32>
    %cst_274 = arith.constant 1.000000e+00 : f32
    %982 = vector.broadcast %cst_274 : f32 to vector<1x32xf32>
    %983 = arith.subf %982, %976 : vector<1x32xf32>
    %984 = arith.mulf %983, %981 : vector<1x32xf32>
    %985 = arith.mulf %976, %924 : vector<1x32xf32>
    %986 = arith.addf %984, %985 : vector<1x32xf32>
    %987 = vector.extract_strided_slice %960 {offsets = [0, 0], sizes = [1, 32], strides = [1, 1]} : vector<1x96xf32> to vector<1x32xf32>
    %988 = vector.extract_strided_slice %958 {offsets = [0, 0], sizes = [1, 32], strides = [1, 1]} : vector<1x96xf32> to vector<1x32xf32>
    %989 = arith.addf %987, %988 : vector<1x32xf32>
    %990 = arith.negf %989 : vector<1x32xf32>
    %991 = math.exp %990 : vector<1x32xf32>
    %cst_275 = arith.constant 1.000000e+00 : f32
    %992 = vector.broadcast %cst_275 : f32 to vector<1x32xf32>
    %993 = arith.addf %992, %991 : vector<1x32xf32>
    %994 = arith.divf %992, %993 : vector<1x32xf32>
    %995 = vector.extract_strided_slice %960 {offsets = [0, 32], sizes = [1, 32], strides = [1, 1]} : vector<1x96xf32> to vector<1x32xf32>
    %996 = vector.extract_strided_slice %958 {offsets = [0, 32], sizes = [1, 32], strides = [1, 1]} : vector<1x96xf32> to vector<1x32xf32>
    %997 = arith.addf %995, %996 : vector<1x32xf32>
    %998 = arith.negf %997 : vector<1x32xf32>
    %999 = math.exp %998 : vector<1x32xf32>
    %cst_276 = arith.constant 1.000000e+00 : f32
    %1000 = vector.broadcast %cst_276 : f32 to vector<1x32xf32>
    %1001 = arith.addf %1000, %999 : vector<1x32xf32>
    %1002 = arith.divf %1000, %1001 : vector<1x32xf32>
    %1003 = vector.extract_strided_slice %960 {offsets = [0, 64], sizes = [1, 32], strides = [1, 1]} : vector<1x96xf32> to vector<1x32xf32>
    %1004 = vector.extract_strided_slice %958 {offsets = [0, 64], sizes = [1, 32], strides = [1, 1]} : vector<1x96xf32> to vector<1x32xf32>
    %1005 = arith.mulf %994, %1004 : vector<1x32xf32>
    %1006 = arith.addf %1003, %1005 : vector<1x32xf32>
    %1007 = math.tanh %1006 : vector<1x32xf32>
    %cst_277 = arith.constant 1.000000e+00 : f32
    %1008 = vector.broadcast %cst_277 : f32 to vector<1x32xf32>
    %1009 = arith.subf %1008, %1002 : vector<1x32xf32>
    %1010 = arith.mulf %1009, %1007 : vector<1x32xf32>
    %1011 = arith.mulf %1002, %950 : vector<1x32xf32>
    %1012 = arith.addf %1010, %1011 : vector<1x32xf32>
    %c14_278 = arith.constant 14 : index
    %c0_279 = arith.constant 0 : index
    %1013 = vector.load %arg25[%c14_278, %c0_279] : memref<16x32xf32, #tpu.memory_space<vmem>>, vector<1x32xf32>
    tpu.vector_store %arg25[%c14_278, %c0_279], %986 {strides = array<i32>} : memref<16x32xf32, #tpu.memory_space<vmem>>, vector<1x32xf32>,
    %c1_280 = arith.constant 1 : index
    %c0_281 = arith.constant 0 : index
    %1014 = vector.load %arg26[%c1_280, %c0_281] : memref<16x32xf32, #tpu.memory_space<vmem>>, vector<1x32xf32>
    tpu.vector_store %arg26[%c1_280, %c0_281], %1012 {strides = array<i32>} : memref<16x32xf32, #tpu.memory_space<vmem>>, vector<1x32xf32>,
    %1015 = arith.truncf %986 : vector<1x32xf32> to vector<1x32xbf16>
    %cst_282 = arith.constant dense<0.000000e+00> : vector<1x96xf32>
    %1016 = tpu.matmul %1015, %80, %cst_282 {dimension_numbers = #tpu.dot_dimension_numbers<[1], [0], [0], [1], [0, 0, 1, 1], [], []>} : vector<1x32xbf16>, vector<32x96xbf16>, vector<1x96xf32> -> vector<1x96xf32>
    %1017 = arith.addf %1016, %82 : vector<1x96xf32>
    %1018 = arith.truncf %1012 : vector<1x32xf32> to vector<1x32xbf16>
    %cst_283 = arith.constant dense<0.000000e+00> : vector<1x96xf32>
    %1019 = tpu.matmul %1018, %81, %cst_283 {dimension_numbers = #tpu.dot_dimension_numbers<[1], [0], [0], [1], [0, 0, 1, 1], [], []>} : vector<1x32xbf16>, vector<32x96xbf16>, vector<1x96xf32> -> vector<1x96xf32>
    %1020 = arith.addf %1019, %83 : vector<1x96xf32>
    %c15_284 = arith.constant 15 : index
    %c0_285 = arith.constant 0 : index
    %1021 = vector.load %arg23[%c15_284, %c0_285] : memref<16x96xf32, #tpu.memory_space<vmem>>, vector<1x96xf32>
    %c0_286 = arith.constant 0 : index
    %c0_287 = arith.constant 0 : index
    %1022 = vector.load %arg24[%c0_286, %c0_287] : memref<16x96xf32, #tpu.memory_space<vmem>>, vector<1x96xf32>
    %1023 = vector.extract_strided_slice %1021 {offsets = [0, 0], sizes = [1, 32], strides = [1, 1]} : vector<1x96xf32> to vector<1x32xf32>
    %1024 = vector.extract_strided_slice %1017 {offsets = [0, 0], sizes = [1, 32], strides = [1, 1]} : vector<1x96xf32> to vector<1x32xf32>
    %1025 = arith.addf %1023, %1024 : vector<1x32xf32>
    %1026 = arith.negf %1025 : vector<1x32xf32>
    %1027 = math.exp %1026 : vector<1x32xf32>
    %cst_288 = arith.constant 1.000000e+00 : f32
    %1028 = vector.broadcast %cst_288 : f32 to vector<1x32xf32>
    %1029 = arith.addf %1028, %1027 : vector<1x32xf32>
    %1030 = arith.divf %1028, %1029 : vector<1x32xf32>
    %1031 = vector.extract_strided_slice %1021 {offsets = [0, 32], sizes = [1, 32], strides = [1, 1]} : vector<1x96xf32> to vector<1x32xf32>
    %1032 = vector.extract_strided_slice %1017 {offsets = [0, 32], sizes = [1, 32], strides = [1, 1]} : vector<1x96xf32> to vector<1x32xf32>
    %1033 = arith.addf %1031, %1032 : vector<1x32xf32>
    %1034 = arith.negf %1033 : vector<1x32xf32>
    %1035 = math.exp %1034 : vector<1x32xf32>
    %cst_289 = arith.constant 1.000000e+00 : f32
    %1036 = vector.broadcast %cst_289 : f32 to vector<1x32xf32>
    %1037 = arith.addf %1036, %1035 : vector<1x32xf32>
    %1038 = arith.divf %1036, %1037 : vector<1x32xf32>
    %1039 = vector.extract_strided_slice %1021 {offsets = [0, 64], sizes = [1, 32], strides = [1, 1]} : vector<1x96xf32> to vector<1x32xf32>
    %1040 = vector.extract_strided_slice %1017 {offsets = [0, 64], sizes = [1, 32], strides = [1, 1]} : vector<1x96xf32> to vector<1x32xf32>
    %1041 = arith.mulf %1030, %1040 : vector<1x32xf32>
    %1042 = arith.addf %1039, %1041 : vector<1x32xf32>
    %1043 = math.tanh %1042 : vector<1x32xf32>
    %cst_290 = arith.constant 1.000000e+00 : f32
    %1044 = vector.broadcast %cst_290 : f32 to vector<1x32xf32>
    %1045 = arith.subf %1044, %1038 : vector<1x32xf32>
    %1046 = arith.mulf %1045, %1043 : vector<1x32xf32>
    %1047 = arith.mulf %1038, %986 : vector<1x32xf32>
    %1048 = arith.addf %1046, %1047 : vector<1x32xf32>
    %1049 = vector.extract_strided_slice %1022 {offsets = [0, 0], sizes = [1, 32], strides = [1, 1]} : vector<1x96xf32> to vector<1x32xf32>
    %1050 = vector.extract_strided_slice %1020 {offsets = [0, 0], sizes = [1, 32], strides = [1, 1]} : vector<1x96xf32> to vector<1x32xf32>
    %1051 = arith.addf %1049, %1050 : vector<1x32xf32>
    %1052 = arith.negf %1051 : vector<1x32xf32>
    %1053 = math.exp %1052 : vector<1x32xf32>
    %cst_291 = arith.constant 1.000000e+00 : f32
    %1054 = vector.broadcast %cst_291 : f32 to vector<1x32xf32>
    %1055 = arith.addf %1054, %1053 : vector<1x32xf32>
    %1056 = arith.divf %1054, %1055 : vector<1x32xf32>
    %1057 = vector.extract_strided_slice %1022 {offsets = [0, 32], sizes = [1, 32], strides = [1, 1]} : vector<1x96xf32> to vector<1x32xf32>
    %1058 = vector.extract_strided_slice %1020 {offsets = [0, 32], sizes = [1, 32], strides = [1, 1]} : vector<1x96xf32> to vector<1x32xf32>
    %1059 = arith.addf %1057, %1058 : vector<1x32xf32>
    %1060 = arith.negf %1059 : vector<1x32xf32>
    %1061 = math.exp %1060 : vector<1x32xf32>
    %cst_292 = arith.constant 1.000000e+00 : f32
    %1062 = vector.broadcast %cst_292 : f32 to vector<1x32xf32>
    %1063 = arith.addf %1062, %1061 : vector<1x32xf32>
    %1064 = arith.divf %1062, %1063 : vector<1x32xf32>
    %1065 = vector.extract_strided_slice %1022 {offsets = [0, 64], sizes = [1, 32], strides = [1, 1]} : vector<1x96xf32> to vector<1x32xf32>
    %1066 = vector.extract_strided_slice %1020 {offsets = [0, 64], sizes = [1, 32], strides = [1, 1]} : vector<1x96xf32> to vector<1x32xf32>
    %1067 = arith.mulf %1056, %1066 : vector<1x32xf32>
    %1068 = arith.addf %1065, %1067 : vector<1x32xf32>
    %1069 = math.tanh %1068 : vector<1x32xf32>
    %cst_293 = arith.constant 1.000000e+00 : f32
    %1070 = vector.broadcast %cst_293 : f32 to vector<1x32xf32>
    %1071 = arith.subf %1070, %1064 : vector<1x32xf32>
    %1072 = arith.mulf %1071, %1069 : vector<1x32xf32>
    %1073 = arith.mulf %1064, %1012 : vector<1x32xf32>
    %1074 = arith.addf %1072, %1073 : vector<1x32xf32>
    %c15_294 = arith.constant 15 : index
    %c0_295 = arith.constant 0 : index
    %1075 = vector.load %arg25[%c15_294, %c0_295] : memref<16x32xf32, #tpu.memory_space<vmem>>, vector<1x32xf32>
    tpu.vector_store %arg25[%c15_294, %c0_295], %1048 {strides = array<i32>} : memref<16x32xf32, #tpu.memory_space<vmem>>, vector<1x32xf32>,
    %c0_296 = arith.constant 0 : index
    %c0_297 = arith.constant 0 : index
    %1076 = vector.load %arg26[%c0_296, %c0_297] : memref<16x32xf32, #tpu.memory_space<vmem>>, vector<1x32xf32>
    tpu.vector_store %arg26[%c0_296, %c0_297], %1074 {strides = array<i32>} : memref<16x32xf32, #tpu.memory_space<vmem>>, vector<1x32xf32>,
    %c0_298 = arith.constant 0 : index
    %c0_299 = arith.constant 0 : index
    %1077 = vector.load %arg25[%c0_298, %c0_299] : memref<16x32xf32, #tpu.memory_space<vmem>>, vector<16x32xf32>
    %1078 = arith.truncf %1077 : vector<16x32xf32> to vector<16x32xbf16>
    %c0_300 = arith.constant 0 : index
    %c0_301 = arith.constant 0 : index
    %1079 = vector.load %arg26[%c0_300, %c0_301] : memref<16x32xf32, #tpu.memory_space<vmem>>, vector<16x32xf32>
    %1080 = arith.truncf %1079 : vector<16x32xf32> to vector<16x32xbf16>
    %c0_302 = arith.constant 0 : index
    %c0_303 = arith.constant 0 : index
    %1081 = vector.load %arg19[%c0_302, %c0_303] : memref<32x4xbf16, #tpu.memory_space<vmem>>, vector<32x4xbf16>
    %cst_304 = arith.constant dense<0.000000e+00> : vector<16x4xf32>
    %1082 = tpu.matmul %1078, %1081, %cst_304 {dimension_numbers = #tpu.dot_dimension_numbers<[1], [0], [0], [1], [0, 0, 1, 1], [], []>} : vector<16x32xbf16>, vector<32x4xbf16>, vector<16x4xf32> -> vector<16x4xf32>
    %c0_305 = arith.constant 0 : index
    %c0_306 = arith.constant 0 : index
    %1083 = vector.load %arg20[%c0_305, %c0_306] : memref<32x4xbf16, #tpu.memory_space<vmem>>, vector<32x4xbf16>
    %cst_307 = arith.constant dense<0.000000e+00> : vector<16x4xf32>
    %1084 = tpu.matmul %1080, %1083, %cst_307 {dimension_numbers = #tpu.dot_dimension_numbers<[1], [0], [0], [1], [0, 0, 1, 1], [], []>} : vector<16x32xbf16>, vector<32x4xbf16>, vector<16x4xf32> -> vector<16x4xf32>
    %1085 = arith.addf %1082, %1084 : vector<16x4xf32>
    %c0_308 = arith.constant 0 : index
    %c0_309 = arith.constant 0 : index
    %1086 = vector.load %arg21[%c0_308, %c0_309] : memref<1x4xf32, #tpu.memory_space<vmem>>, vector<1x4xf32>
    %1087 = vector.broadcast %1086 : vector<1x4xf32> to vector<16x4xf32>
    %1088 = arith.addf %1085, %1087 : vector<16x4xf32>
    %c0_310 = arith.constant 0 : index
    %c0_311 = arith.constant 0 : index
    %1089 = vector.load %arg22[%c0_310, %c0_311] : memref<16x4xf32, #tpu.memory_space<vmem>>, vector<16x4xf32>
    tpu.vector_store %arg22[%c0_310, %c0_311], %1088 {strides = array<i32>} : memref<16x4xf32, #tpu.memory_space<vmem>>, vector<16x4xf32>,
    return
  }
  func.func @transform_0(%arg0: i32) -> (i32, i32) {
    %c0_i32 = arith.constant 0 : i32
    %c0_i32_0 = arith.constant 0 : i32
    %c0_i32_1 = arith.constant 0 : i32
    return %c0_i32, %c0_i32_0 : i32, i32
  }
  func.func @transform_1(%arg0: i32) -> (i32, i32) {
    %c0_i32 = arith.constant 0 : i32
    %c0_i32_0 = arith.constant 0 : i32
    %c0_i32_1 = arith.constant 0 : i32
    return %c0_i32, %c0_i32_0 : i32, i32
  }
  func.func @transform_2(%arg0: i32) -> (i32, i32) {
    %c0_i32 = arith.constant 0 : i32
    %c0_i32_0 = arith.constant 0 : i32
    %c0_i32_1 = arith.constant 0 : i32
    return %c0_i32, %c0_i32_0 : i32, i32
  }
  func.func @transform_3(%arg0: i32) -> (i32, i32) {
    %c0_i32 = arith.constant 0 : i32
    %c0_i32_0 = arith.constant 0 : i32
    %c0_i32_1 = arith.constant 0 : i32
    return %c0_i32, %c0_i32_0 : i32, i32
  }
  func.func @transform_4(%arg0: i32) -> (i32, i32) {
    %c0_i32 = arith.constant 0 : i32
    %c0_i32_0 = arith.constant 0 : i32
    %c0_i32_1 = arith.constant 0 : i32
    return %c0_i32, %c0_i32_0 : i32, i32
  }
  func.func @transform_5(%arg0: i32) -> (i32, i32) {
    %c0_i32 = arith.constant 0 : i32
    %c0_i32_0 = arith.constant 0 : i32
    %c0_i32_1 = arith.constant 0 : i32
    return %c0_i32, %c0_i32_0 : i32, i32
  }
  func.func @transform_6(%arg0: i32) -> (i32, i32) {
    %c0_i32 = arith.constant 0 : i32
    %c0_i32_0 = arith.constant 0 : i32
    %c0_i32_1 = arith.constant 0 : i32
    return %c0_i32, %c0_i32_0 : i32, i32
  }
  func.func @transform_7(%arg0: i32) -> (i32, i32) {
    %c0_i32 = arith.constant 0 : i32
    %c0_i32_0 = arith.constant 0 : i32
    %c0_i32_1 = arith.constant 0 : i32
    return %c0_i32, %c0_i32_0 : i32, i32
  }
  func.func @transform_8(%arg0: i32) -> (i32, i32) {
    %c0_i32 = arith.constant 0 : i32
    %c0_i32_0 = arith.constant 0 : i32
    %c0_i32_1 = arith.constant 0 : i32
    return %c0_i32, %c0_i32_0 : i32, i32
  }
  func.func @transform_9(%arg0: i32) -> (i32, i32) {
    %c0_i32 = arith.constant 0 : i32
    %c0_i32_0 = arith.constant 0 : i32
    %c0_i32_1 = arith.constant 0 : i32
    return %c0_i32, %c0_i32_0 : i32, i32
  }
  func.func @transform_10(%arg0: i32) -> (i32, i32) {
    %c0_i32 = arith.constant 0 : i32
    %c0_i32_0 = arith.constant 0 : i32
    %c0_i32_1 = arith.constant 0 : i32
    return %c0_i32, %c0_i32_0 : i32, i32
  }
  func.func @transform_11(%arg0: i32) -> (i32, i32) {
    %c0_i32 = arith.constant 0 : i32
    %c0_i32_0 = arith.constant 0 : i32
    %c0_i32_1 = arith.constant 0 : i32
    return %c0_i32, %c0_i32_0 : i32, i32
  }
  func.func @transform_12(%arg0: i32) -> (i32, i32) {
    %c0_i32 = arith.constant 0 : i32
    %c0_i32_0 = arith.constant 0 : i32
    %c0_i32_1 = arith.constant 0 : i32
    return %c0_i32, %c0_i32_0 : i32, i32
  }
  func.func @transform_13(%arg0: i32) -> (i32, i32) {
    %c0_i32 = arith.constant 0 : i32
    %c0_i32_0 = arith.constant 0 : i32
    %c0_i32_1 = arith.constant 0 : i32
    return %c0_i32, %c0_i32_0 : i32, i32
  }
  func.func @transform_14(%arg0: i32) -> (i32, i32) {
    %c0_i32 = arith.constant 0 : i32
    %c0_i32_0 = arith.constant 0 : i32
    %c0_i32_1 = arith.constant 0 : i32
    return %c0_i32, %c0_i32_0 : i32, i32
  }
  func.func @transform_15(%arg0: i32) -> (i32, i32) {
    %c0_i32 = arith.constant 0 : i32
    %c0_i32_0 = arith.constant 0 : i32
    %c0_i32_1 = arith.constant 0 : i32
    return %c0_i32, %c0_i32_0 : i32, i32
  }
  func.func @transform_16(%arg0: i32) -> (i32, i32) {
    %c0_i32 = arith.constant 0 : i32
    %c0_i32_0 = arith.constant 0 : i32
    %c0_i32_1 = arith.constant 0 : i32
    return %c0_i32, %c0_i32_0 : i32, i32
  }
  func.func @transform_17(%arg0: i32) -> (i32, i32) {
    %c0_i32 = arith.constant 0 : i32
    %c0_i32_0 = arith.constant 0 : i32
    %c0_i32_1 = arith.constant 0 : i32
    return %c0_i32, %c0_i32_0 : i32, i32
  }
  func.func @transform_18(%arg0: i32) -> (i32, i32) {
    %c0_i32 = arith.constant 0 : i32
    %c0_i32_0 = arith.constant 0 : i32
    %c0_i32_1 = arith.constant 0 : i32
    return %c0_i32, %c0_i32_0 : i32, i32
  }
  func.func @transform_19(%arg0: i32) -> (i32, i32) {
    %c0_i32 = arith.constant 0 : i32
    %c0_i32_0 = arith.constant 0 : i32
    %c0_i32_1 = arith.constant 0 : i32
    return %c0_i32, %c0_i32_0 : i32, i32
  }
  func.func @transform_20(%arg0: i32) -> (i32, i32) {
    %c0_i32 = arith.constant 0 : i32
    %c0_i32_0 = arith.constant 0 : i32
    %c0_i32_1 = arith.constant 0 : i32
    return %c0_i32, %c0_i32_0 : i32, i32
  }
  func.func @transform_21(%arg0: i32) -> (i32, i32) {
    %c0_i32 = arith.constant 0 : i32
    %c0_i32_0 = arith.constant 0 : i32
    %c0_i32_1 = arith.constant 0 : i32
    return %c0_i32, %c0_i32_0 : i32, i32
  }
}

</mosaic_0001>

<llo_original>
// kernel: forward.1
$region0: #{forward.1}
  #allocation0 [shape = 'u32[]', space=smem, size = 0x4, offset = 0x4, fixed_abs, tag = 'smem constant byte address 0x4 - core index']
  #allocation1 [shape = 'u32[144,128]{1,0:T(1,128)}', space=vmem, size = 0x12000, scoped, tag = 'internal scratch']
  #allocation2 [shape = 'f32[16,96]{1,0:T(8,128)}', space=vmem, size = 0x2000, scoped, tag = 'scratch operand']
  #allocation3 [shape = 'f32[16,96]{1,0:T(8,128)}', space=vmem, size = 0x2000, scoped, tag = 'scratch operand']
  #allocation4 [shape = 'f32[16,32]{1,0:T(8,128)}', space=vmem, size = 0x2000, scoped, tag = 'scratch operand']
  #allocation5 [shape = 'f32[16,32]{1,0:T(8,128)}', space=vmem, size = 0x2000, scoped, tag = 'scratch operand']
  %s0 = inlined_call_operand.hbm [shape: bf16[16,16], index: 0, kind: input, shape index: {}]
  %s1 = inlined_call_operand.hbm [shape: bf16[16,4], index: 1, kind: input, shape index: {}]
  %s2 = inlined_call_operand.hbm [shape: bf16[4,32], index: 2, kind: input, shape index: {}]
  %s3 = inlined_call_operand.hbm [shape: f32[1,32], index: 3, kind: input, shape index: {}]
  %s4 = inlined_call_operand.hbm [shape: f32[1,32], index: 4, kind: input, shape index: {}]
  %s5 = inlined_call_operand.hbm [shape: f32[1,32], index: 5, kind: input, shape index: {}]
  %s6 = inlined_call_operand.hbm [shape: bf16[32,32], index: 6, kind: input, shape index: {}]
  %s7 = inlined_call_operand.hbm [shape: f32[1,32], index: 7, kind: input, shape index: {}]
  %s8 = inlined_call_operand.hbm [shape: f32[1,32], index: 8, kind: input, shape index: {}]
  %s9 = inlined_call_operand.hbm [shape: f32[1,32], index: 9, kind: input, shape index: {}]
  %s10 = inlined_call_operand.hbm [shape: bf16[32,96], index: 10, kind: input, shape index: {}]
  %s11 = inlined_call_operand.hbm [shape: bf16[32,96], index: 11, kind: input, shape index: {}]
  %s12 = inlined_call_operand.hbm [shape: f32[1,96], index: 12, kind: input, shape index: {}]
  %s13 = inlined_call_operand.hbm [shape: f32[1,96], index: 13, kind: input, shape index: {}]
  %s14 = inlined_call_operand.hbm [shape: bf16[32,96], index: 14, kind: input, shape index: {}]
  %s15 = inlined_call_operand.hbm [shape: bf16[32,96], index: 15, kind: input, shape index: {}]
  %s16 = inlined_call_operand.hbm [shape: f32[1,96], index: 16, kind: input, shape index: {}]
  %s17 = inlined_call_operand.hbm [shape: f32[1,96], index: 17, kind: input, shape index: {}]
  %s18 = inlined_call_operand.hbm [shape: bf16[32,4], index: 18, kind: input, shape index: {}]
  %s19 = inlined_call_operand.hbm [shape: bf16[32,4], index: 19, kind: input, shape index: {}]
  %s20 = inlined_call_operand.hbm [shape: f32[1,4], index: 20, kind: input, shape index: {}]
  %s21 = inlined_call_operand.hbm [shape: f32[16,4], index: 21, kind: output, shape index: {}]
  %s22 = sld [smem:[#allocation0]]
  $region178: #{forward.1} parent=0
    _
  %s24 = ssub.s32 1, %s22
  %s25 = scalar_select 0, %s24, %s22
  $region1: #{forward.1} parent=0
    #allocation6 [shape = 'u8[4096]{0}', space=vmem, size = 0x1000, scoped, tag = 'input window, operand 0, single buffered']
    #allocation7 [shape = 's32[1]{0}', space=sflag, size = 0x4, scoped, tag = 'scoped memory for forward.1']
    #allocation8 [shape = 's32[1]{0}', space=sflag, size = 0x4, scoped, tag = 'scoped memory for forward.1']
    #allocation9 [shape = 'u8[4096]{0}', space=vmem, size = 0x1000, scoped, tag = 'input window, operand 1, single buffered']
    #allocation10 [shape = 's32[1]{0}', space=sflag, size = 0x4, scoped, tag = 'scoped memory for forward.1']
    #allocation11 [shape = 'u8[1024]{0}', space=vmem, size = 0x400, scoped, tag = 'input window, operand 2, single buffered']
    #allocation12 [shape = 'u8[512]{0}', space=vmem, size = 0x400, scoped, tag = 'input window, operand 3, single buffered']
    #allocation13 [shape = 's32[1]{0}', space=sflag, size = 0x4, scoped, tag = 'scoped memory for forward.1']
    #allocation14 [shape = 'u8[512]{0}', space=vmem, size = 0x400, scoped, tag = 'input window, operand 4, single buffered']
    #allocation15 [shape = 'u8[512]{0}', space=vmem, size = 0x400, scoped, tag = 'input window, operand 5, single buffered']
    #allocation16 [shape = 's32[1]{0}', space=sflag, size = 0x4, scoped, tag = 'scoped memory for forward.1']
    #allocation17 [shape = 'u8[8192]{0}', space=vmem, size = 0x2000, scoped, tag = 'input window, operand 6, single buffered']
    #allocation18 [shape = 'u8[512]{0}', space=vmem, size = 0x400, scoped, tag = 'input window, operand 7, single buffered']
    #allocation19 [shape = 's32[1]{0}', space=sflag, size = 0x4, scoped, tag = 'scoped memory for forward.1']
    #allocation20 [shape = 'u8[512]{0}', space=vmem, size = 0x400, scoped, tag = 'input window, operand 8, single buffered']
    #allocation21 [shape = 'u8[512]{0}', space=vmem, size = 0x400, scoped, tag = 'input window, operand 9, single buffered']
    #allocation22 [shape = 's32[1]{0}', space=sflag, size = 0x4, scoped, tag = 'scoped memory for forward.1']
    #allocation23 [shape = 'u8[8192]{0}', space=vmem, size = 0x2000, scoped, tag = 'input window, operand 10, single buffered']
    #allocation24 [shape = 'u8[8192]{0}', space=vmem, size = 0x2000, scoped, tag = 'input window, operand 11, single buffered']
    #allocation25 [shape = 's32[1]{0}', space=sflag, size = 0x4, scoped, tag = 'scoped memory for forward.1']
    #allocation26 [shape = 'u8[512]{0}', space=vmem, size = 0x400, scoped, tag = 'input window, operand 12, single buffered']
    #allocation27 [shape = 'u8[512]{0}', space=vmem, size = 0x400, scoped, tag = 'input window, operand 13, single buffered']
    #allocation28 [shape = 's32[1]{0}', space=sflag, size = 0x4, scoped, tag = 'scoped memory for forward.1']
    #allocation29 [shape = 'u8[8192]{0}', space=vmem, size = 0x2000, scoped, tag = 'input window, operand 14, single buffered']
    #allocation30 [shape = 'u8[8192]{0}', space=vmem, size = 0x2000, scoped, tag = 'input window, operand 15, single buffered']
    #allocation31 [shape = 's32[1]{0}', space=sflag, size = 0x4, scoped, tag = 'scoped memory for forward.1']
    #allocation32 [shape = 'u8[512]{0}', space=vmem, size = 0x400, scoped, tag = 'input window, operand 16, single buffered']
    #allocation33 [shape = 'u8[512]{0}', space=vmem, size = 0x400, scoped, tag = 'input window, operand 17, single buffered']
    #allocation34 [shape = 's32[1]{0}', space=sflag, size = 0x4, scoped, tag = 'scoped memory for forward.1']
    #allocation35 [shape = 'u8[8192]{0}', space=vmem, size = 0x2000, scoped, tag = 'input window, operand 18, single buffered']
    #allocation36 [shape = 'u8[8192]{0}', space=vmem, size = 0x2000, scoped, tag = 'input window, operand 19, single buffered']
    #allocation37 [shape = 's32[1]{0}', space=sflag, size = 0x4, scoped, tag = 'scoped memory for forward.1']
    #allocation38 [shape = 'u8[512]{0}', space=vmem, size = 0x400, scoped, tag = 'input window, operand 20, single buffered']
    #allocation39 [shape = 'u8[8192]{0}', space=vmem, size = 0x2000, scoped, tag = 'output window, operand 0, single buffered']
    %26 = vsyncpa [#allocation7], 0
    %27 = vsyncpa [#allocation10], 0
    %28 = vsyncpa [#allocation13], 0
    %29 = vsyncpa [#allocation16], 0
    %30 = vsyncpa [#allocation19], 0
    %31 = vsyncpa [#allocation22], 0
    %32 = vsyncpa [#allocation25], 0
    %33 = vsyncpa [#allocation28], 0
    %34 = vsyncpa [#allocation31], 0
    %35 = vsyncpa [#allocation34], 0
    %36 = vsyncpa [#allocation37], 0
    %37 = vsyncpa [#allocation8], 0
    // Predicated region
    $region2: #{forward.1} parent=1 // pred_check
      _
    $region3: #{forward.1} parent=1 // pred_check_branch
      %39 = sbr.rel (0) target = $region5
    $region4: #{forward.1} parent=1 // pred_region
      %s41 = ssub.s32 128, 128
      %42 = vsyncadd [#allocation7], %s41
      %s43 = sshll.u32 [#allocation6], 4
      %s44 = int_to_ptr.vmem [resolvable:$true] %s43
      %49 = dma.hbm_to_vmem [thread:$0]  %s0, 128, %s44, [#allocation7], 64, 64, 4
    $region5: #{forward.1} parent=1 // pred_fallthru
      _
    // Predicated region
    $region6: #{forward.1} parent=1 // pred_check
      _
    $region7: #{forward.1} parent=1 // pred_check_branch
      %51 = sbr.rel (0) target = $region9
    $region8: #{forward.1} parent=1 // pred_region
      %s53 = ssub.s32 128, 128
      %54 = vsyncadd [#allocation10], %s53
      %s55 = sshll.u32 [#allocation9], 4
      %s56 = int_to_ptr.vmem [resolvable:$true] %s55
      %61 = dma.hbm_to_vmem [thread:$0]  %s1, 128, %s56, [#allocation10], 64, 64, 4
    $region9: #{forward.1} parent=1 // pred_fallthru
      _
    // Predicated region
    $region10: #{forward.1} parent=1 // pred_check
      _
    $region11: #{forward.1} parent=1 // pred_check_branch
      %63 = sbr.rel (0) target = $region13
    $region12: #{forward.1} parent=1 // pred_region
      %s65 = ssub.s32 32, 32
      %66 = vsyncadd [#allocation10], %s65
      %s68 = sshll.u32 [#allocation11], 4
      %s69 = int_to_ptr.vmem [resolvable:$true] %s68
      %71 = dma.hbm_to_vmem [thread:$0]  %s2, 32, %s69, [#allocation10]
    $region13: #{forward.1} parent=1 // pred_fallthru
      _
    // Predicated region
    $region14: #{forward.1} parent=1 // pred_check
      _
    $region15: #{forward.1} parent=1 // pred_check_branch
      %73 = sbr.rel (0) target = $region17
    $region16: #{forward.1} parent=1 // pred_region
      %s75 = ssub.s32 16, 16
      %76 = vsyncadd [#allocation13], %s75
      %s78 = sshll.u32 [#allocation12], 4
      %s79 = int_to_ptr.vmem [resolvable:$true] %s78
      %81 = dma.hbm_to_vmem [thread:$0]  %s3, 16, %s79, [#allocation13]
    $region17: #{forward.1} parent=1 // pred_fallthru
      _
    // Predicated region
    $region18: #{forward.1} parent=1 // pred_check
      _
    $region19: #{forward.1} parent=1 // pred_check_branch
      %83 = sbr.rel (0) target = $region21
    $region20: #{forward.1} parent=1 // pred_region
      %s85 = ssub.s32 16, 16
      %86 = vsyncadd [#allocation13], %s85
      %s88 = sshll.u32 [#allocation14], 4
      %s89 = int_to_ptr.vmem [resolvable:$true] %s88
      %91 = dma.hbm_to_vmem [thread:$0]  %s4, 16, %s89, [#allocation13]
    $region21: #{forward.1} parent=1 // pred_fallthru
      _
    // Predicated region
    $region22: #{forward.1} parent=1 // pred_check
      _
    $region23: #{forward.1} parent=1 // pred_check_branch
      %93 = sbr.rel (0) target = $region25
    $region24: #{forward.1} parent=1 // pred_region
      %s95 = ssub.s32 16, 16
      %96 = vsyncadd [#allocation16], %s95
      %s98 = sshll.u32 [#allocation15], 4
      %s99 = int_to_ptr.vmem [resolvable:$true] %s98
      %101 = dma.hbm_to_vmem [thread:$0]  %s5, 16, %s99, [#allocation16]
    $region25: #{forward.1} parent=1 // pred_fallthru
      _
    // Predicated region
    $region26: #{forward.1} parent=1 // pred_check
      _
    $region27: #{forward.1} parent=1 // pred_check_branch
      %103 = sbr.rel (0) target = $region29
    $region28: #{forward.1} parent=1 // pred_region
      %s105 = ssub.s32 256, 256
      %106 = vsyncadd [#allocation16], %s105
      %s107 = sshll.u32 [#allocation17], 4
      %s108 = int_to_ptr.vmem [resolvable:$true] %s107
      %113 = dma.hbm_to_vmem [thread:$0]  %s6, 256, %s108, [#allocation16], 64, 64, 4
    $region29: #{forward.1} parent=1 // pred_fallthru
      _
    // Predicated region
    $region30: #{forward.1} parent=1 // pred_check
      _
    $region31: #{forward.1} parent=1 // pred_check_branch
      %115 = sbr.rel (0) target = $region33
    $region32: #{forward.1} parent=1 // pred_region
      %s117 = ssub.s32 16, 16
      %118 = vsyncadd [#allocation19], %s117
      %s120 = sshll.u32 [#allocation18], 4
      %s121 = int_to_ptr.vmem [resolvable:$true] %s120
      %123 = dma.hbm_to_vmem [thread:$0]  %s7, 16, %s121, [#allocation19]
    $region33: #{forward.1} parent=1 // pred_fallthru
      _
    // Predicated region
    $region34: #{forward.1} parent=1 // pred_check
      _
    $region35: #{forward.1} parent=1 // pred_check_branch
      %125 = sbr.rel (0) target = $region37
    $region36: #{forward.1} parent=1 // pred_region
      %s127 = ssub.s32 16, 16
      %128 = vsyncadd [#allocation19], %s127
      %s130 = sshll.u32 [#allocation20], 4
      %s131 = int_to_ptr.vmem [resolvable:$true] %s130
      %133 = dma.hbm_to_vmem [thread:$0]  %s8, 16, %s131, [#allocation19]
    $region37: #{forward.1} parent=1 // pred_fallthru
      _
    // Predicated region
    $region38: #{forward.1} parent=1 // pred_check
      _
    $region39: #{forward.1} parent=1 // pred_check_branch
      %135 = sbr.rel (0) target = $region41
    $region40: #{forward.1} parent=1 // pred_region
      %s137 = ssub.s32 16, 16
      %138 = vsyncadd [#allocation22], %s137
      %s140 = sshll.u32 [#allocation21], 4
      %s141 = int_to_ptr.vmem [resolvable:$true] %s140
      %143 = dma.hbm_to_vmem [thread:$0]  %s9, 16, %s141, [#allocation22]
    $region41: #{forward.1} parent=1 // pred_fallthru
      _
    // Predicated region
    $region42: #{forward.1} parent=1 // pred_check
      _
    $region43: #{forward.1} parent=1 // pred_check_branch
      %145 = sbr.rel (0) target = $region45
    $region44: #{forward.1} parent=1 // pred_region
      %s147 = ssub.s32 256, 256
      %148 = vsyncadd [#allocation22], %s147
      %s149 = sshll.u32 [#allocation23], 4
      %s150 = int_to_ptr.vmem [resolvable:$true] %s149
      %155 = dma.hbm_to_vmem [thread:$0]  %s10, 256, %s150, [#allocation22], 64, 64, 4
    $region45: #{forward.1} parent=1 // pred_fallthru
      _
    // Predicated region
    $region46: #{forward.1} parent=1 // pred_check
      _
    $region47: #{forward.1} parent=1 // pred_check_branch
      %157 = sbr.rel (0) target = $region49
    $region48: #{forward.1} parent=1 // pred_region
      %s159 = ssub.s32 256, 256
      %160 = vsyncadd [#allocation25], %s159
      %s161 = sshll.u32 [#allocation24], 4
      %s162 = int_to_ptr.vmem [resolvable:$true] %s161
      %167 = dma.hbm_to_vmem [thread:$0]  %s11, 256, %s162, [#allocation25], 64, 64, 4
    $region49: #{forward.1} parent=1 // pred_fallthru
      _
    // Predicated region
    $region50: #{forward.1} parent=1 // pred_check
      _
    $region51: #{forward.1} parent=1 // pred_check_branch
      %169 = sbr.rel (0) target = $region53
    $region52: #{forward.1} parent=1 // pred_region
      %s171 = ssub.s32 16, 16
      %172 = vsyncadd [#allocation25], %s171
      %s174 = sshll.u32 [#allocation26], 4
      %s175 = int_to_ptr.vmem [resolvable:$true] %s174
      %177 = dma.hbm_to_vmem [thread:$0]  %s12, 16, %s175, [#allocation25]
    $region53: #{forward.1} parent=1 // pred_fallthru
      _
    // Predicated region
    $region54: #{forward.1} parent=1 // pred_check
      _
    $region55: #{forward.1} parent=1 // pred_check_branch
      %179 = sbr.rel (0) target = $region57
    $region56: #{forward.1} parent=1 // pred_region
      %s181 = ssub.s32 16, 16
      %182 = vsyncadd [#allocation28], %s181
      %s184 = sshll.u32 [#allocation27], 4
      %s185 = int_to_ptr.vmem [resolvable:$true] %s184
      %187 = dma.hbm_to_vmem [thread:$0]  %s13, 16, %s185, [#allocation28]
    $region57: #{forward.1} parent=1 // pred_fallthru
      _
    // Predicated region
    $region58: #{forward.1} parent=1 // pred_check
      _
    $region59: #{forward.1} parent=1 // pred_check_branch
      %189 = sbr.rel (0) target = $region61
    $region60: #{forward.1} parent=1 // pred_region
      %s191 = ssub.s32 256, 256
      %192 = vsyncadd [#allocation28], %s191
      %s193 = sshll.u32 [#allocation29], 4
      %s194 = int_to_ptr.vmem [resolvable:$true] %s193
      %199 = dma.hbm_to_vmem [thread:$0]  %s14, 256, %s194, [#allocation28], 64, 64, 4
    $region61: #{forward.1} parent=1 // pred_fallthru
      _
    // Predicated region
    $region62: #{forward.1} parent=1 // pred_check
      _
    $region63: #{forward.1} parent=1 // pred_check_branch
      %201 = sbr.rel (0) target = $region65
    $region64: #{forward.1} parent=1 // pred_region
      %s203 = ssub.s32 256, 256
      %204 = vsyncadd [#allocation31], %s203
      %s205 = sshll.u32 [#allocation30], 4
      %s206 = int_to_ptr.vmem [resolvable:$true] %s205
      %211 = dma.hbm_to_vmem [thread:$0]  %s15, 256, %s206, [#allocation31], 64, 64, 4
    $region65: #{forward.1} parent=1 // pred_fallthru
      _
    // Predicated region
    $region66: #{forward.1} parent=1 // pred_check
      _
    $region67: #{forward.1} parent=1 // pred_check_branch
      %213 = sbr.rel (0) target = $region69
    $region68: #{forward.1} parent=1 // pred_region
      %s215 = ssub.s32 16, 16
      %216 = vsyncadd [#allocation31], %s215
      %s218 = sshll.u32 [#allocation32], 4
      %s219 = int_to_ptr.vmem [resolvable:$true] %s218
      %221 = dma.hbm_to_vmem [thread:$0]  %s16, 16, %s219, [#allocation31]
    $region69: #{forward.1} parent=1 // pred_fallthru
      _
    // Predicated region
    $region70: #{forward.1} parent=1 // pred_check
      _
    $region71: #{forward.1} parent=1 // pred_check_branch
      %223 = sbr.rel (0) target = $region73
    $region72: #{forward.1} parent=1 // pred_region
      %s225 = ssub.s32 16, 16
      %226 = vsyncadd [#allocation34], %s225
      %s228 = sshll.u32 [#allocation33], 4
      %s229 = int_to_ptr.vmem [resolvable:$true] %s228
      %231 = dma.hbm_to_vmem [thread:$0]  %s17, 16, %s229, [#allocation34]
    $region73: #{forward.1} parent=1 // pred_fallthru
      _
    // Predicated region
    $region74: #{forward.1} parent=1 // pred_check
      _
    $region75: #{forward.1} parent=1 // pred_check_branch
      %233 = sbr.rel (0) target = $region77
    $region76: #{forward.1} parent=1 // pred_region
      %s235 = ssub.s32 256, 256
      %236 = vsyncadd [#allocation34], %s235
      %s237 = sshll.u32 [#allocation35], 4
      %s238 = int_to_ptr.vmem [resolvable:$true] %s237
      %243 = dma.hbm_to_vmem [thread:$0]  %s18, 256, %s238, [#allocation34], 64, 64, 4
    $region77: #{forward.1} parent=1 // pred_fallthru
      _
    // Predicated region
    $region78: #{forward.1} parent=1 // pred_check
      _
    $region79: #{forward.1} parent=1 // pred_check_branch
      %245 = sbr.rel (0) target = $region81
    $region80: #{forward.1} parent=1 // pred_region
      %s247 = ssub.s32 256, 256
      %248 = vsyncadd [#allocation37], %s247
      %s249 = sshll.u32 [#allocation36], 4
      %s250 = int_to_ptr.vmem [resolvable:$true] %s249
      %255 = dma.hbm_to_vmem [thread:$0]  %s19, 256, %s250, [#allocation37], 64, 64, 4
    $region81: #{forward.1} parent=1 // pred_fallthru
      _
    // Predicated region
    $region82: #{forward.1} parent=1 // pred_check
      _
    $region83: #{forward.1} parent=1 // pred_check_branch
      %257 = sbr.rel (0) target = $region85
    $region84: #{forward.1} parent=1 // pred_region
      %s259 = ssub.s32 16, 16
      %260 = vsyncadd [#allocation37], %s259
      %s262 = sshll.u32 [#allocation38], 4
      %s263 = int_to_ptr.vmem [resolvable:$true] %s262
      %265 = dma.hbm_to_vmem [thread:$0]  %s20, 16, %s263, [#allocation37]
    $region85: #{forward.1} parent=1 // pred_fallthru
      _
    // Predicated region
    $region86: #{forward.1} parent=1 // pred_check
      _
    $region87: #{forward.1} parent=1 // pred_check_branch
      %267 = sbr.rel (0) target = $region89
    $region88: #{forward.1} parent=1 // pred_region
      %268 = dma.done [#allocation7], 128
    $region89: #{forward.1} parent=1 // pred_fallthru
      _
    // Predicated region
    $region90: #{forward.1} parent=1 // pred_check
      _
    $region91: #{forward.1} parent=1 // pred_check_branch
      %270 = sbr.rel (0) target = $region93
    $region92: #{forward.1} parent=1 // pred_region
      %271 = dma.done [#allocation10], 128
    $region93: #{forward.1} parent=1 // pred_fallthru
      _
    // Predicated region
    $region94: #{forward.1} parent=1 // pred_check
      _
    $region95: #{forward.1} parent=1 // pred_check_branch
      %273 = sbr.rel (0) target = $region97
    $region96: #{forward.1} parent=1 // pred_region
      %274 = dma.done [#allocation10], 32
    $region97: #{forward.1} parent=1 // pred_fallthru
      _
    // Predicated region
    $region98: #{forward.1} parent=1 // pred_check
      _
    $region99: #{forward.1} parent=1 // pred_check_branch
      %276 = sbr.rel (0) target = $region101
    $region100: #{forward.1} parent=1 // pred_region
      %277 = dma.done [#allocation13], 16
    $region101: #{forward.1} parent=1 // pred_fallthru
      _
    // Predicated region
    $region102: #{forward.1} parent=1 // pred_check
      _
    $region103: #{forward.1} parent=1 // pred_check_branch
      %279 = sbr.rel (0) target = $region105
    $region104: #{forward.1} parent=1 // pred_region
      %280 = dma.done [#allocation13], 16
    $region105: #{forward.1} parent=1 // pred_fallthru
      _
    // Predicated region
    $region106: #{forward.1} parent=1 // pred_check
      _
    $region107: #{forward.1} parent=1 // pred_check_branch
      %282 = sbr.rel (0) target = $region109
    $region108: #{forward.1} parent=1 // pred_region
      %283 = dma.done [#allocation16], 16
    $region109: #{forward.1} parent=1 // pred_fallthru
      _
    // Predicated region
    $region110: #{forward.1} parent=1 // pred_check
      _
    $region111: #{forward.1} parent=1 // pred_check_branch
      %285 = sbr.rel (0) target = $region113
    $region112: #{forward.1} parent=1 // pred_region
      %286 = dma.done [#allocation16], 256
    $region113: #{forward.1} parent=1 // pred_fallthru
      _
    // Predicated region
    $region114: #{forward.1} parent=1 // pred_check
      _
    $region115: #{forward.1} parent=1 // pred_check_branch
      %288 = sbr.rel (0) target = $region117
    $region116: #{forward.1} parent=1 // pred_region
      %289 = dma.done [#allocation19], 16
    $region117: #{forward.1} parent=1 // pred_fallthru
      _
    // Predicated region
    $region118: #{forward.1} parent=1 // pred_check
      _
    $region119: #{forward.1} parent=1 // pred_check_branch
      %291 = sbr.rel (0) target = $region121
    $region120: #{forward.1} parent=1 // pred_region
      %292 = dma.done [#allocation19], 16
    $region121: #{forward.1} parent=1 // pred_fallthru
      _
    // Predicated region
    $region122: #{forward.1} parent=1 // pred_check
      _
    $region123: #{forward.1} parent=1 // pred_check_branch
      %294 = sbr.rel (0) target = $region125
    $region124: #{forward.1} parent=1 // pred_region
      %295 = dma.done [#allocation22], 16
    $region125: #{forward.1} parent=1 // pred_fallthru
      _
    // Predicated region
    $region126: #{forward.1} parent=1 // pred_check
      _
    $region127: #{forward.1} parent=1 // pred_check_branch
      %297 = sbr.rel (0) target = $region129
    $region128: #{forward.1} parent=1 // pred_region
      %298 = dma.done [#allocation22], 256
    $region129: #{forward.1} parent=1 // pred_fallthru
      _
    // Predicated region
    $region130: #{forward.1} parent=1 // pred_check
      _
    $region131: #{forward.1} parent=1 // pred_check_branch
      %300 = sbr.rel (0) target = $region133
    $region132: #{forward.1} parent=1 // pred_region
      %301 = dma.done [#allocation25], 256
    $region133: #{forward.1} parent=1 // pred_fallthru
      _
    // Predicated region
    $region134: #{forward.1} parent=1 // pred_check
      _
    $region135: #{forward.1} parent=1 // pred_check_branch
      %303 = sbr.rel (0) target = $region137
    $region136: #{forward.1} parent=1 // pred_region
      %304 = dma.done [#allocation25], 16
    $region137: #{forward.1} parent=1 // pred_fallthru
      _
    // Predicated region
    $region138: #{forward.1} parent=1 // pred_check
      _
    $region139: #{forward.1} parent=1 // pred_check_branch
      %306 = sbr.rel (0) target = $region141
    $region140: #{forward.1} parent=1 // pred_region
      %307 = dma.done [#allocation28], 16
    $region141: #{forward.1} parent=1 // pred_fallthru
      _
    // Predicated region
    $region142: #{forward.1} parent=1 // pred_check
      _
    $region143: #{forward.1} parent=1 // pred_check_branch
      %309 = sbr.rel (0) target = $region145
    $region144: #{forward.1} parent=1 // pred_region
      %310 = dma.done [#allocation28], 256
    $region145: #{forward.1} parent=1 // pred_fallthru
      _
    // Predicated region
    $region146: #{forward.1} parent=1 // pred_check
      _
    $region147: #{forward.1} parent=1 // pred_check_branch
      %312 = sbr.rel (0) target = $region149
    $region148: #{forward.1} parent=1 // pred_region
      %313 = dma.done [#allocation31], 256
    $region149: #{forward.1} parent=1 // pred_fallthru
      _
    // Predicated region
    $region150: #{forward.1} parent=1 // pred_check
      _
    $region151: #{forward.1} parent=1 // pred_check_branch
      %315 = sbr.rel (0) target = $region153
    $region152: #{forward.1} parent=1 // pred_region
      %316 = dma.done [#allocation31], 16
    $region153: #{forward.1} parent=1 // pred_fallthru
      _
    // Predicated region
    $region154: #{forward.1} parent=1 // pred_check
      _
    $region155: #{forward.1} parent=1 // pred_check_branch
      %318 = sbr.rel (0) target = $region157
    $region156: #{forward.1} parent=1 // pred_region
      %319 = dma.done [#allocation34], 16
    $region157: #{forward.1} parent=1 // pred_fallthru
      _
    // Predicated region
    $region158: #{forward.1} parent=1 // pred_check
      _
    $region159: #{forward.1} parent=1 // pred_check_branch
      %321 = sbr.rel (0) target = $region161
    $region160: #{forward.1} parent=1 // pred_region
      %322 = dma.done [#allocation34], 256
    $region161: #{forward.1} parent=1 // pred_fallthru
      _
    // Predicated region
    $region162: #{forward.1} parent=1 // pred_check
      _
    $region163: #{forward.1} parent=1 // pred_check_branch
      %324 = sbr.rel (0) target = $region165
    $region164: #{forward.1} parent=1 // pred_region
      %325 = dma.done [#allocation37], 256
    $region165: #{forward.1} parent=1 // pred_fallthru
      _
    // Predicated region
    $region166: #{forward.1} parent=1 // pred_check
      _
    $region167: #{forward.1} parent=1 // pred_check_branch
      %327 = sbr.rel (0) target = $region169
    $region168: #{forward.1} parent=1 // pred_region
      %328 = dma.done [#allocation37], 16
    $region169: #{forward.1} parent=1 // pred_fallthru
      _
    %v330 = vld [vmem:[#allocation6] sm:$0xf]
    %v331 = vld [vmem:[#allocation6 + $0x4] sm:$0xf]
    %v332 = vld [vmem:[#allocation9] sm:$0xf]
    %v333 = vld [vmem:[#allocation9 + $0x4] sm:$0xf]
    %v334 = vld [vmem:[#allocation11] sm:$0x3]
    %v335 = vld [vmem:[#allocation12] sm:$0x1]
    %v336 = vld [vmem:[#allocation14] sm:$0x1]
    %v337 = vld [vmem:[#allocation15] sm:$0x1]
    %v340 = vunpack.c.l.b16 %v330
    %v341 = vunpack.c.l.b16 %v331
    %v342 = vpack.c.b16 %v341, %v340
    %v345 = vunpack.c.l.b16 %v332
    %v346 = vunpack.c.l.b16 %v333
    %v347 = vpack.c.b16 %v346, %v345
    %vm349 = vcmask 130048
    %v351 = vsel %vm349, %v342, 0
    %353 = vmatprep.subr.bf16.mxu0 0
    %354 = vmatpush1.bf16.msra.mxu0 %v347
    %355 = vmatprep.subr.bf16.mxu0 0
    %356 = vmatpush1.bf16.msra.mxu0 0
    %357 = vmatprep.subr.bf16.mxu0 0
    %358 = vmatpush1.bf16.msra.mxu0 0
    %359 = vmatprep.subr.bf16.mxu0 0
    %360 = vmatpush1.bf16.msra.mxu0 0
    %361 = vmatprep.subr.bf16.mxu0 0
    %362 = vmatpush1.bf16.msra.mxu0 0
    %363 = vmatprep.subr.bf16.mxu0 0
    %364 = vmatpush1.bf16.msra.mxu0 0
    %365 = vmatprep.subr.bf16.mxu0 0
    %366 = vmatpush1.bf16.msra.mxu0 0
    %367 = vmatprep.subr.bf16.mxu0 0
    %368 = vmatpush1.bf16.msra.mxu0 0
    %369 = vmatprep.subr.bf16.mxu0 0
    %370 = vmatpush1.bf16.msra.mxu0 0
    %371 = vmatprep.subr.bf16.mxu0 0
    %372 = vmatpush1.bf16.msra.mxu0 0
    %373 = vmatprep.subr.bf16.mxu0 0
    %374 = vmatpush1.bf16.msra.mxu0 0
    %375 = vmatprep.subr.bf16.mxu0 0
    %376 = vmatpush1.bf16.msra.mxu0 0
    %377 = vmatprep.subr.bf16.mxu0 0
    %378 = vmatpush1.bf16.msra.mxu0 0
    %379 = vmatprep.subr.bf16.mxu0 0
    %380 = vmatpush1.bf16.msra.mxu0 0
    %381 = vmatprep.subr.bf16.mxu0 0
    %382 = vmatpush1.bf16.msra.mxu0 0
    %383 = vmatprep.subr.bf16.mxu0 0
    %384 = vmatpush1.bf16.msra.mxu0 0
    %385 = vmatprep.mubr.bf16.mxu0 0
    %386 = vmatmul.mubr.bf16.gmra.mrb[0].mxu0 %v351
    %v387 = vpop.f32.mrb[0].mxu0
    %v388 = vadd.f32 0.0, %v387
    %v389 = vpop.f32.mrb[0].mxu0
    %v390 = vpop.f32.mrb[0].mxu0
    %v391 = vadd.f32 0.0, %v390
    %v392 = vpop.f32.mrb[0].mxu0
    %393 = vdwg.mxu0
    %v394 = vpack.c.bf16 %v391, %v388
    %v396 = vlaneseq
    %v397 = vshrl.u32 %v396, 7
    %v398 = vsub.s32 0, %v397
    %v399 = vrot.slane %v335, %v398
    %vm401 = vcmask 31744
    %v403 = vsel %vm401, %v394, 0
    %vm405 = vcmask 1041408
    %v407 = vsel %vm405, %v334, 0
    %409 = vmatprep.subr.bf16.mxu0 0
    %410 = vmatpush1.bf16.msra.mxu0 %v407
    %411 = vmatprep.subr.bf16.mxu0 0
    %412 = vmatpush1.bf16.msra.mxu0 0
    %413 = vmatprep.subr.bf16.mxu0 0
    %414 = vmatpush1.bf16.msra.mxu0 0
    %415 = vmatprep.subr.bf16.mxu0 0
    %416 = vmatpush1.bf16.msra.mxu0 0
    %417 = vmatprep.subr.bf16.mxu0 0
    %418 = vmatpush1.bf16.msra.mxu0 0
    %419 = vmatprep.subr.bf16.mxu0 0
    %420 = vmatpush1.bf16.msra.mxu0 0
    %421 = vmatprep.subr.bf16.mxu0 0
    %422 = vmatpush1.bf16.msra.mxu0 0
    %423 = vmatprep.subr.bf16.mxu0 0
    %424 = vmatpush1.bf16.msra.mxu0 0
    %425 = vmatprep.subr.bf16.mxu0 0
    %426 = vmatpush1.bf16.msra.mxu0 0
    %427 = vmatprep.subr.bf16.mxu0 0
    %428 = vmatpush1.bf16.msra.mxu0 0
    %429 = vmatprep.subr.bf16.mxu0 0
    %430 = vmatpush1.bf16.msra.mxu0 0
    %431 = vmatprep.subr.bf16.mxu0 0
    %432 = vmatpush1.bf16.msra.mxu0 0
    %433 = vmatprep.subr.bf16.mxu0 0
    %434 = vmatpush1.bf16.msra.mxu0 0
    %435 = vmatprep.subr.bf16.mxu0 0
    %436 = vmatpush1.bf16.msra.mxu0 0
    %437 = vmatprep.subr.bf16.mxu0 0
    %438 = vmatpush1.bf16.msra.mxu0 0
    %439 = vmatprep.subr.bf16.mxu0 0
    %440 = vmatpush1.bf16.msra.mxu0 0
    %441 = vmatprep.mubr.bf16.mxu0 0
    %442 = vmatmul.mubr.bf16.gmra.mrb[0].mxu0 %v403
    %v443 = vpop.f32.mrb[0].mxu0
    %v444 = vadd.f32 %v399, %v443
    %v445 = vpop.f32.mrb[0].mxu0
    %v446 = vpop.f32.mrb[0].mxu0
    %v447 = vadd.f32 %v399, %v446
    %v448 = vpop.f32.mrb[0].mxu0
    %449 = vdwg.mxu0
    %vm450 = vcmask 261120
    %v451 = vsel %vm450, %v444, 0.0
    %v452 = vsel %vm450, %v447, 0.0
    %v453 = vadd.f32 %v451, %v452
    %v454 = vrot.slane %v453, 4
    %v455 = vadd.f32 %v453, %v454
    %v456 = vrot.slane %v455, 2
    %v457 = vadd.f32 %v455, %v456
    %v458 = vrot.slane %v457, 1
    %v459 = vadd.f32 %v457, %v458
    %v460 = vmul.f32 %v459, 0.0625
    %v461 = vmul.f32 %v444, %v444
    %v462 = vmul.f32 %v447, %v447
    %v463 = vsel %vm450, %v461, 0.0
    %v464 = vsel %vm450, %v462, 0.0
    %v465 = vadd.f32 %v463, %v464
    %v466 = vrot.slane %v465, 4
    %v467 = vadd.f32 %v465, %v466
    %v468 = vrot.slane %v467, 2
    %v469 = vadd.f32 %v467, %v468
    %v470 = vrot.slane %v469, 1
    %v471 = vadd.f32 %v469, %v470
    %v472 = vmul.f32 %v471, 0.0625
    %v473 = vmul.f32 %v460, %v460
    %v474 = vsub.f32 %v472, %v473
    %v475 = vadd.f32 %v474, 1e-05
    %v476 = vrsqrt.pop %v475
    %v477 = vmul.f32 %v336, %v476
    %v478 = vmul.f32 %v460, %v477
    %v479 = vsub.f32 %v337, %v478
    %v481 = vlaneseq
    %v482 = vshrl.u32 %v481, 7
    %v483 = vsub.s32 0, %v482
    %v484 = vrot.slane %v477, %v483
    %v486 = vmul.f32 %v444, %v484
    %v487 = vmul.f32 %v447, %v484
    %v489 = vlaneseq
    %v490 = vshrl.u32 %v489, 7
    %v491 = vsub.s32 0, %v490
    %v492 = vrot.slane %v479, %v491
    %v494 = vadd.f32 %v486, %v492
    %v495 = vadd.f32 %v487, %v492
    %v496 = vmax.f32 %v494, 0.0
    %v497 = vmax.f32 %v495, 0.0
    %v498 = vpack.c.bf16 %v497, %v496
    %v499 = vld [vmem:[#allocation17] sm:$0xf]
    %v500 = vld [vmem:[#allocation17 + $0x4] sm:$0xf]
    %v501 = vld [vmem:[#allocation17 + $0x8] sm:$0xf]
    %v502 = vld [vmem:[#allocation17 + $0xc] sm:$0xf]
    %v503 = vld [vmem:[#allocation18] sm:$0x1]
    %v504 = vld [vmem:[#allocation20] sm:$0x1]
    %v505 = vld [vmem:[#allocation21] sm:$0x1]
    %506 = vmatprep.subr.bf16.mxu0 0
    %507 = vmatpush1.bf16.msra.mxu0 %v498
    %508 = vmatprep.subr.bf16.mxu0 0
    %509 = vmatpush1.bf16.msra.mxu0 0
    %510 = vmatprep.subr.bf16.mxu0 0
    %511 = vmatpush1.bf16.msra.mxu0 0
    %512 = vmatprep.subr.bf16.mxu0 0
    %513 = vmatpush1.bf16.msra.mxu0 0
    %514 = vmatprep.subr.bf16.mxu0 0
    %515 = vmatpush1.bf16.msra.mxu0 0
    %516 = vmatprep.subr.bf16.mxu0 0
    %517 = vmatpush1.bf16.msra.mxu0 0
    %518 = vmatprep.subr.bf16.mxu0 0
    %519 = vmatpush1.bf16.msra.mxu0 0
    %520 = vmatprep.subr.bf16.mxu0 0
    %521 = vmatpush1.bf16.msra.mxu0 0
    %522 = vmatprep.subr.bf16.mxu0 0
    %523 = vmatpush1.bf16.msra.mxu0 0
    %524 = vmatprep.subr.bf16.mxu0 0
    %525 = vmatpush1.bf16.msra.mxu0 0
    %526 = vmatprep.subr.bf16.mxu0 0
    %527 = vmatpush1.bf16.msra.mxu0 0
    %528 = vmatprep.subr.bf16.mxu0 0
    %529 = vmatpush1.bf16.msra.mxu0 0
    %530 = vmatprep.subr.bf16.mxu0 0
    %531 = vmatpush1.bf16.msra.mxu0 0
    %532 = vmatprep.subr.bf16.mxu0 0
    %533 = vmatpush1.bf16.msra.mxu0 0
    %534 = vmatprep.subr.bf16.mxu0 0
    %535 = vmatpush1.bf16.msra.mxu0 0
    %536 = vmatprep.subr.bf16.mxu0 0
    %537 = vmatpush1.bf16.msra.mxu0 0
    %538 = vmatprep.mubr.bf16.mxu0 0
    %539 = vmatmul.mubr.bf16.gmra.mrb[0].mxu0 %v351
    %v540 = vpop.f32.mrb[0].mxu0
    %v541 = vadd.f32 0.0, %v540
    %v542 = vpop.f32.mrb[0].mxu0
    %v543 = vpop.f32.mrb[0].mxu0
    %v544 = vadd.f32 0.0, %v543
    %v545 = vpop.f32.mrb[0].mxu0
    %546 = vdwg.mxu0
    %v547 = vpack.c.bf16 %v544, %v541
    %v549 = vlaneseq
    %v550 = vshrl.u32 %v549, 7
    %v551 = vsub.s32 0, %v550
    %v552 = vrot.slane %v503, %v551
    %v558 = vunpack.c.l.b16 %v499
    %v559 = vunpack.c.l.b16 %v500
    %v560 = vunpack.c.l.b16 %v501
    %v561 = vunpack.c.l.b16 %v502
    %v562 = vpack.c.b16 %v559, %v558
    %v563 = vpack.c.b16 %v561, %v560
    %v567 = vsel %vm450, %v547, 0
    %569 = vmatprep.subr.bf16.mxu0 0
    %570 = vmatpush1.bf16.msra.mxu0 %v562
    %571 = vmatprep.subr.bf16.mxu0 0
    %572 = vmatpush1.bf16.msra.mxu0 %v563
    %573 = vmatprep.subr.bf16.mxu0 0
    %574 = vmatpush1.bf16.msra.mxu0 0
    %575 = vmatprep.subr.bf16.mxu0 0
    %576 = vmatpush1.bf16.msra.mxu0 0
    %577 = vmatprep.subr.bf16.mxu0 0
    %578 = vmatpush1.bf16.msra.mxu0 0
    %579 = vmatprep.subr.bf16.mxu0 0
    %580 = vmatpush1.bf16.msra.mxu0 0
    %581 = vmatprep.subr.bf16.mxu0 0
    %582 = vmatpush1.bf16.msra.mxu0 0
    %583 = vmatprep.subr.bf16.mxu0 0
    %584 = vmatpush1.bf16.msra.mxu0 0
    %585 = vmatprep.subr.bf16.mxu0 0
    %586 = vmatpush1.bf16.msra.mxu0 0
    %587 = vmatprep.subr.bf16.mxu0 0
    %588 = vmatpush1.bf16.msra.mxu0 0
    %589 = vmatprep.subr.bf16.mxu0 0
    %590 = vmatpush1.bf16.msra.mxu0 0
    %591 = vmatprep.subr.bf16.mxu0 0
    %592 = vmatpush1.bf16.msra.mxu0 0
    %593 = vmatprep.subr.bf16.mxu0 0
    %594 = vmatpush1.bf16.msra.mxu0 0
    %595 = vmatprep.subr.bf16.mxu0 0
    %596 = vmatpush1.bf16.msra.mxu0 0
    %597 = vmatprep.subr.bf16.mxu0 0
    %598 = vmatpush1.bf16.msra.mxu0 0
    %599 = vmatprep.subr.bf16.mxu0 0
    %600 = vmatpush1.bf16.msra.mxu0 0
    %601 = vmatprep.mubr.bf16.mxu0 0
    %602 = vmatmul.mubr.bf16.gmra.mrb[0].mxu0 %v567
    %v603 = vpop.f32.mrb[0].mxu0
    %v604 = vadd.f32 %v552, %v603
    %v605 = vpop.f32.mrb[0].mxu0
    %v606 = vpop.f32.mrb[0].mxu0
    %v607 = vadd.f32 %v552, %v606
    %v608 = vpop.f32.mrb[0].mxu0
    %609 = vdwg.mxu0
    %v610 = vsel %vm450, %v604, 0.0
    %v611 = vsel %vm450, %v607, 0.0
    %v612 = vadd.f32 %v610, %v611
    %v613 = vrot.slane %v612, 4
    %v614 = vadd.f32 %v612, %v613
    %v615 = vrot.slane %v614, 2
    %v616 = vadd.f32 %v614, %v615
    %v617 = vrot.slane %v616, 1
    %v618 = vadd.f32 %v616, %v617
    %v619 = vmul.f32 %v618, 0.0625
    %v620 = vmul.f32 %v604, %v604
    %v621 = vmul.f32 %v607, %v607
    %v622 = vsel %vm450, %v620, 0.0
    %v623 = vsel %vm450, %v621, 0.0
    %v624 = vadd.f32 %v622, %v623
    %v625 = vrot.slane %v624, 4
    %v626 = vadd.f32 %v624, %v625
    %v627 = vrot.slane %v626, 2
    %v628 = vadd.f32 %v626, %v627
    %v629 = vrot.slane %v628, 1
    %v630 = vadd.f32 %v628, %v629
    %v631 = vmul.f32 %v630, 0.0625
    %v632 = vmul.f32 %v619, %v619
    %v633 = vsub.f32 %v631, %v632
    %v634 = vadd.f32 %v633, 1e-05
    %v635 = vrsqrt.pop %v634
    %v636 = vmul.f32 %v504, %v635
    %v637 = vmul.f32 %v619, %v636
    %v638 = vsub.f32 %v505, %v637
    %v640 = vlaneseq
    %v641 = vshrl.u32 %v640, 7
    %v642 = vsub.s32 0, %v641
    %v643 = vrot.slane %v636, %v642
    %v645 = vmul.f32 %v604, %v643
    %v646 = vmul.f32 %v607, %v643
    %v648 = vlaneseq
    %v649 = vshrl.u32 %v648, 7
    %v650 = vsub.s32 0, %v649
    %v651 = vrot.slane %v638, %v650
    %v653 = vadd.f32 %v645, %v651
    %v654 = vadd.f32 %v646, %v651
    %v655 = vmax.f32 %v653, 0.0
    %v656 = vmax.f32 %v654, 0.0
    %v657 = vpack.c.bf16 %v656, %v655
    %v658 = vld [vmem:[#allocation23] sm:$0xf]
    %v659 = vld [vmem:[#allocation23 + $0x4] sm:$0xf]
    %v660 = vld [vmem:[#allocation23 + $0x8] sm:$0xf]
    %v661 = vld [vmem:[#allocation23 + $0xc] sm:$0xf]
    %v662 = vld [vmem:[#allocation26] sm:$0x1]
    %v664 = vlaneseq
    %v665 = vshrl.u32 %v664, 7
    %v666 = vsub.s32 0, %v665
    %v667 = vrot.slane %v662, %v666
    %v673 = vunpack.c.l.b16 %v658
    %v674 = vunpack.c.l.b16 %v659
    %v675 = vunpack.c.l.b16 %v660
    %v676 = vunpack.c.l.b16 %v661
    %v677 = vpack.c.b16 %v674, %v673
    %v678 = vpack.c.b16 %v676, %v675
    %v682 = vsel %vm450, %v657, 0
    %684 = vmatprep.subr.bf16.mxu0 0
    %685 = vmatpush1.bf16.msra.mxu0 %v677
    %686 = vmatprep.subr.bf16.mxu0 0
    %687 = vmatpush1.bf16.msra.mxu0 %v678
    %688 = vmatprep.subr.bf16.mxu0 0
    %689 = vmatpush1.bf16.msra.mxu0 0
    %690 = vmatprep.subr.bf16.mxu0 0
    %691 = vmatpush1.bf16.msra.mxu0 0
    %692 = vmatprep.subr.bf16.mxu0 0
    %693 = vmatpush1.bf16.msra.mxu0 0
    %694 = vmatprep.subr.bf16.mxu0 0
    %695 = vmatpush1.bf16.msra.mxu0 0
    %696 = vmatprep.subr.bf16.mxu0 0
    %697 = vmatpush1.bf16.msra.mxu0 0
    %698 = vmatprep.subr.bf16.mxu0 0
    %699 = vmatpush1.bf16.msra.mxu0 0
    %700 = vmatprep.subr.bf16.mxu0 0
    %701 = vmatpush1.bf16.msra.mxu0 0
    %702 = vmatprep.subr.bf16.mxu0 0
    %703 = vmatpush1.bf16.msra.mxu0 0
    %704 = vmatprep.subr.bf16.mxu0 0
    %705 = vmatpush1.bf16.msra.mxu0 0
    %706 = vmatprep.subr.bf16.mxu0 0
    %707 = vmatpush1.bf16.msra.mxu0 0
    %708 = vmatprep.subr.bf16.mxu0 0
    %709 = vmatpush1.bf16.msra.mxu0 0
    %710 = vmatprep.subr.bf16.mxu0 0
    %711 = vmatpush1.bf16.msra.mxu0 0
    %712 = vmatprep.subr.bf16.mxu0 0
    %713 = vmatpush1.bf16.msra.mxu0 0
    %714 = vmatprep.subr.bf16.mxu0 0
    %715 = vmatpush1.bf16.msra.mxu0 0
    %716 = vmatprep.mubr.bf16.mxu0 0
    %717 = vmatmul.mubr.bf16.gmra.mrb[0].mxu0 %v682
    %v718 = vpop.f32.mrb[0].mxu0
    %v719 = vadd.f32 %v667, %v718
    %v720 = vpop.f32.mrb[0].mxu0
    %v721 = vpop.f32.mrb[0].mxu0
    %v722 = vadd.f32 %v667, %v721
    %v723 = vpop.f32.mrb[0].mxu0
    %724 = vdwg.mxu0
    %vm725 = vcmask 785408
    %726 = vst.msk [vmem:[#allocation2] sm:$0xff] %vm725, %v719
    %727 = vst.msk [vmem:[#allocation2 + $0x8] sm:$0xff] %vm725, %v722
    %v728 = vld [vmem:[#allocation29] sm:$0xf]
    %v729 = vld [vmem:[#allocation29 + $0x4] sm:$0xf]
    %v730 = vld [vmem:[#allocation29 + $0x8] sm:$0xf]
    %v731 = vld [vmem:[#allocation29 + $0xc] sm:$0xf]
    %v732 = vld [vmem:[#allocation32] sm:$0x1]
    %v734 = vlaneseq
    %v735 = vshrl.u32 %v734, 7
    %v736 = vsub.s32 0, %v735
    %v737 = vrot.slane %v732, %v736
    %v743 = vunpack.c.l.b16 %v728
    %v744 = vunpack.c.l.b16 %v729
    %v745 = vunpack.c.l.b16 %v730
    %v746 = vunpack.c.l.b16 %v731
    %v747 = vpack.c.b16 %v744, %v743
    %v748 = vpack.c.b16 %v746, %v745
    %751 = vmatprep.subr.bf16.mxu0 0
    %752 = vmatpush1.bf16.msra.mxu0 %v747
    %753 = vmatprep.subr.bf16.mxu0 0
    %754 = vmatpush1.bf16.msra.mxu0 %v748
    %755 = vmatprep.subr.bf16.mxu0 0
    %756 = vmatpush1.bf16.msra.mxu0 0
    %757 = vmatprep.subr.bf16.mxu0 0
    %758 = vmatpush1.bf16.msra.mxu0 0
    %759 = vmatprep.subr.bf16.mxu0 0
    %760 = vmatpush1.bf16.msra.mxu0 0
    %761 = vmatprep.subr.bf16.mxu0 0
    %762 = vmatpush1.bf16.msra.mxu0 0
    %763 = vmatprep.subr.bf16.mxu0 0
    %764 = vmatpush1.bf16.msra.mxu0 0
    %765 = vmatprep.subr.bf16.mxu0 0
    %766 = vmatpush1.bf16.msra.mxu0 0
    %767 = vmatprep.subr.bf16.mxu0 0
    %768 = vmatpush1.bf16.msra.mxu0 0
    %769 = vmatprep.subr.bf16.mxu0 0
    %770 = vmatpush1.bf16.msra.mxu0 0
    %771 = vmatprep.subr.bf16.mxu0 0
    %772 = vmatpush1.bf16.msra.mxu0 0
    %773 = vmatprep.subr.bf16.mxu0 0
    %774 = vmatpush1.bf16.msra.mxu0 0
    %775 = vmatprep.subr.bf16.mxu0 0
    %776 = vmatpush1.bf16.msra.mxu0 0
    %777 = vmatprep.subr.bf16.mxu0 0
    %778 = vmatpush1.bf16.msra.mxu0 0
    %779 = vmatprep.subr.bf16.mxu0 0
    %780 = vmatpush1.bf16.msra.mxu0 0
    %781 = vmatprep.subr.bf16.mxu0 0
    %782 = vmatpush1.bf16.msra.mxu0 0
    %783 = vmatprep.mubr.bf16.mxu0 0
    %784 = vmatmul.mubr.bf16.gmra.mrb[0].mxu0 %v682
    %v785 = vpop.f32.mrb[0].mxu0
    %v786 = vadd.f32 %v737, %v785
    %v787 = vpop.f32.mrb[0].mxu0
    %v788 = vpop.f32.mrb[0].mxu0
    %v789 = vadd.f32 %v737, %v788
    %v790 = vpop.f32.mrb[0].mxu0
    %791 = vdwg.mxu0
    %792 = vst.msk [vmem:[#allocation3] sm:$0xff] %vm725, %v786
    %793 = vst.msk [vmem:[#allocation3 + $0x8] sm:$0xff] %vm725, %v789
    %v794 = vld [vmem:[#allocation24] sm:$0xf]
    %v795 = vld [vmem:[#allocation24 + $0x4] sm:$0xf]
    %v796 = vld [vmem:[#allocation24 + $0x8] sm:$0xf]
    %v797 = vld [vmem:[#allocation24 + $0xc] sm:$0xf]
    %v798 = vld [vmem:[#allocation30] sm:$0xf]
    %v799 = vld [vmem:[#allocation30 + $0x4] sm:$0xf]
    %v800 = vld [vmem:[#allocation30 + $0x8] sm:$0xf]
    %v801 = vld [vmem:[#allocation30 + $0xc] sm:$0xf]
    %v802 = vld [vmem:[#allocation27] sm:$0x1]
    %v803 = vld [vmem:[#allocation33] sm:$0x1]
    %v808 = vunpack.c.l.b16 %v794
    %v809 = vunpack.c.l.b16 %v795
    %v810 = vunpack.c.l.b16 %v796
    %v811 = vunpack.c.l.b16 %v797
    %v812 = vpack.c.b16 %v809, %v808
    %v813 = vpack.c.b16 %v811, %v810
    %v817 = vsel %vm450, 0, 0
    %819 = vmatprep.subr.bf16.mxu0 0
    %820 = vmatpush1.bf16.msra.mxu0 %v812
    %821 = vmatprep.subr.bf16.mxu0 0
    %822 = vmatpush1.bf16.msra.mxu0 %v813
    %823 = vmatprep.subr.bf16.mxu0 0
    %824 = vmatpush1.bf16.msra.mxu0 0
    %825 = vmatprep.subr.bf16.mxu0 0
    %826 = vmatpush1.bf16.msra.mxu0 0
    %827 = vmatprep.subr.bf16.mxu0 0
    %828 = vmatpush1.bf16.msra.mxu0 0
    %829 = vmatprep.subr.bf16.mxu0 0
    %830 = vmatpush1.bf16.msra.mxu0 0
    %831 = vmatprep.subr.bf16.mxu0 0
    %832 = vmatpush1.bf16.msra.mxu0 0
    %833 = vmatprep.subr.bf16.mxu0 0
    %834 = vmatpush1.bf16.msra.mxu0 0
    %835 = vmatprep.subr.bf16.mxu0 0
    %836 = vmatpush1.bf16.msra.mxu0 0
    %837 = vmatprep.subr.bf16.mxu0 0
    %838 = vmatpush1.bf16.msra.mxu0 0
    %839 = vmatprep.subr.bf16.mxu0 0
    %840 = vmatpush1.bf16.msra.mxu0 0
    %841 = vmatprep.subr.bf16.mxu0 0
    %842 = vmatpush1.bf16.msra.mxu0 0
    %843 = vmatprep.subr.bf16.mxu0 0
    %844 = vmatpush1.bf16.msra.mxu0 0
    %845 = vmatprep.subr.bf16.mxu0 0
    %846 = vmatpush1.bf16.msra.mxu0 0
    %847 = vmatprep.subr.bf16.mxu0 0
    %848 = vmatpush1.bf16.msra.mxu0 0
    %849 = vmatprep.subr.bf16.mxu0 0
    %850 = vmatpush1.bf16.msra.mxu0 0
    %851 = vmatprep.mubr.bf16.mxu0 0
    %852 = vmatmul.mubr.bf16.gmra.mrb[0].mxu0 %v817
    %v853 = vpop.f32.mrb[0].mxu0
    %v854 = vadd.f32 %v802, %v853
    %v855 = vpop.f32.mrb[0].mxu0
    %v856 = vpop.f32.mrb[0].mxu0
    %v857 = vpop.f32.mrb[0].mxu0
    %858 = vdwg.mxu0
    %v863 = vunpack.c.l.b16 %v798
    %v864 = vunpack.c.l.b16 %v799
    %v865 = vunpack.c.l.b16 %v800
    %v866 = vunpack.c.l.b16 %v801
    %v867 = vpack.c.b16 %v864, %v863
    %v868 = vpack.c.b16 %v866, %v865
    %871 = vmatprep.subr.bf16.mxu0 0
    %872 = vmatpush1.bf16.msra.mxu0 %v867
    %873 = vmatprep.subr.bf16.mxu0 0
    %874 = vmatpush1.bf16.msra.mxu0 %v868
    %875 = vmatprep.subr.bf16.mxu0 0
    %876 = vmatpush1.bf16.msra.mxu0 0
    %877 = vmatprep.subr.bf16.mxu0 0
    %878 = vmatpush1.bf16.msra.mxu0 0
    %879 = vmatprep.subr.bf16.mxu0 0
    %880 = vmatpush1.bf16.msra.mxu0 0
    %881 = vmatprep.subr.bf16.mxu0 0
    %882 = vmatpush1.bf16.msra.mxu0 0
    %883 = vmatprep.subr.bf16.mxu0 0
    %884 = vmatpush1.bf16.msra.mxu0 0
    %885 = vmatprep.subr.bf16.mxu0 0
    %886 = vmatpush1.bf16.msra.mxu0 0
    %887 = vmatprep.subr.bf16.mxu0 0
    %888 = vmatpush1.bf16.msra.mxu0 0
    %889 = vmatprep.subr.bf16.mxu0 0
    %890 = vmatpush1.bf16.msra.mxu0 0
    %891 = vmatprep.subr.bf16.mxu0 0
    %892 = vmatpush1.bf16.msra.mxu0 0
    %893 = vmatprep.subr.bf16.mxu0 0
    %894 = vmatpush1.bf16.msra.mxu0 0
    %895 = vmatprep.subr.bf16.mxu0 0
    %896 = vmatpush1.bf16.msra.mxu0 0
    %897 = vmatprep.subr.bf16.mxu0 0
    %898 = vmatpush1.bf16.msra.mxu0 0
    %899 = vmatprep.subr.bf16.mxu0 0
    %900 = vmatpush1.bf16.msra.mxu0 0
    %901 = vmatprep.subr.bf16.mxu0 0
    %902 = vmatpush1.bf16.msra.mxu0 0
    %903 = vmatprep.mubr.bf16.mxu0 0
    %904 = vmatmul.mubr.bf16.gmra.mrb[0].mxu0 %v817
    %v905 = vpop.f32.mrb[0].mxu0
    %v906 = vadd.f32 %v803, %v905
    %v907 = vpop.f32.mrb[0].mxu0
    %v908 = vpop.f32.mrb[0].mxu0
    %v909 = vpop.f32.mrb[0].mxu0
    %910 = vdwg.mxu0
    %v911 = vld [vmem:[#allocation2] sm:$0x1]
    %v912 = vld [vmem:[#allocation3 + $0xf] sm:$0x1]
    %v913 = vadd.f32 %v911, %v854
    %v914 = vxor.u32 %v913, 2147483648
    %v915 = vmul.f32 %v914, 1.442695
    %v916 = vpow.pop %v915
    %v917 = vadd.f32 %v916, 1.0
    %v918 = vrcp.pop %v917
    %v919 = vmul.f32 1.0, %v918
    %921 = vrot.lane.b32.xlu0 %v854, 64
    %v922 = vpop.permute.xlu0 %921
    %v924 = vmul.f32 %v919, %v922
    %926 = vrot.lane.b32.xlu0 %v924, 64
    %v927 = vpop.permute.xlu0 %926
    %v929 = vadd.f32 %v911, %v927
    %v930 = vtanh.pop %v929
    %v931 = vsub.f32 1.0, %v919
    %933 = vrot.lane.b32.xlu0 %v930, 96
    %v934 = vpop.permute.xlu0 %933
    %v936 = vmul.f32 %v931, %v934
    %v937 = vmul.f32 %v919, 0.0
    %v938 = vadd.f32 %v936, %v937
    %v939 = vadd.f32 %v912, %v906
    %v940 = vxor.u32 %v939, 2147483648
    %v941 = vmul.f32 %v940, 1.442695
    %v942 = vpow.pop %v941
    %v943 = vadd.f32 %v942, 1.0
    %v944 = vrcp.pop %v943
    %v945 = vmul.f32 1.0, %v944
    %947 = vrot.lane.b32.xlu0 %v906, 64
    %v948 = vpop.permute.xlu0 %947
    %v950 = vmul.f32 %v945, %v948
    %952 = vrot.lane.b32.xlu0 %v950, 64
    %v953 = vpop.permute.xlu0 %952
    %v955 = vadd.f32 %v912, %v953
    %v956 = vtanh.pop %v955
    %v957 = vsub.f32 1.0, %v945
    %959 = vrot.lane.b32.xlu0 %v956, 96
    %v960 = vpop.permute.xlu0 %959
    %v962 = vmul.f32 %v957, %v960
    %v963 = vmul.f32 %v945, 0.0
    %v964 = vadd.f32 %v962, %v963
    %966 = vrot.lane.b32.xlu0 %v938, 96
    %v967 = vpop.permute.xlu0 %966
    %vm969 = vcmask 253952
    %970 = vst.msk [vmem:[#allocation4] sm:$0x1] %vm969, %v967
    %972 = vrot.lane.b32.xlu0 %v964, 96
    %v973 = vpop.permute.xlu0 %972
    %975 = vst.msk [vmem:[#allocation5 + $0xf] sm:$0x1] %vm969, %v973
    %v976 = vpack.c.bf16 %v938, %v938
    %978 = vrot.lane.b32.xlu0 %v976, 96
    %v979 = vpop.permute.xlu0 %978
    %v981 = vsel %vm450, %v979, 0
    %983 = vmatprep.subr.bf16.mxu0 0
    %984 = vmatpush1.bf16.msra.mxu0 %v812
    %985 = vmatprep.subr.bf16.mxu0 0
    %986 = vmatpush1.bf16.msra.mxu0 %v813
    %987 = vmatprep.subr.bf16.mxu0 0
    %988 = vmatpush1.bf16.msra.mxu0 0
    %989 = vmatprep.subr.bf16.mxu0 0
    %990 = vmatpush1.bf16.msra.mxu0 0
    %991 = vmatprep.subr.bf16.mxu0 0
    %992 = vmatpush1.bf16.msra.mxu0 0
    %993 = vmatprep.subr.bf16.mxu0 0
    %994 = vmatpush1.bf16.msra.mxu0 0
    %995 = vmatprep.subr.bf16.mxu0 0
    %996 = vmatpush1.bf16.msra.mxu0 0
    %997 = vmatprep.subr.bf16.mxu0 0
    %998 = vmatpush1.bf16.msra.mxu0 0
    %999 = vmatprep.subr.bf16.mxu0 0
    %1000 = vmatpush1.bf16.msra.mxu0 0
    %1001 = vmatprep.subr.bf16.mxu0 0
    %1002 = vmatpush1.bf16.msra.mxu0 0
    %1003 = vmatprep.subr.bf16.mxu0 0
    %1004 = vmatpush1.bf16.msra.mxu0 0
    %1005 = vmatprep.subr.bf16.mxu0 0
    %1006 = vmatpush1.bf16.msra.mxu0 0
    %1007 = vmatprep.subr.bf16.mxu0 0
    %1008 = vmatpush1.bf16.msra.mxu0 0
    %1009 = vmatprep.subr.bf16.mxu0 0
    %1010 = vmatpush1.bf16.msra.mxu0 0
    %1011 = vmatprep.subr.bf16.mxu0 0
    %1012 = vmatpush1.bf16.msra.mxu0 0
    %1013 = vmatprep.subr.bf16.mxu0 0
    %1014 = vmatpush1.bf16.msra.mxu0 0
    %1015 = vmatprep.mubr.bf16.mxu0 0
    %1016 = vmatmul.mubr.bf16.gmra.mrb[0].mxu0 %v981
    %v1017 = vpop.f32.mrb[0].mxu0
    %v1018 = vadd.f32 %v802, %v1017
    %v1019 = vpop.f32.mrb[0].mxu0
    %v1020 = vpop.f32.mrb[0].mxu0
    %v1021 = vpop.f32.mrb[0].mxu0
    %1022 = vdwg.mxu0
    %v1023 = vpack.c.bf16 %v964, %v964
    %1025 = vrot.lane.b32.xlu0 %v1023, 96
    %v1026 = vpop.permute.xlu0 %1025
    %v1028 = vsel %vm450, %v1026, 0
    %1030 = vmatprep.subr.bf16.mxu0 0
    %1031 = vmatpush1.bf16.msra.mxu0 %v867
    %1032 = vmatprep.subr.bf16.mxu0 0
    %1033 = vmatpush1.bf16.msra.mxu0 %v868
    %1034 = vmatprep.subr.bf16.mxu0 0
    %1035 = vmatpush1.bf16.msra.mxu0 0
    %1036 = vmatprep.subr.bf16.mxu0 0
    %1037 = vmatpush1.bf16.msra.mxu0 0
    %1038 = vmatprep.subr.bf16.mxu0 0
    %1039 = vmatpush1.bf16.msra.mxu0 0
    %1040 = vmatprep.subr.bf16.mxu0 0
    %1041 = vmatpush1.bf16.msra.mxu0 0
    %1042 = vmatprep.subr.bf16.mxu0 0
    %1043 = vmatpush1.bf16.msra.mxu0 0
    %1044 = vmatprep.subr.bf16.mxu0 0
    %1045 = vmatpush1.bf16.msra.mxu0 0
    %1046 = vmatprep.subr.bf16.mxu0 0
    %1047 = vmatpush1.bf16.msra.mxu0 0
    %1048 = vmatprep.subr.bf16.mxu0 0
    %1049 = vmatpush1.bf16.msra.mxu0 0
    %1050 = vmatprep.subr.bf16.mxu0 0
    %1051 = vmatpush1.bf16.msra.mxu0 0
    %1052 = vmatprep.subr.bf16.mxu0 0
    %1053 = vmatpush1.bf16.msra.mxu0 0
    %1054 = vmatprep.subr.bf16.mxu0 0
    %1055 = vmatpush1.bf16.msra.mxu0 0
    %1056 = vmatprep.subr.bf16.mxu0 0
    %1057 = vmatpush1.bf16.msra.mxu0 0
    %1058 = vmatprep.subr.bf16.mxu0 0
    %1059 = vmatpush1.bf16.msra.mxu0 0
    %1060 = vmatprep.subr.bf16.mxu0 0
    %1061 = vmatpush1.bf16.msra.mxu0 0
    %1062 = vmatprep.mubr.bf16.mxu0 0
    %1063 = vmatmul.mubr.bf16.gmra.mrb[0].mxu0 %v1028
    %v1064 = vpop.f32.mrb[0].mxu0
    %v1065 = vadd.f32 %v803, %v1064
    %v1066 = vpop.f32.mrb[0].mxu0
    %v1067 = vpop.f32.mrb[0].mxu0
    %v1068 = vpop.f32.mrb[0].mxu0
    %1069 = vdwg.mxu0
    %v1070 = vld [vmem:[#allocation2 + $0x1] sm:$0x1]
    %v1071 = vld [vmem:[#allocation3 + $0xe] sm:$0x1]
    %v1072 = vadd.f32 %v1070, %v1018
    %v1073 = vxor.u32 %v1072, 2147483648
    %v1074 = vmul.f32 %v1073, 1.442695
    %v1075 = vpow.pop %v1074
    %v1076 = vadd.f32 %v1075, 1.0
    %v1077 = vrcp.pop %v1076
    %v1078 = vmul.f32 1.0, %v1077
    %1080 = vrot.lane.b32.xlu0 %v1018, 64
    %v1081 = vpop.permute.xlu0 %1080
    %v1083 = vmul.f32 %v1078, %v1081
    %1085 = vrot.lane.b32.xlu0 %v1083, 64
    %v1086 = vpop.permute.xlu0 %1085
    %v1088 = vadd.f32 %v1070, %v1086
    %v1089 = vtanh.pop %v1088
    %v1090 = vsub.f32 1.0, %v1078
    %1092 = vrot.lane.b32.xlu0 %v1089, 96
    %v1093 = vpop.permute.xlu0 %1092
    %v1095 = vmul.f32 %v1090, %v1093
    %v1096 = vmul.f32 %v1078, %v938
    %v1097 = vadd.f32 %v1095, %v1096
    %v1098 = vadd.f32 %v1071, %v1065
    %v1099 = vxor.u32 %v1098, 2147483648
    %v1100 = vmul.f32 %v1099, 1.442695
    %v1101 = vpow.pop %v1100
    %v1102 = vadd.f32 %v1101, 1.0
    %v1103 = vrcp.pop %v1102
    %v1104 = vmul.f32 1.0, %v1103
    %1106 = vrot.lane.b32.xlu0 %v1065, 64
    %v1107 = vpop.permute.xlu0 %1106
    %v1109 = vmul.f32 %v1104, %v1107
    %1111 = vrot.lane.b32.xlu0 %v1109, 64
    %v1112 = vpop.permute.xlu0 %1111
    %v1114 = vadd.f32 %v1071, %v1112
    %v1115 = vtanh.pop %v1114
    %v1116 = vsub.f32 1.0, %v1104
    %1118 = vrot.lane.b32.xlu0 %v1115, 96
    %v1119 = vpop.permute.xlu0 %1118
    %v1121 = vmul.f32 %v1116, %v1119
    %v1122 = vmul.f32 %v1104, %v964
    %v1123 = vadd.f32 %v1121, %v1122
    %1125 = vrot.lane.b32.xlu0 %v1097, 96
    %v1126 = vpop.permute.xlu0 %1125
    %1128 = vst.msk [vmem:[#allocation4 + $0x1] sm:$0x1] %vm969, %v1126
    %1130 = vrot.lane.b32.xlu0 %v1123, 96
    %v1131 = vpop.permute.xlu0 %1130
    %1133 = vst.msk [vmem:[#allocation5 + $0xe] sm:$0x1] %vm969, %v1131
    %v1134 = vpack.c.bf16 %v1097, %v1097
    %1136 = vrot.lane.b32.xlu0 %v1134, 96
    %v1137 = vpop.permute.xlu0 %1136
    %v1139 = vsel %vm450, %v1137, 0
    %1141 = vmatprep.subr.bf16.mxu0 0
    %1142 = vmatpush1.bf16.msra.mxu0 %v812
    %1143 = vmatprep.subr.bf16.mxu0 0
    %1144 = vmatpush1.bf16.msra.mxu0 %v813
    %1145 = vmatprep.subr.bf16.mxu0 0
    %1146 = vmatpush1.bf16.msra.mxu0 0
    %1147 = vmatprep.subr.bf16.mxu0 0
    %1148 = vmatpush1.bf16.msra.mxu0 0
    %1149 = vmatprep.subr.bf16.mxu0 0
    %1150 = vmatpush1.bf16.msra.mxu0 0
    %1151 = vmatprep.subr.bf16.mxu0 0
    %1152 = vmatpush1.bf16.msra.mxu0 0
    %1153 = vmatprep.subr.bf16.mxu0 0
    %1154 = vmatpush1.bf16.msra.mxu0 0
    %1155 = vmatprep.subr.bf16.mxu0 0
    %1156 = vmatpush1.bf16.msra.mxu0 0
    %1157 = vmatprep.subr.bf16.mxu0 0
    %1158 = vmatpush1.bf16.msra.mxu0 0
    %1159 = vmatprep.subr.bf16.mxu0 0
    %1160 = vmatpush1.bf16.msra.mxu0 0
    %1161 = vmatprep.subr.bf16.mxu0 0
    %1162 = vmatpush1.bf16.msra.mxu0 0
    %1163 = vmatprep.subr.bf16.mxu0 0
    %1164 = vmatpush1.bf16.msra.mxu0 0
    %1165 = vmatprep.subr.bf16.mxu0 0
    %1166 = vmatpush1.bf16.msra.mxu0 0
    %1167 = vmatprep.subr.bf16.mxu0 0
    %1168 = vmatpush1.bf16.msra.mxu0 0
    %1169 = vmatprep.subr.bf16.mxu0 0
    %1170 = vmatpush1.bf16.msra.mxu0 0
    %1171 = vmatprep.subr.bf16.mxu0 0
    %1172 = vmatpush1.bf16.msra.mxu0 0
    %1173 = vmatprep.mubr.bf16.mxu0 0
    %1174 = vmatmul.mubr.bf16.gmra.mrb[0].mxu0 %v1139
    %v1175 = vpop.f32.mrb[0].mxu0
    %v1176 = vadd.f32 %v802, %v1175
    %v1177 = vpop.f32.mrb[0].mxu0
    %v1178 = vpop.f32.mrb[0].mxu0
    %v1179 = vpop.f32.mrb[0].mxu0
    %1180 = vdwg.mxu0
    %v1181 = vpack.c.bf16 %v1123, %v1123
    %1183 = vrot.lane.b32.xlu0 %v1181, 96
    %v1184 = vpop.permute.xlu0 %1183
    %v1186 = vsel %vm450, %v1184, 0
    %1188 = vmatprep.subr.bf16.mxu0 0
    %1189 = vmatpush1.bf16.msra.mxu0 %v867
    %1190 = vmatprep.subr.bf16.mxu0 0
    %1191 = vmatpush1.bf16.msra.mxu0 %v868
    %1192 = vmatprep.subr.bf16.mxu0 0
    %1193 = vmatpush1.bf16.msra.mxu0 0
    %1194 = vmatprep.subr.bf16.mxu0 0
    %1195 = vmatpush1.bf16.msra.mxu0 0
    %1196 = vmatprep.subr.bf16.mxu0 0
    %1197 = vmatpush1.bf16.msra.mxu0 0
    %1198 = vmatprep.subr.bf16.mxu0 0
    %1199 = vmatpush1.bf16.msra.mxu0 0
    %1200 = vmatprep.subr.bf16.mxu0 0
    %1201 = vmatpush1.bf16.msra.mxu0 0
    %1202 = vmatprep.subr.bf16.mxu0 0
    %1203 = vmatpush1.bf16.msra.mxu0 0
    %1204 = vmatprep.subr.bf16.mxu0 0
    %1205 = vmatpush1.bf16.msra.mxu0 0
    %1206 = vmatprep.subr.bf16.mxu0 0
    %1207 = vmatpush1.bf16.msra.mxu0 0
    %1208 = vmatprep.subr.bf16.mxu0 0
    %1209 = vmatpush1.bf16.msra.mxu0 0
    %1210 = vmatprep.subr.bf16.mxu0 0
    %1211 = vmatpush1.bf16.msra.mxu0 0
    %1212 = vmatprep.subr.bf16.mxu0 0
    %1213 = vmatpush1.bf16.msra.mxu0 0
    %1214 = vmatprep.subr.bf16.mxu0 0
    %1215 = vmatpush1.bf16.msra.mxu0 0
    %1216 = vmatprep.subr.bf16.mxu0 0
    %1217 = vmatpush1.bf16.msra.mxu0 0
    %1218 = vmatprep.subr.bf16.mxu0 0
    %1219 = vmatpush1.bf16.msra.mxu0 0
    %1220 = vmatprep.mubr.bf16.mxu0 0
    %1221 = vmatmul.mubr.bf16.gmra.mrb[0].mxu0 %v1186
    %v1222 = vpop.f32.mrb[0].mxu0
    %v1223 = vadd.f32 %v803, %v1222
    %v1224 = vpop.f32.mrb[0].mxu0
    %v1225 = vpop.f32.mrb[0].mxu0
    %v1226 = vpop.f32.mrb[0].mxu0
    %1227 = vdwg.mxu0
    %v1228 = vld [vmem:[#allocation2 + $0x2] sm:$0x1]
    %v1229 = vld [vmem:[#allocation3 + $0xd] sm:$0x1]
    %v1230 = vadd.f32 %v1228, %v1176
    %v1231 = vxor.u32 %v1230, 2147483648
    %v1232 = vmul.f32 %v1231, 1.442695
    %v1233 = vpow.pop %v1232
    %v1234 = vadd.f32 %v1233, 1.0
    %v1235 = vrcp.pop %v1234
    %v1236 = vmul.f32 1.0, %v1235
    %1238 = vrot.lane.b32.xlu0 %v1176, 64
    %v1239 = vpop.permute.xlu0 %1238
    %v1241 = vmul.f32 %v1236, %v1239
    %1243 = vrot.lane.b32.xlu0 %v1241, 64
    %v1244 = vpop.permute.xlu0 %1243
    %v1246 = vadd.f32 %v1228, %v1244
    %v1247 = vtanh.pop %v1246
    %v1248 = vsub.f32 1.0, %v1236
    %1250 = vrot.lane.b32.xlu0 %v1247, 96
    %v1251 = vpop.permute.xlu0 %1250
    %v1253 = vmul.f32 %v1248, %v1251
    %v1254 = vmul.f32 %v1236, %v1097
    %v1255 = vadd.f32 %v1253, %v1254
    %v1256 = vadd.f32 %v1229, %v1223
    %v1257 = vxor.u32 %v1256, 2147483648
    %v1258 = vmul.f32 %v1257, 1.442695
    %v1259 = vpow.pop %v1258
    %v1260 = vadd.f32 %v1259, 1.0
    %v1261 = vrcp.pop %v1260
    %v1262 = vmul.f32 1.0, %v1261
    %1264 = vrot.lane.b32.xlu0 %v1223, 64
    %v1265 = vpop.permute.xlu0 %1264
    %v1267 = vmul.f32 %v1262, %v1265
    %1269 = vrot.lane.b32.xlu0 %v1267, 64
    %v1270 = vpop.permute.xlu0 %1269
    %v1272 = vadd.f32 %v1229, %v1270
    %v1273 = vtanh.pop %v1272
    %v1274 = vsub.f32 1.0, %v1262
    %1276 = vrot.lane.b32.xlu0 %v1273, 96
    %v1277 = vpop.permute.xlu0 %1276
    %v1279 = vmul.f32 %v1274, %v1277
    %v1280 = vmul.f32 %v1262, %v1123
    %v1281 = vadd.f32 %v1279, %v1280
    %1283 = vrot.lane.b32.xlu0 %v1255, 96
    %v1284 = vpop.permute.xlu0 %1283
    %1286 = vst.msk [vmem:[#allocation4 + $0x2] sm:$0x1] %vm969, %v1284
    %1288 = vrot.lane.b32.xlu0 %v1281, 96
    %v1289 = vpop.permute.xlu0 %1288
    %1291 = vst.msk [vmem:[#allocation5 + $0xd] sm:$0x1] %vm969, %v1289
    %v1292 = vpack.c.bf16 %v1255, %v1255
    %1294 = vrot.lane.b32.xlu0 %v1292, 96
    %v1295 = vpop.permute.xlu0 %1294
    %v1297 = vsel %vm450, %v1295, 0
    %1299 = vmatprep.subr.bf16.mxu0 0
    %1300 = vmatpush1.bf16.msra.mxu0 %v812
    %1301 = vmatprep.subr.bf16.mxu0 0
    %1302 = vmatpush1.bf16.msra.mxu0 %v813
    %1303 = vmatprep.subr.bf16.mxu0 0
    %1304 = vmatpush1.bf16.msra.mxu0 0
    %1305 = vmatprep.subr.bf16.mxu0 0
    %1306 = vmatpush1.bf16.msra.mxu0 0
    %1307 = vmatprep.subr.bf16.mxu0 0
    %1308 = vmatpush1.bf16.msra.mxu0 0
    %1309 = vmatprep.subr.bf16.mxu0 0
    %1310 = vmatpush1.bf16.msra.mxu0 0
    %1311 = vmatprep.subr.bf16.mxu0 0
    %1312 = vmatpush1.bf16.msra.mxu0 0
    %1313 = vmatprep.subr.bf16.mxu0 0
    %1314 = vmatpush1.bf16.msra.mxu0 0
    %1315 = vmatprep.subr.bf16.mxu0 0
    %1316 = vmatpush1.bf16.msra.mxu0 0
    %1317 = vmatprep.subr.bf16.mxu0 0
    %1318 = vmatpush1.bf16.msra.mxu0 0
    %1319 = vmatprep.subr.bf16.mxu0 0
    %1320 = vmatpush1.bf16.msra.mxu0 0
    %1321 = vmatprep.subr.bf16.mxu0 0
    %1322 = vmatpush1.bf16.msra.mxu0 0
    %1323 = vmatprep.subr.bf16.mxu0 0
    %1324 = vmatpush1.bf16.msra.mxu0 0
    %1325 = vmatprep.subr.bf16.mxu0 0
    %1326 = vmatpush1.bf16.msra.mxu0 0
    %1327 = vmatprep.subr.bf16.mxu0 0
    %1328 = vmatpush1.bf16.msra.mxu0 0
    %1329 = vmatprep.subr.bf16.mxu0 0
    %1330 = vmatpush1.bf16.msra.mxu0 0
    %1331 = vmatprep.mubr.bf16.mxu0 0
    %1332 = vmatmul.mubr.bf16.gmra.mrb[0].mxu0 %v1297
    %v1333 = vpop.f32.mrb[0].mxu0
    %v1334 = vadd.f32 %v802, %v1333
    %v1335 = vpop.f32.mrb[0].mxu0
    %v1336 = vpop.f32.mrb[0].mxu0
    %v1337 = vpop.f32.mrb[0].mxu0
    %1338 = vdwg.mxu0
    %v1339 = vpack.c.bf16 %v1281, %v1281
    %1341 = vrot.lane.b32.xlu0 %v1339, 96
    %v1342 = vpop.permute.xlu0 %1341
    %v1344 = vsel %vm450, %v1342, 0
    %1346 = vmatprep.subr.bf16.mxu0 0
    %1347 = vmatpush1.bf16.msra.mxu0 %v867
    %1348 = vmatprep.subr.bf16.mxu0 0
    %1349 = vmatpush1.bf16.msra.mxu0 %v868
    %1350 = vmatprep.subr.bf16.mxu0 0
    %1351 = vmatpush1.bf16.msra.mxu0 0
    %1352 = vmatprep.subr.bf16.mxu0 0
    %1353 = vmatpush1.bf16.msra.mxu0 0
    %1354 = vmatprep.subr.bf16.mxu0 0
    %1355 = vmatpush1.bf16.msra.mxu0 0
    %1356 = vmatprep.subr.bf16.mxu0 0
    %1357 = vmatpush1.bf16.msra.mxu0 0
    %1358 = vmatprep.subr.bf16.mxu0 0
    %1359 = vmatpush1.bf16.msra.mxu0 0
    %1360 = vmatprep.subr.bf16.mxu0 0
    %1361 = vmatpush1.bf16.msra.mxu0 0
    %1362 = vmatprep.subr.bf16.mxu0 0
    %1363 = vmatpush1.bf16.msra.mxu0 0
    %1364 = vmatprep.subr.bf16.mxu0 0
    %1365 = vmatpush1.bf16.msra.mxu0 0
    %1366 = vmatprep.subr.bf16.mxu0 0
    %1367 = vmatpush1.bf16.msra.mxu0 0
    %1368 = vmatprep.subr.bf16.mxu0 0
    %1369 = vmatpush1.bf16.msra.mxu0 0
    %1370 = vmatprep.subr.bf16.mxu0 0
    %1371 = vmatpush1.bf16.msra.mxu0 0
    %1372 = vmatprep.subr.bf16.mxu0 0
    %1373 = vmatpush1.bf16.msra.mxu0 0
    %1374 = vmatprep.subr.bf16.mxu0 0
    %1375 = vmatpush1.bf16.msra.mxu0 0
    %1376 = vmatprep.subr.bf16.mxu0 0
    %1377 = vmatpush1.bf16.msra.mxu0 0
    %1378 = vmatprep.mubr.bf16.mxu0 0
    %1379 = vmatmul.mubr.bf16.gmra.mrb[0].mxu0 %v1344
    %v1380 = vpop.f32.mrb[0].mxu0
    %v1381 = vadd.f32 %v803, %v1380
    %v1382 = vpop.f32.mrb[0].mxu0
    %v1383 = vpop.f32.mrb[0].mxu0
    %v1384 = vpop.f32.mrb[0].mxu0
    %1385 = vdwg.mxu0
    %v1386 = vld [vmem:[#allocation2 + $0x3] sm:$0x1]
    %v1387 = vld [vmem:[#allocation3 + $0xc] sm:$0x1]
    %v1388 = vadd.f32 %v1386, %v1334
    %v1389 = vxor.u32 %v1388, 2147483648
    %v1390 = vmul.f32 %v1389, 1.442695
    %v1391 = vpow.pop %v1390
    %v1392 = vadd.f32 %v1391, 1.0
    %v1393 = vrcp.pop %v1392
    %v1394 = vmul.f32 1.0, %v1393
    %1396 = vrot.lane.b32.xlu0 %v1334, 64
    %v1397 = vpop.permute.xlu0 %1396
    %v1399 = vmul.f32 %v1394, %v1397
    %1401 = vrot.lane.b32.xlu0 %v1399, 64
    %v1402 = vpop.permute.xlu0 %1401
    %v1404 = vadd.f32 %v1386, %v1402
    %v1405 = vtanh.pop %v1404
    %v1406 = vsub.f32 1.0, %v1394
    %1408 = vrot.lane.b32.xlu0 %v1405, 96
    %v1409 = vpop.permute.xlu0 %1408
    %v1411 = vmul.f32 %v1406, %v1409
    %v1412 = vmul.f32 %v1394, %v1255
    %v1413 = vadd.f32 %v1411, %v1412
    %v1414 = vadd.f32 %v1387, %v1381
    %v1415 = vxor.u32 %v1414, 2147483648
    %v1416 = vmul.f32 %v1415, 1.442695
    %v1417 = vpow.pop %v1416
    %v1418 = vadd.f32 %v1417, 1.0
    %v1419 = vrcp.pop %v1418
    %v1420 = vmul.f32 1.0, %v1419
    %1422 = vrot.lane.b32.xlu0 %v1381, 64
    %v1423 = vpop.permute.xlu0 %1422
    %v1425 = vmul.f32 %v1420, %v1423
    %1427 = vrot.lane.b32.xlu0 %v1425, 64
    %v1428 = vpop.permute.xlu0 %1427
    %v1430 = vadd.f32 %v1387, %v1428
    %v1431 = vtanh.pop %v1430
    %v1432 = vsub.f32 1.0, %v1420
    %1434 = vrot.lane.b32.xlu0 %v1431, 96
    %v1435 = vpop.permute.xlu0 %1434
    %v1437 = vmul.f32 %v1432, %v1435
    %v1438 = vmul.f32 %v1420, %v1281
    %v1439 = vadd.f32 %v1437, %v1438
    %1441 = vrot.lane.b32.xlu0 %v1413, 96
    %v1442 = vpop.permute.xlu0 %1441
    %1444 = vst.msk [vmem:[#allocation4 + $0x3] sm:$0x1] %vm969, %v1442
    %1446 = vrot.lane.b32.xlu0 %v1439, 96
    %v1447 = vpop.permute.xlu0 %1446
    %1449 = vst.msk [vmem:[#allocation5 + $0xc] sm:$0x1] %vm969, %v1447
    %v1450 = vpack.c.bf16 %v1413, %v1413
    %1452 = vrot.lane.b32.xlu0 %v1450, 96
    %v1453 = vpop.permute.xlu0 %1452
    %v1455 = vsel %vm450, %v1453, 0
    %1457 = vmatprep.subr.bf16.mxu0 0
    %1458 = vmatpush1.bf16.msra.mxu0 %v812
    %1459 = vmatprep.subr.bf16.mxu0 0
    %1460 = vmatpush1.bf16.msra.mxu0 %v813
    %1461 = vmatprep.subr.bf16.mxu0 0
    %1462 = vmatpush1.bf16.msra.mxu0 0
    %1463 = vmatprep.subr.bf16.mxu0 0
    %1464 = vmatpush1.bf16.msra.mxu0 0
    %1465 = vmatprep.subr.bf16.mxu0 0
    %1466 = vmatpush1.bf16.msra.mxu0 0
    %1467 = vmatprep.subr.bf16.mxu0 0
    %1468 = vmatpush1.bf16.msra.mxu0 0
    %1469 = vmatprep.subr.bf16.mxu0 0
    %1470 = vmatpush1.bf16.msra.mxu0 0
    %1471 = vmatprep.subr.bf16.mxu0 0
    %1472 = vmatpush1.bf16.msra.mxu0 0
    %1473 = vmatprep.subr.bf16.mxu0 0
    %1474 = vmatpush1.bf16.msra.mxu0 0
    %1475 = vmatprep.subr.bf16.mxu0 0
    %1476 = vmatpush1.bf16.msra.mxu0 0
    %1477 = vmatprep.subr.bf16.mxu0 0
    %1478 = vmatpush1.bf16.msra.mxu0 0
    %1479 = vmatprep.subr.bf16.mxu0 0
    %1480 = vmatpush1.bf16.msra.mxu0 0
    %1481 = vmatprep.subr.bf16.mxu0 0
    %1482 = vmatpush1.bf16.msra.mxu0 0
    %1483 = vmatprep.subr.bf16.mxu0 0
    %1484 = vmatpush1.bf16.msra.mxu0 0
    %1485 = vmatprep.subr.bf16.mxu0 0
    %1486 = vmatpush1.bf16.msra.mxu0 0
    %1487 = vmatprep.subr.bf16.mxu0 0
    %1488 = vmatpush1.bf16.msra.mxu0 0
    %1489 = vmatprep.mubr.bf16.mxu0 0
    %1490 = vmatmul.mubr.bf16.gmra.mrb[0].mxu0 %v1455
    %v1491 = vpop.f32.mrb[0].mxu0
    %v1492 = vadd.f32 %v802, %v1491
    %v1493 = vpop.f32.mrb[0].mxu0
    %v1494 = vpop.f32.mrb[0].mxu0
    %v1495 = vpop.f32.mrb[0].mxu0
    %1496 = vdwg.mxu0
    %v1497 = vpack.c.bf16 %v1439, %v1439
    %1499 = vrot.lane.b32.xlu0 %v1497, 96
    %v1500 = vpop.permute.xlu0 %1499
    %v1502 = vsel %vm450, %v1500, 0
    %1504 = vmatprep.subr.bf16.mxu0 0
    %1505 = vmatpush1.bf16.msra.mxu0 %v867
    %1506 = vmatprep.subr.bf16.mxu0 0
    %1507 = vmatpush1.bf16.msra.mxu0 %v868
    %1508 = vmatprep.subr.bf16.mxu0 0
    %1509 = vmatpush1.bf16.msra.mxu0 0
    %1510 = vmatprep.subr.bf16.mxu0 0
    %1511 = vmatpush1.bf16.msra.mxu0 0
    %1512 = vmatprep.subr.bf16.mxu0 0
    %1513 = vmatpush1.bf16.msra.mxu0 0
    %1514 = vmatprep.subr.bf16.mxu0 0
    %1515 = vmatpush1.bf16.msra.mxu0 0
    %1516 = vmatprep.subr.bf16.mxu0 0
    %1517 = vmatpush1.bf16.msra.mxu0 0
    %1518 = vmatprep.subr.bf16.mxu0 0
    %1519 = vmatpush1.bf16.msra.mxu0 0
    %1520 = vmatprep.subr.bf16.mxu0 0
    %1521 = vmatpush1.bf16.msra.mxu0 0
    %1522 = vmatprep.subr.bf16.mxu0 0
    %1523 = vmatpush1.bf16.msra.mxu0 0
    %1524 = vmatprep.subr.bf16.mxu0 0
    %1525 = vmatpush1.bf16.msra.mxu0 0
    %1526 = vmatprep.subr.bf16.mxu0 0
    %1527 = vmatpush1.bf16.msra.mxu0 0
    %1528 = vmatprep.subr.bf16.mxu0 0
    %1529 = vmatpush1.bf16.msra.mxu0 0
    %1530 = vmatprep.subr.bf16.mxu0 0
    %1531 = vmatpush1.bf16.msra.mxu0 0
    %1532 = vmatprep.subr.bf16.mxu0 0
    %1533 = vmatpush1.bf16.msra.mxu0 0
    %1534 = vmatprep.subr.bf16.mxu0 0
    %1535 = vmatpush1.bf16.msra.mxu0 0
    %1536 = vmatprep.mubr.bf16.mxu0 0
    %1537 = vmatmul.mubr.bf16.gmra.mrb[0].mxu0 %v1502
    %v1538 = vpop.f32.mrb[0].mxu0
    %v1539 = vadd.f32 %v803, %v1538
    %v1540 = vpop.f32.mrb[0].mxu0
    %v1541 = vpop.f32.mrb[0].mxu0
    %v1542 = vpop.f32.mrb[0].mxu0
    %1543 = vdwg.mxu0
    %v1544 = vld [vmem:[#allocation2 + $0x4] sm:$0x1]
    %v1545 = vld [vmem:[#allocation3 + $0xb] sm:$0x1]
    %v1546 = vadd.f32 %v1544, %v1492
    %v1547 = vxor.u32 %v1546, 2147483648
    %v1548 = vmul.f32 %v1547, 1.442695
    %v1549 = vpow.pop %v1548
    %v1550 = vadd.f32 %v1549, 1.0
    %v1551 = vrcp.pop %v1550
    %v1552 = vmul.f32 1.0, %v1551
    %1554 = vrot.lane.b32.xlu0 %v1492, 64
    %v1555 = vpop.permute.xlu0 %1554
    %v1557 = vmul.f32 %v1552, %v1555
    %1559 = vrot.lane.b32.xlu0 %v1557, 64
    %v1560 = vpop.permute.xlu0 %1559
    %v1562 = vadd.f32 %v1544, %v1560
    %v1563 = vtanh.pop %v1562
    %v1564 = vsub.f32 1.0, %v1552
    %1566 = vrot.lane.b32.xlu0 %v1563, 96
    %v1567 = vpop.permute.xlu0 %1566
    %v1569 = vmul.f32 %v1564, %v1567
    %v1570 = vmul.f32 %v1552, %v1413
    %v1571 = vadd.f32 %v1569, %v1570
    %v1572 = vadd.f32 %v1545, %v1539
    %v1573 = vxor.u32 %v1572, 2147483648
    %v1574 = vmul.f32 %v1573, 1.442695
    %v1575 = vpow.pop %v1574
    %v1576 = vadd.f32 %v1575, 1.0
    %v1577 = vrcp.pop %v1576
    %v1578 = vmul.f32 1.0, %v1577
    %1580 = vrot.lane.b32.xlu0 %v1539, 64
    %v1581 = vpop.permute.xlu0 %1580
    %v1583 = vmul.f32 %v1578, %v1581
    %1585 = vrot.lane.b32.xlu0 %v1583, 64
    %v1586 = vpop.permute.xlu0 %1585
    %v1588 = vadd.f32 %v1545, %v1586
    %v1589 = vtanh.pop %v1588
    %v1590 = vsub.f32 1.0, %v1578
    %1592 = vrot.lane.b32.xlu0 %v1589, 96
    %v1593 = vpop.permute.xlu0 %1592
    %v1595 = vmul.f32 %v1590, %v1593
    %v1596 = vmul.f32 %v1578, %v1439
    %v1597 = vadd.f32 %v1595, %v1596
    %1599 = vrot.lane.b32.xlu0 %v1571, 96
    %v1600 = vpop.permute.xlu0 %1599
    %1602 = vst.msk [vmem:[#allocation4 + $0x4] sm:$0x1] %vm969, %v1600
    %1604 = vrot.lane.b32.xlu0 %v1597, 96
    %v1605 = vpop.permute.xlu0 %1604
    %1607 = vst.msk [vmem:[#allocation5 + $0xb] sm:$0x1] %vm969, %v1605
    %v1608 = vpack.c.bf16 %v1571, %v1571
    %1610 = vrot.lane.b32.xlu0 %v1608, 96
    %v1611 = vpop.permute.xlu0 %1610
    %v1613 = vsel %vm450, %v1611, 0
    %1615 = vmatprep.subr.bf16.mxu0 0
    %1616 = vmatpush1.bf16.msra.mxu0 %v812
    %1617 = vmatprep.subr.bf16.mxu0 0
    %1618 = vmatpush1.bf16.msra.mxu0 %v813
    %1619 = vmatprep.subr.bf16.mxu0 0
    %1620 = vmatpush1.bf16.msra.mxu0 0
    %1621 = vmatprep.subr.bf16.mxu0 0
    %1622 = vmatpush1.bf16.msra.mxu0 0
    %1623 = vmatprep.subr.bf16.mxu0 0
    %1624 = vmatpush1.bf16.msra.mxu0 0
    %1625 = vmatprep.subr.bf16.mxu0 0
    %1626 = vmatpush1.bf16.msra.mxu0 0
    %1627 = vmatprep.subr.bf16.mxu0 0
    %1628 = vmatpush1.bf16.msra.mxu0 0
    %1629 = vmatprep.subr.bf16.mxu0 0
    %1630 = vmatpush1.bf16.msra.mxu0 0
    %1631 = vmatprep.subr.bf16.mxu0 0
    %1632 = vmatpush1.bf16.msra.mxu0 0
    %1633 = vmatprep.subr.bf16.mxu0 0
    %1634 = vmatpush1.bf16.msra.mxu0 0
    %1635 = vmatprep.subr.bf16.mxu0 0
    %1636 = vmatpush1.bf16.msra.mxu0 0
    %1637 = vmatprep.subr.bf16.mxu0 0
    %1638 = vmatpush1.bf16.msra.mxu0 0
    %1639 = vmatprep.subr.bf16.mxu0 0
    %1640 = vmatpush1.bf16.msra.mxu0 0
    %1641 = vmatprep.subr.bf16.mxu0 0
    %1642 = vmatpush1.bf16.msra.mxu0 0
    %1643 = vmatprep.subr.bf16.mxu0 0
    %1644 = vmatpush1.bf16.msra.mxu0 0
    %1645 = vmatprep.subr.bf16.mxu0 0
    %1646 = vmatpush1.bf16.msra.mxu0 0
    %1647 = vmatprep.mubr.bf16.mxu0 0
    %1648 = vmatmul.mubr.bf16.gmra.mrb[0].mxu0 %v1613
    %v1649 = vpop.f32.mrb[0].mxu0
    %v1650 = vadd.f32 %v802, %v1649
    %v1651 = vpop.f32.mrb[0].mxu0
    %v1652 = vpop.f32.mrb[0].mxu0
    %v1653 = vpop.f32.mrb[0].mxu0
    %1654 = vdwg.mxu0
    %v1655 = vpack.c.bf16 %v1597, %v1597
    %1657 = vrot.lane.b32.xlu0 %v1655, 96
    %v1658 = vpop.permute.xlu0 %1657
    %v1660 = vsel %vm450, %v1658, 0
    %1662 = vmatprep.subr.bf16.mxu0 0
    %1663 = vmatpush1.bf16.msra.mxu0 %v867
    %1664 = vmatprep.subr.bf16.mxu0 0
    %1665 = vmatpush1.bf16.msra.mxu0 %v868
    %1666 = vmatprep.subr.bf16.mxu0 0
    %1667 = vmatpush1.bf16.msra.mxu0 0
    %1668 = vmatprep.subr.bf16.mxu0 0
    %1669 = vmatpush1.bf16.msra.mxu0 0
    %1670 = vmatprep.subr.bf16.mxu0 0
    %1671 = vmatpush1.bf16.msra.mxu0 0
    %1672 = vmatprep.subr.bf16.mxu0 0
    %1673 = vmatpush1.bf16.msra.mxu0 0
    %1674 = vmatprep.subr.bf16.mxu0 0
    %1675 = vmatpush1.bf16.msra.mxu0 0
    %1676 = vmatprep.subr.bf16.mxu0 0
    %1677 = vmatpush1.bf16.msra.mxu0 0
    %1678 = vmatprep.subr.bf16.mxu0 0
    %1679 = vmatpush1.bf16.msra.mxu0 0
    %1680 = vmatprep.subr.bf16.mxu0 0
    %1681 = vmatpush1.bf16.msra.mxu0 0
    %1682 = vmatprep.subr.bf16.mxu0 0
    %1683 = vmatpush1.bf16.msra.mxu0 0
    %1684 = vmatprep.subr.bf16.mxu0 0
    %1685 = vmatpush1.bf16.msra.mxu0 0
    %1686 = vmatprep.subr.bf16.mxu0 0
    %1687 = vmatpush1.bf16.msra.mxu0 0
    %1688 = vmatprep.subr.bf16.mxu0 0
    %1689 = vmatpush1.bf16.msra.mxu0 0
    %1690 = vmatprep.subr.bf16.mxu0 0
    %1691 = vmatpush1.bf16.msra.mxu0 0
    %1692 = vmatprep.subr.bf16.mxu0 0
    %1693 = vmatpush1.bf16.msra.mxu0 0
    %1694 = vmatprep.mubr.bf16.mxu0 0
    %1695 = vmatmul.mubr.bf16.gmra.mrb[0].mxu0 %v1660
    %v1696 = vpop.f32.mrb[0].mxu0
    %v1697 = vadd.f32 %v803, %v1696
    %v1698 = vpop.f32.mrb[0].mxu0
    %v1699 = vpop.f32.mrb[0].mxu0
    %v1700 = vpop.f32.mrb[0].mxu0
    %1701 = vdwg.mxu0
    %v1702 = vld [vmem:[#allocation2 + $0x5] sm:$0x1]
    %v1703 = vld [vmem:[#allocation3 + $0xa] sm:$0x1]
    %v1704 = vadd.f32 %v1702, %v1650
    %v1705 = vxor.u32 %v1704, 2147483648
    %v1706 = vmul.f32 %v1705, 1.442695
    %v1707 = vpow.pop %v1706
    %v1708 = vadd.f32 %v1707, 1.0
    %v1709 = vrcp.pop %v1708
    %v1710 = vmul.f32 1.0, %v1709
    %1712 = vrot.lane.b32.xlu0 %v1650, 64
    %v1713 = vpop.permute.xlu0 %1712
    %v1715 = vmul.f32 %v1710, %v1713
    %1717 = vrot.lane.b32.xlu0 %v1715, 64
    %v1718 = vpop.permute.xlu0 %1717
    %v1720 = vadd.f32 %v1702, %v1718
    %v1721 = vtanh.pop %v1720
    %v1722 = vsub.f32 1.0, %v1710
    %1724 = vrot.lane.b32.xlu0 %v1721, 96
    %v1725 = vpop.permute.xlu0 %1724
    %v1727 = vmul.f32 %v1722, %v1725
    %v1728 = vmul.f32 %v1710, %v1571
    %v1729 = vadd.f32 %v1727, %v1728
    %v1730 = vadd.f32 %v1703, %v1697
    %v1731 = vxor.u32 %v1730, 2147483648
    %v1732 = vmul.f32 %v1731, 1.442695
    %v1733 = vpow.pop %v1732
    %v1734 = vadd.f32 %v1733, 1.0
    %v1735 = vrcp.pop %v1734
    %v1736 = vmul.f32 1.0, %v1735
    %1738 = vrot.lane.b32.xlu0 %v1697, 64
    %v1739 = vpop.permute.xlu0 %1738
    %v1741 = vmul.f32 %v1736, %v1739
    %1743 = vrot.lane.b32.xlu0 %v1741, 64
    %v1744 = vpop.permute.xlu0 %1743
    %v1746 = vadd.f32 %v1703, %v1744
    %v1747 = vtanh.pop %v1746
    %v1748 = vsub.f32 1.0, %v1736
    %1750 = vrot.lane.b32.xlu0 %v1747, 96
    %v1751 = vpop.permute.xlu0 %1750
    %v1753 = vmul.f32 %v1748, %v1751
    %v1754 = vmul.f32 %v1736, %v1597
    %v1755 = vadd.f32 %v1753, %v1754
    %1757 = vrot.lane.b32.xlu0 %v1729, 96
    %v1758 = vpop.permute.xlu0 %1757
    %1760 = vst.msk [vmem:[#allocation4 + $0x5] sm:$0x1] %vm969, %v1758
    %1762 = vrot.lane.b32.xlu0 %v1755, 96
    %v1763 = vpop.permute.xlu0 %1762
    %1765 = vst.msk [vmem:[#allocation5 + $0xa] sm:$0x1] %vm969, %v1763
    %v1766 = vpack.c.bf16 %v1729, %v1729
    %1768 = vrot.lane.b32.xlu0 %v1766, 96
    %v1769 = vpop.permute.xlu0 %1768
    %v1771 = vsel %vm450, %v1769, 0
    %1773 = vmatprep.subr.bf16.mxu0 0
    %1774 = vmatpush1.bf16.msra.mxu0 %v812
    %1775 = vmatprep.subr.bf16.mxu0 0
    %1776 = vmatpush1.bf16.msra.mxu0 %v813
    %1777 = vmatprep.subr.bf16.mxu0 0
    %1778 = vmatpush1.bf16.msra.mxu0 0
    %1779 = vmatprep.subr.bf16.mxu0 0
    %1780 = vmatpush1.bf16.msra.mxu0 0
    %1781 = vmatprep.subr.bf16.mxu0 0
    %1782 = vmatpush1.bf16.msra.mxu0 0
    %1783 = vmatprep.subr.bf16.mxu0 0
    %1784 = vmatpush1.bf16.msra.mxu0 0
    %1785 = vmatprep.subr.bf16.mxu0 0
    %1786 = vmatpush1.bf16.msra.mxu0 0
    %1787 = vmatprep.subr.bf16.mxu0 0
    %1788 = vmatpush1.bf16.msra.mxu0 0
    %1789 = vmatprep.subr.bf16.mxu0 0
    %1790 = vmatpush1.bf16.msra.mxu0 0
    %1791 = vmatprep.subr.bf16.mxu0 0
    %1792 = vmatpush1.bf16.msra.mxu0 0
    %1793 = vmatprep.subr.bf16.mxu0 0
    %1794 = vmatpush1.bf16.msra.mxu0 0
    %1795 = vmatprep.subr.bf16.mxu0 0
    %1796 = vmatpush1.bf16.msra.mxu0 0
    %1797 = vmatprep.subr.bf16.mxu0 0
    %1798 = vmatpush1.bf16.msra.mxu0 0
    %1799 = vmatprep.subr.bf16.mxu0 0
    %1800 = vmatpush1.bf16.msra.mxu0 0
    %1801 = vmatprep.subr.bf16.mxu0 0
    %1802 = vmatpush1.bf16.msra.mxu0 0
    %1803 = vmatprep.subr.bf16.mxu0 0
    %1804 = vmatpush1.bf16.msra.mxu0 0
    %1805 = vmatprep.mubr.bf16.mxu0 0
    %1806 = vmatmul.mubr.bf16.gmra.mrb[0].mxu0 %v1771
    %v1807 = vpop.f32.mrb[0].mxu0
    %v1808 = vadd.f32 %v802, %v1807
    %v1809 = vpop.f32.mrb[0].mxu0
    %v1810 = vpop.f32.mrb[0].mxu0
    %v1811 = vpop.f32.mrb[0].mxu0
    %1812 = vdwg.mxu0
    %v1813 = vpack.c.bf16 %v1755, %v1755
    %1815 = vrot.lane.b32.xlu0 %v1813, 96
    %v1816 = vpop.permute.xlu0 %1815
    %v1818 = vsel %vm450, %v1816, 0
    %1820 = vmatprep.subr.bf16.mxu0 0
    %1821 = vmatpush1.bf16.msra.mxu0 %v867
    %1822 = vmatprep.subr.bf16.mxu0 0
    %1823 = vmatpush1.bf16.msra.mxu0 %v868
    %1824 = vmatprep.subr.bf16.mxu0 0
    %1825 = vmatpush1.bf16.msra.mxu0 0
    %1826 = vmatprep.subr.bf16.mxu0 0
    %1827 = vmatpush1.bf16.msra.mxu0 0
    %1828 = vmatprep.subr.bf16.mxu0 0
    %1829 = vmatpush1.bf16.msra.mxu0 0
    %1830 = vmatprep.subr.bf16.mxu0 0
    %1831 = vmatpush1.bf16.msra.mxu0 0
    %1832 = vmatprep.subr.bf16.mxu0 0
    %1833 = vmatpush1.bf16.msra.mxu0 0
    %1834 = vmatprep.subr.bf16.mxu0 0
    %1835 = vmatpush1.bf16.msra.mxu0 0
    %1836 = vmatprep.subr.bf16.mxu0 0
    %1837 = vmatpush1.bf16.msra.mxu0 0
    %1838 = vmatprep.subr.bf16.mxu0 0
    %1839 = vmatpush1.bf16.msra.mxu0 0
    %1840 = vmatprep.subr.bf16.mxu0 0
    %1841 = vmatpush1.bf16.msra.mxu0 0
    %1842 = vmatprep.subr.bf16.mxu0 0
    %1843 = vmatpush1.bf16.msra.mxu0 0
    %1844 = vmatprep.subr.bf16.mxu0 0
    %1845 = vmatpush1.bf16.msra.mxu0 0
    %1846 = vmatprep.subr.bf16.mxu0 0
    %1847 = vmatpush1.bf16.msra.mxu0 0
    %1848 = vmatprep.subr.bf16.mxu0 0
    %1849 = vmatpush1.bf16.msra.mxu0 0
    %1850 = vmatprep.subr.bf16.mxu0 0
    %1851 = vmatpush1.bf16.msra.mxu0 0
    %1852 = vmatprep.mubr.bf16.mxu0 0
    %1853 = vmatmul.mubr.bf16.gmra.mrb[0].mxu0 %v1818
    %v1854 = vpop.f32.mrb[0].mxu0
    %v1855 = vadd.f32 %v803, %v1854
    %v1856 = vpop.f32.mrb[0].mxu0
    %v1857 = vpop.f32.mrb[0].mxu0
    %v1858 = vpop.f32.mrb[0].mxu0
    %1859 = vdwg.mxu0
    %v1860 = vld [vmem:[#allocation2 + $0x6] sm:$0x1]
    %v1861 = vld [vmem:[#allocation3 + $0x9] sm:$0x1]
    %v1862 = vadd.f32 %v1860, %v1808
    %v1863 = vxor.u32 %v1862, 2147483648
    %v1864 = vmul.f32 %v1863, 1.442695
    %v1865 = vpow.pop %v1864
    %v1866 = vadd.f32 %v1865, 1.0
    %v1867 = vrcp.pop %v1866
    %v1868 = vmul.f32 1.0, %v1867
    %1870 = vrot.lane.b32.xlu0 %v1808, 64
    %v1871 = vpop.permute.xlu0 %1870
    %v1873 = vmul.f32 %v1868, %v1871
    %1875 = vrot.lane.b32.xlu0 %v1873, 64
    %v1876 = vpop.permute.xlu0 %1875
    %v1878 = vadd.f32 %v1860, %v1876
    %v1879 = vtanh.pop %v1878
    %v1880 = vsub.f32 1.0, %v1868
    %1882 = vrot.lane.b32.xlu0 %v1879, 96
    %v1883 = vpop.permute.xlu0 %1882
    %v1885 = vmul.f32 %v1880, %v1883
    %v1886 = vmul.f32 %v1868, %v1729
    %v1887 = vadd.f32 %v1885, %v1886
    %v1888 = vadd.f32 %v1861, %v1855
    %v1889 = vxor.u32 %v1888, 2147483648
    %v1890 = vmul.f32 %v1889, 1.442695
    %v1891 = vpow.pop %v1890
    %v1892 = vadd.f32 %v1891, 1.0
    %v1893 = vrcp.pop %v1892
    %v1894 = vmul.f32 1.0, %v1893
    %1896 = vrot.lane.b32.xlu0 %v1855, 64
    %v1897 = vpop.permute.xlu0 %1896
    %v1899 = vmul.f32 %v1894, %v1897
    %1901 = vrot.lane.b32.xlu0 %v1899, 64
    %v1902 = vpop.permute.xlu0 %1901
    %v1904 = vadd.f32 %v1861, %v1902
    %v1905 = vtanh.pop %v1904
    %v1906 = vsub.f32 1.0, %v1894
    %1908 = vrot.lane.b32.xlu0 %v1905, 96
    %v1909 = vpop.permute.xlu0 %1908
    %v1911 = vmul.f32 %v1906, %v1909
    %v1912 = vmul.f32 %v1894, %v1755
    %v1913 = vadd.f32 %v1911, %v1912
    %1915 = vrot.lane.b32.xlu0 %v1887, 96
    %v1916 = vpop.permute.xlu0 %1915
    %1918 = vst.msk [vmem:[#allocation4 + $0x6] sm:$0x1] %vm969, %v1916
    %1920 = vrot.lane.b32.xlu0 %v1913, 96
    %v1921 = vpop.permute.xlu0 %1920
    %1923 = vst.msk [vmem:[#allocation5 + $0x9] sm:$0x1] %vm969, %v1921
    %v1924 = vpack.c.bf16 %v1887, %v1887
    %1926 = vrot.lane.b32.xlu0 %v1924, 96
    %v1927 = vpop.permute.xlu0 %1926
    %v1929 = vsel %vm450, %v1927, 0
    %1931 = vmatprep.subr.bf16.mxu0 0
    %1932 = vmatpush1.bf16.msra.mxu0 %v812
    %1933 = vmatprep.subr.bf16.mxu0 0
    %1934 = vmatpush1.bf16.msra.mxu0 %v813
    %1935 = vmatprep.subr.bf16.mxu0 0
    %1936 = vmatpush1.bf16.msra.mxu0 0
    %1937 = vmatprep.subr.bf16.mxu0 0
    %1938 = vmatpush1.bf16.msra.mxu0 0
    %1939 = vmatprep.subr.bf16.mxu0 0
    %1940 = vmatpush1.bf16.msra.mxu0 0
    %1941 = vmatprep.subr.bf16.mxu0 0
    %1942 = vmatpush1.bf16.msra.mxu0 0
    %1943 = vmatprep.subr.bf16.mxu0 0
    %1944 = vmatpush1.bf16.msra.mxu0 0
    %1945 = vmatprep.subr.bf16.mxu0 0
    %1946 = vmatpush1.bf16.msra.mxu0 0
    %1947 = vmatprep.subr.bf16.mxu0 0
    %1948 = vmatpush1.bf16.msra.mxu0 0
    %1949 = vmatprep.subr.bf16.mxu0 0
    %1950 = vmatpush1.bf16.msra.mxu0 0
    %1951 = vmatprep.subr.bf16.mxu0 0
    %1952 = vmatpush1.bf16.msra.mxu0 0
    %1953 = vmatprep.subr.bf16.mxu0 0
    %1954 = vmatpush1.bf16.msra.mxu0 0
    %1955 = vmatprep.subr.bf16.mxu0 0
    %1956 = vmatpush1.bf16.msra.mxu0 0
    %1957 = vmatprep.subr.bf16.mxu0 0
    %1958 = vmatpush1.bf16.msra.mxu0 0
    %1959 = vmatprep.subr.bf16.mxu0 0
    %1960 = vmatpush1.bf16.msra.mxu0 0
    %1961 = vmatprep.subr.bf16.mxu0 0
    %1962 = vmatpush1.bf16.msra.mxu0 0
    %1963 = vmatprep.mubr.bf16.mxu0 0
    %1964 = vmatmul.mubr.bf16.gmra.mrb[0].mxu0 %v1929
    %v1965 = vpop.f32.mrb[0].mxu0
    %v1966 = vadd.f32 %v802, %v1965
    %v1967 = vpop.f32.mrb[0].mxu0
    %v1968 = vpop.f32.mrb[0].mxu0
    %v1969 = vpop.f32.mrb[0].mxu0
    %1970 = vdwg.mxu0
    %v1971 = vpack.c.bf16 %v1913, %v1913
    %1973 = vrot.lane.b32.xlu0 %v1971, 96
    %v1974 = vpop.permute.xlu0 %1973
    %v1976 = vsel %vm450, %v1974, 0
    %1978 = vmatprep.subr.bf16.mxu0 0
    %1979 = vmatpush1.bf16.msra.mxu0 %v867
    %1980 = vmatprep.subr.bf16.mxu0 0
    %1981 = vmatpush1.bf16.msra.mxu0 %v868
    %1982 = vmatprep.subr.bf16.mxu0 0
    %1983 = vmatpush1.bf16.msra.mxu0 0
    %1984 = vmatprep.subr.bf16.mxu0 0
    %1985 = vmatpush1.bf16.msra.mxu0 0
    %1986 = vmatprep.subr.bf16.mxu0 0
    %1987 = vmatpush1.bf16.msra.mxu0 0
    %1988 = vmatprep.subr.bf16.mxu0 0
    %1989 = vmatpush1.bf16.msra.mxu0 0
    %1990 = vmatprep.subr.bf16.mxu0 0
    %1991 = vmatpush1.bf16.msra.mxu0 0
    %1992 = vmatprep.subr.bf16.mxu0 0
    %1993 = vmatpush1.bf16.msra.mxu0 0
    %1994 = vmatprep.subr.bf16.mxu0 0
    %1995 = vmatpush1.bf16.msra.mxu0 0
    %1996 = vmatprep.subr.bf16.mxu0 0
    %1997 = vmatpush1.bf16.msra.mxu0 0
    %1998 = vmatprep.subr.bf16.mxu0 0
    %1999 = vmatpush1.bf16.msra.mxu0 0
    %2000 = vmatprep.subr.bf16.mxu0 0
    %2001 = vmatpush1.bf16.msra.mxu0 0
    %2002 = vmatprep.subr.bf16.mxu0 0
    %2003 = vmatpush1.bf16.msra.mxu0 0
    %2004 = vmatprep.subr.bf16.mxu0 0
    %2005 = vmatpush1.bf16.msra.mxu0 0
    %2006 = vmatprep.subr.bf16.mxu0 0
    %2007 = vmatpush1.bf16.msra.mxu0 0
    %2008 = vmatprep.subr.bf16.mxu0 0
    %2009 = vmatpush1.bf16.msra.mxu0 0
    %2010 = vmatprep.mubr.bf16.mxu0 0
    %2011 = vmatmul.mubr.bf16.gmra.mrb[0].mxu0 %v1976
    %v2012 = vpop.f32.mrb[0].mxu0
    %v2013 = vadd.f32 %v803, %v2012
    %v2014 = vpop.f32.mrb[0].mxu0
    %v2015 = vpop.f32.mrb[0].mxu0
    %v2016 = vpop.f32.mrb[0].mxu0
    %2017 = vdwg.mxu0
    %v2018 = vld [vmem:[#allocation2 + $0x7] sm:$0x1]
    %v2019 = vld [vmem:[#allocation3 + $0x8] sm:$0x1]
    %v2020 = vadd.f32 %v2018, %v1966
    %v2021 = vxor.u32 %v2020, 2147483648
    %v2022 = vmul.f32 %v2021, 1.442695
    %v2023 = vpow.pop %v2022
    %v2024 = vadd.f32 %v2023, 1.0
    %v2025 = vrcp.pop %v2024
    %v2026 = vmul.f32 1.0, %v2025
    %2028 = vrot.lane.b32.xlu0 %v1966, 64
    %v2029 = vpop.permute.xlu0 %2028
    %v2031 = vmul.f32 %v2026, %v2029
    %2033 = vrot.lane.b32.xlu0 %v2031, 64
    %v2034 = vpop.permute.xlu0 %2033
    %v2036 = vadd.f32 %v2018, %v2034
    %v2037 = vtanh.pop %v2036
    %v2038 = vsub.f32 1.0, %v2026
    %2040 = vrot.lane.b32.xlu0 %v2037, 96
    %v2041 = vpop.permute.xlu0 %2040
    %v2043 = vmul.f32 %v2038, %v2041
    %v2044 = vmul.f32 %v2026, %v1887
    %v2045 = vadd.f32 %v2043, %v2044
    %v2046 = vadd.f32 %v2019, %v2013
    %v2047 = vxor.u32 %v2046, 2147483648
    %v2048 = vmul.f32 %v2047, 1.442695
    %v2049 = vpow.pop %v2048
    %v2050 = vadd.f32 %v2049, 1.0
    %v2051 = vrcp.pop %v2050
    %v2052 = vmul.f32 1.0, %v2051
    %2054 = vrot.lane.b32.xlu0 %v2013, 64
    %v2055 = vpop.permute.xlu0 %2054
    %v2057 = vmul.f32 %v2052, %v2055
    %2059 = vrot.lane.b32.xlu0 %v2057, 64
    %v2060 = vpop.permute.xlu0 %2059
    %v2062 = vadd.f32 %v2019, %v2060
    %v2063 = vtanh.pop %v2062
    %v2064 = vsub.f32 1.0, %v2052
    %2066 = vrot.lane.b32.xlu0 %v2063, 96
    %v2067 = vpop.permute.xlu0 %2066
    %v2069 = vmul.f32 %v2064, %v2067
    %v2070 = vmul.f32 %v2052, %v1913
    %v2071 = vadd.f32 %v2069, %v2070
    %2073 = vrot.lane.b32.xlu0 %v2045, 96
    %v2074 = vpop.permute.xlu0 %2073
    %2076 = vst.msk [vmem:[#allocation4 + $0x7] sm:$0x1] %vm969, %v2074
    %2078 = vrot.lane.b32.xlu0 %v2071, 96
    %v2079 = vpop.permute.xlu0 %2078
    %2081 = vst.msk [vmem:[#allocation5 + $0x8] sm:$0x1] %vm969, %v2079
    %v2082 = vpack.c.bf16 %v2045, %v2045
    %2084 = vrot.lane.b32.xlu0 %v2082, 96
    %v2085 = vpop.permute.xlu0 %2084
    %v2087 = vsel %vm450, %v2085, 0
    %2089 = vmatprep.subr.bf16.mxu0 0
    %2090 = vmatpush1.bf16.msra.mxu0 %v812
    %2091 = vmatprep.subr.bf16.mxu0 0
    %2092 = vmatpush1.bf16.msra.mxu0 %v813
    %2093 = vmatprep.subr.bf16.mxu0 0
    %2094 = vmatpush1.bf16.msra.mxu0 0
    %2095 = vmatprep.subr.bf16.mxu0 0
    %2096 = vmatpush1.bf16.msra.mxu0 0
    %2097 = vmatprep.subr.bf16.mxu0 0
    %2098 = vmatpush1.bf16.msra.mxu0 0
    %2099 = vmatprep.subr.bf16.mxu0 0
    %2100 = vmatpush1.bf16.msra.mxu0 0
    %2101 = vmatprep.subr.bf16.mxu0 0
    %2102 = vmatpush1.bf16.msra.mxu0 0
    %2103 = vmatprep.subr.bf16.mxu0 0
    %2104 = vmatpush1.bf16.msra.mxu0 0
    %2105 = vmatprep.subr.bf16.mxu0 0
    %2106 = vmatpush1.bf16.msra.mxu0 0
    %2107 = vmatprep.subr.bf16.mxu0 0
    %2108 = vmatpush1.bf16.msra.mxu0 0
    %2109 = vmatprep.subr.bf16.mxu0 0
    %2110 = vmatpush1.bf16.msra.mxu0 0
    %2111 = vmatprep.subr.bf16.mxu0 0
    %2112 = vmatpush1.bf16.msra.mxu0 0
    %2113 = vmatprep.subr.bf16.mxu0 0
    %2114 = vmatpush1.bf16.msra.mxu0 0
    %2115 = vmatprep.subr.bf16.mxu0 0
    %2116 = vmatpush1.bf16.msra.mxu0 0
    %2117 = vmatprep.subr.bf16.mxu0 0
    %2118 = vmatpush1.bf16.msra.mxu0 0
    %2119 = vmatprep.subr.bf16.mxu0 0
    %2120 = vmatpush1.bf16.msra.mxu0 0
    %2121 = vmatprep.mubr.bf16.mxu0 0
    %2122 = vmatmul.mubr.bf16.gmra.mrb[0].mxu0 %v2087
    %v2123 = vpop.f32.mrb[0].mxu0
    %v2124 = vadd.f32 %v802, %v2123
    %v2125 = vpop.f32.mrb[0].mxu0
    %v2126 = vpop.f32.mrb[0].mxu0
    %v2127 = vpop.f32.mrb[0].mxu0
    %2128 = vdwg.mxu0
    %v2129 = vpack.c.bf16 %v2071, %v2071
    %2131 = vrot.lane.b32.xlu0 %v2129, 96
    %v2132 = vpop.permute.xlu0 %2131
    %v2134 = vsel %vm450, %v2132, 0
    %2136 = vmatprep.subr.bf16.mxu0 0
    %2137 = vmatpush1.bf16.msra.mxu0 %v867
    %2138 = vmatprep.subr.bf16.mxu0 0
    %2139 = vmatpush1.bf16.msra.mxu0 %v868
    %2140 = vmatprep.subr.bf16.mxu0 0
    %2141 = vmatpush1.bf16.msra.mxu0 0
    %2142 = vmatprep.subr.bf16.mxu0 0
    %2143 = vmatpush1.bf16.msra.mxu0 0
    %2144 = vmatprep.subr.bf16.mxu0 0
    %2145 = vmatpush1.bf16.msra.mxu0 0
    %2146 = vmatprep.subr.bf16.mxu0 0
    %2147 = vmatpush1.bf16.msra.mxu0 0
    %2148 = vmatprep.subr.bf16.mxu0 0
    %2149 = vmatpush1.bf16.msra.mxu0 0
    %2150 = vmatprep.subr.bf16.mxu0 0
    %2151 = vmatpush1.bf16.msra.mxu0 0
    %2152 = vmatprep.subr.bf16.mxu0 0
    %2153 = vmatpush1.bf16.msra.mxu0 0
    %2154 = vmatprep.subr.bf16.mxu0 0
    %2155 = vmatpush1.bf16.msra.mxu0 0
    %2156 = vmatprep.subr.bf16.mxu0 0
    %2157 = vmatpush1.bf16.msra.mxu0 0
    %2158 = vmatprep.subr.bf16.mxu0 0
    %2159 = vmatpush1.bf16.msra.mxu0 0
    %2160 = vmatprep.subr.bf16.mxu0 0
    %2161 = vmatpush1.bf16.msra.mxu0 0
    %2162 = vmatprep.subr.bf16.mxu0 0
    %2163 = vmatpush1.bf16.msra.mxu0 0
    %2164 = vmatprep.subr.bf16.mxu0 0
    %2165 = vmatpush1.bf16.msra.mxu0 0
    %2166 = vmatprep.subr.bf16.mxu0 0
    %2167 = vmatpush1.bf16.msra.mxu0 0
    %2168 = vmatprep.mubr.bf16.mxu0 0
    %2169 = vmatmul.mubr.bf16.gmra.mrb[0].mxu0 %v2134
    %v2170 = vpop.f32.mrb[0].mxu0
    %v2171 = vadd.f32 %v803, %v2170
    %v2172 = vpop.f32.mrb[0].mxu0
    %v2173 = vpop.f32.mrb[0].mxu0
    %v2174 = vpop.f32.mrb[0].mxu0
    %2175 = vdwg.mxu0
    %v2176 = vld [vmem:[#allocation2 + $0x8] sm:$0x1]
    %v2177 = vld [vmem:[#allocation3 + $0x7] sm:$0x1]
    %v2178 = vadd.f32 %v2176, %v2124
    %v2179 = vxor.u32 %v2178, 2147483648
    %v2180 = vmul.f32 %v2179, 1.442695
    %v2181 = vpow.pop %v2180
    %v2182 = vadd.f32 %v2181, 1.0
    %v2183 = vrcp.pop %v2182
    %v2184 = vmul.f32 1.0, %v2183
    %2186 = vrot.lane.b32.xlu0 %v2124, 64
    %v2187 = vpop.permute.xlu0 %2186
    %v2189 = vmul.f32 %v2184, %v2187
    %2191 = vrot.lane.b32.xlu0 %v2189, 64
    %v2192 = vpop.permute.xlu0 %2191
    %v2194 = vadd.f32 %v2176, %v2192
    %v2195 = vtanh.pop %v2194
    %v2196 = vsub.f32 1.0, %v2184
    %2198 = vrot.lane.b32.xlu0 %v2195, 96
    %v2199 = vpop.permute.xlu0 %2198
    %v2201 = vmul.f32 %v2196, %v2199
    %v2202 = vmul.f32 %v2184, %v2045
    %v2203 = vadd.f32 %v2201, %v2202
    %v2204 = vadd.f32 %v2177, %v2171
    %v2205 = vxor.u32 %v2204, 2147483648
    %v2206 = vmul.f32 %v2205, 1.442695
    %v2207 = vpow.pop %v2206
    %v2208 = vadd.f32 %v2207, 1.0
    %v2209 = vrcp.pop %v2208
    %v2210 = vmul.f32 1.0, %v2209
    %2212 = vrot.lane.b32.xlu0 %v2171, 64
    %v2213 = vpop.permute.xlu0 %2212
    %v2215 = vmul.f32 %v2210, %v2213
    %2217 = vrot.lane.b32.xlu0 %v2215, 64
    %v2218 = vpop.permute.xlu0 %2217
    %v2220 = vadd.f32 %v2177, %v2218
    %v2221 = vtanh.pop %v2220
    %v2222 = vsub.f32 1.0, %v2210
    %2224 = vrot.lane.b32.xlu0 %v2221, 96
    %v2225 = vpop.permute.xlu0 %2224
    %v2227 = vmul.f32 %v2222, %v2225
    %v2228 = vmul.f32 %v2210, %v2071
    %v2229 = vadd.f32 %v2227, %v2228
    %2231 = vrot.lane.b32.xlu0 %v2203, 96
    %v2232 = vpop.permute.xlu0 %2231
    %2234 = vst.msk [vmem:[#allocation4 + $0x8] sm:$0x1] %vm969, %v2232
    %2236 = vrot.lane.b32.xlu0 %v2229, 96
    %v2237 = vpop.permute.xlu0 %2236
    %2239 = vst.msk [vmem:[#allocation5 + $0x7] sm:$0x1] %vm969, %v2237
    %v2240 = vpack.c.bf16 %v2203, %v2203
    %2242 = vrot.lane.b32.xlu0 %v2240, 96
    %v2243 = vpop.permute.xlu0 %2242
    %v2245 = vsel %vm450, %v2243, 0
    %2247 = vmatprep.subr.bf16.mxu0 0
    %2248 = vmatpush1.bf16.msra.mxu0 %v812
    %2249 = vmatprep.subr.bf16.mxu0 0
    %2250 = vmatpush1.bf16.msra.mxu0 %v813
    %2251 = vmatprep.subr.bf16.mxu0 0
    %2252 = vmatpush1.bf16.msra.mxu0 0
    %2253 = vmatprep.subr.bf16.mxu0 0
    %2254 = vmatpush1.bf16.msra.mxu0 0
    %2255 = vmatprep.subr.bf16.mxu0 0
    %2256 = vmatpush1.bf16.msra.mxu0 0
    %2257 = vmatprep.subr.bf16.mxu0 0
    %2258 = vmatpush1.bf16.msra.mxu0 0
    %2259 = vmatprep.subr.bf16.mxu0 0
    %2260 = vmatpush1.bf16.msra.mxu0 0
    %2261 = vmatprep.subr.bf16.mxu0 0
    %2262 = vmatpush1.bf16.msra.mxu0 0
    %2263 = vmatprep.subr.bf16.mxu0 0
    %2264 = vmatpush1.bf16.msra.mxu0 0
    %2265 = vmatprep.subr.bf16.mxu0 0
    %2266 = vmatpush1.bf16.msra.mxu0 0
    %2267 = vmatprep.subr.bf16.mxu0 0
    %2268 = vmatpush1.bf16.msra.mxu0 0
    %2269 = vmatprep.subr.bf16.mxu0 0
    %2270 = vmatpush1.bf16.msra.mxu0 0
    %2271 = vmatprep.subr.bf16.mxu0 0
    %2272 = vmatpush1.bf16.msra.mxu0 0
    %2273 = vmatprep.subr.bf16.mxu0 0
    %2274 = vmatpush1.bf16.msra.mxu0 0
    %2275 = vmatprep.subr.bf16.mxu0 0
    %2276 = vmatpush1.bf16.msra.mxu0 0
    %2277 = vmatprep.subr.bf16.mxu0 0
    %2278 = vmatpush1.bf16.msra.mxu0 0
    %2279 = vmatprep.mubr.bf16.mxu0 0
    %2280 = vmatmul.mubr.bf16.gmra.mrb[0].mxu0 %v2245
    %v2281 = vpop.f32.mrb[0].mxu0
    %v2282 = vadd.f32 %v802, %v2281
    %v2283 = vpop.f32.mrb[0].mxu0
    %v2284 = vpop.f32.mrb[0].mxu0
    %v2285 = vpop.f32.mrb[0].mxu0
    %2286 = vdwg.mxu0
    %v2287 = vpack.c.bf16 %v2229, %v2229
    %2289 = vrot.lane.b32.xlu0 %v2287, 96
    %v2290 = vpop.permute.xlu0 %2289
    %v2292 = vsel %vm450, %v2290, 0
    %2294 = vmatprep.subr.bf16.mxu0 0
    %2295 = vmatpush1.bf16.msra.mxu0 %v867
    %2296 = vmatprep.subr.bf16.mxu0 0
    %2297 = vmatpush1.bf16.msra.mxu0 %v868
    %2298 = vmatprep.subr.bf16.mxu0 0
    %2299 = vmatpush1.bf16.msra.mxu0 0
    %2300 = vmatprep.subr.bf16.mxu0 0
    %2301 = vmatpush1.bf16.msra.mxu0 0
    %2302 = vmatprep.subr.bf16.mxu0 0
    %2303 = vmatpush1.bf16.msra.mxu0 0
    %2304 = vmatprep.subr.bf16.mxu0 0
    %2305 = vmatpush1.bf16.msra.mxu0 0
    %2306 = vmatprep.subr.bf16.mxu0 0
    %2307 = vmatpush1.bf16.msra.mxu0 0
    %2308 = vmatprep.subr.bf16.mxu0 0
    %2309 = vmatpush1.bf16.msra.mxu0 0
    %2310 = vmatprep.subr.bf16.mxu0 0
    %2311 = vmatpush1.bf16.msra.mxu0 0
    %2312 = vmatprep.subr.bf16.mxu0 0
    %2313 = vmatpush1.bf16.msra.mxu0 0
    %2314 = vmatprep.subr.bf16.mxu0 0
    %2315 = vmatpush1.bf16.msra.mxu0 0
    %2316 = vmatprep.subr.bf16.mxu0 0
    %2317 = vmatpush1.bf16.msra.mxu0 0
    %2318 = vmatprep.subr.bf16.mxu0 0
    %2319 = vmatpush1.bf16.msra.mxu0 0
    %2320 = vmatprep.subr.bf16.mxu0 0
    %2321 = vmatpush1.bf16.msra.mxu0 0
    %2322 = vmatprep.subr.bf16.mxu0 0
    %2323 = vmatpush1.bf16.msra.mxu0 0
    %2324 = vmatprep.subr.bf16.mxu0 0
    %2325 = vmatpush1.bf16.msra.mxu0 0
    %2326 = vmatprep.mubr.bf16.mxu0 0
    %2327 = vmatmul.mubr.bf16.gmra.mrb[0].mxu0 %v2292
    %v2328 = vpop.f32.mrb[0].mxu0
    %v2329 = vadd.f32 %v803, %v2328
    %v2330 = vpop.f32.mrb[0].mxu0
    %v2331 = vpop.f32.mrb[0].mxu0
    %v2332 = vpop.f32.mrb[0].mxu0
    %2333 = vdwg.mxu0
    %v2334 = vld [vmem:[#allocation2 + $0x9] sm:$0x1]
    %v2335 = vld [vmem:[#allocation3 + $0x6] sm:$0x1]
    %v2336 = vadd.f32 %v2334, %v2282
    %v2337 = vxor.u32 %v2336, 2147483648
    %v2338 = vmul.f32 %v2337, 1.442695
    %v2339 = vpow.pop %v2338
    %v2340 = vadd.f32 %v2339, 1.0
    %v2341 = vrcp.pop %v2340
    %v2342 = vmul.f32 1.0, %v2341
    %2344 = vrot.lane.b32.xlu0 %v2282, 64
    %v2345 = vpop.permute.xlu0 %2344
    %v2347 = vmul.f32 %v2342, %v2345
    %2349 = vrot.lane.b32.xlu0 %v2347, 64
    %v2350 = vpop.permute.xlu0 %2349
    %v2352 = vadd.f32 %v2334, %v2350
    %v2353 = vtanh.pop %v2352
    %v2354 = vsub.f32 1.0, %v2342
    %2356 = vrot.lane.b32.xlu0 %v2353, 96
    %v2357 = vpop.permute.xlu0 %2356
    %v2359 = vmul.f32 %v2354, %v2357
    %v2360 = vmul.f32 %v2342, %v2203
    %v2361 = vadd.f32 %v2359, %v2360
    %v2362 = vadd.f32 %v2335, %v2329
    %v2363 = vxor.u32 %v2362, 2147483648
    %v2364 = vmul.f32 %v2363, 1.442695
    %v2365 = vpow.pop %v2364
    %v2366 = vadd.f32 %v2365, 1.0
    %v2367 = vrcp.pop %v2366
    %v2368 = vmul.f32 1.0, %v2367
    %2370 = vrot.lane.b32.xlu0 %v2329, 64
    %v2371 = vpop.permute.xlu0 %2370
    %v2373 = vmul.f32 %v2368, %v2371
    %2375 = vrot.lane.b32.xlu0 %v2373, 64
    %v2376 = vpop.permute.xlu0 %2375
    %v2378 = vadd.f32 %v2335, %v2376
    %v2379 = vtanh.pop %v2378
    %v2380 = vsub.f32 1.0, %v2368
    %2382 = vrot.lane.b32.xlu0 %v2379, 96
    %v2383 = vpop.permute.xlu0 %2382
    %v2385 = vmul.f32 %v2380, %v2383
    %v2386 = vmul.f32 %v2368, %v2229
    %v2387 = vadd.f32 %v2385, %v2386
    %2389 = vrot.lane.b32.xlu0 %v2361, 96
    %v2390 = vpop.permute.xlu0 %2389
    %2392 = vst.msk [vmem:[#allocation4 + $0x9] sm:$0x1] %vm969, %v2390
    %2394 = vrot.lane.b32.xlu0 %v2387, 96
    %v2395 = vpop.permute.xlu0 %2394
    %2397 = vst.msk [vmem:[#allocation5 + $0x6] sm:$0x1] %vm969, %v2395
    %v2398 = vpack.c.bf16 %v2361, %v2361
    %2400 = vrot.lane.b32.xlu0 %v2398, 96
    %v2401 = vpop.permute.xlu0 %2400
    %v2403 = vsel %vm450, %v2401, 0
    %2405 = vmatprep.subr.bf16.mxu0 0
    %2406 = vmatpush1.bf16.msra.mxu0 %v812
    %2407 = vmatprep.subr.bf16.mxu0 0
    %2408 = vmatpush1.bf16.msra.mxu0 %v813
    %2409 = vmatprep.subr.bf16.mxu0 0
    %2410 = vmatpush1.bf16.msra.mxu0 0
    %2411 = vmatprep.subr.bf16.mxu0 0
    %2412 = vmatpush1.bf16.msra.mxu0 0
    %2413 = vmatprep.subr.bf16.mxu0 0
    %2414 = vmatpush1.bf16.msra.mxu0 0
    %2415 = vmatprep.subr.bf16.mxu0 0
    %2416 = vmatpush1.bf16.msra.mxu0 0
    %2417 = vmatprep.subr.bf16.mxu0 0
    %2418 = vmatpush1.bf16.msra.mxu0 0
    %2419 = vmatprep.subr.bf16.mxu0 0
    %2420 = vmatpush1.bf16.msra.mxu0 0
    %2421 = vmatprep.subr.bf16.mxu0 0
    %2422 = vmatpush1.bf16.msra.mxu0 0
    %2423 = vmatprep.subr.bf16.mxu0 0
    %2424 = vmatpush1.bf16.msra.mxu0 0
    %2425 = vmatprep.subr.bf16.mxu0 0
    %2426 = vmatpush1.bf16.msra.mxu0 0
    %2427 = vmatprep.subr.bf16.mxu0 0
    %2428 = vmatpush1.bf16.msra.mxu0 0
    %2429 = vmatprep.subr.bf16.mxu0 0
    %2430 = vmatpush1.bf16.msra.mxu0 0
    %2431 = vmatprep.subr.bf16.mxu0 0
    %2432 = vmatpush1.bf16.msra.mxu0 0
    %2433 = vmatprep.subr.bf16.mxu0 0
    %2434 = vmatpush1.bf16.msra.mxu0 0
    %2435 = vmatprep.subr.bf16.mxu0 0
    %2436 = vmatpush1.bf16.msra.mxu0 0
    %2437 = vmatprep.mubr.bf16.mxu0 0
    %2438 = vmatmul.mubr.bf16.gmra.mrb[0].mxu0 %v2403
    %v2439 = vpop.f32.mrb[0].mxu0
    %v2440 = vadd.f32 %v802, %v2439
    %v2441 = vpop.f32.mrb[0].mxu0
    %v2442 = vpop.f32.mrb[0].mxu0
    %v2443 = vpop.f32.mrb[0].mxu0
    %2444 = vdwg.mxu0
    %v2445 = vpack.c.bf16 %v2387, %v2387
    %2447 = vrot.lane.b32.xlu0 %v2445, 96
    %v2448 = vpop.permute.xlu0 %2447
    %v2450 = vsel %vm450, %v2448, 0
    %2452 = vmatprep.subr.bf16.mxu0 0
    %2453 = vmatpush1.bf16.msra.mxu0 %v867
    %2454 = vmatprep.subr.bf16.mxu0 0
    %2455 = vmatpush1.bf16.msra.mxu0 %v868
    %2456 = vmatprep.subr.bf16.mxu0 0
    %2457 = vmatpush1.bf16.msra.mxu0 0
    %2458 = vmatprep.subr.bf16.mxu0 0
    %2459 = vmatpush1.bf16.msra.mxu0 0
    %2460 = vmatprep.subr.bf16.mxu0 0
    %2461 = vmatpush1.bf16.msra.mxu0 0
    %2462 = vmatprep.subr.bf16.mxu0 0
    %2463 = vmatpush1.bf16.msra.mxu0 0
    %2464 = vmatprep.subr.bf16.mxu0 0
    %2465 = vmatpush1.bf16.msra.mxu0 0
    %2466 = vmatprep.subr.bf16.mxu0 0
    %2467 = vmatpush1.bf16.msra.mxu0 0
    %2468 = vmatprep.subr.bf16.mxu0 0
    %2469 = vmatpush1.bf16.msra.mxu0 0
    %2470 = vmatprep.subr.bf16.mxu0 0
    %2471 = vmatpush1.bf16.msra.mxu0 0
    %2472 = vmatprep.subr.bf16.mxu0 0
    %2473 = vmatpush1.bf16.msra.mxu0 0
    %2474 = vmatprep.subr.bf16.mxu0 0
    %2475 = vmatpush1.bf16.msra.mxu0 0
    %2476 = vmatprep.subr.bf16.mxu0 0
    %2477 = vmatpush1.bf16.msra.mxu0 0
    %2478 = vmatprep.subr.bf16.mxu0 0
    %2479 = vmatpush1.bf16.msra.mxu0 0
    %2480 = vmatprep.subr.bf16.mxu0 0
    %2481 = vmatpush1.bf16.msra.mxu0 0
    %2482 = vmatprep.subr.bf16.mxu0 0
    %2483 = vmatpush1.bf16.msra.mxu0 0
    %2484 = vmatprep.mubr.bf16.mxu0 0
    %2485 = vmatmul.mubr.bf16.gmra.mrb[0].mxu0 %v2450
    %v2486 = vpop.f32.mrb[0].mxu0
    %v2487 = vadd.f32 %v803, %v2486
    %v2488 = vpop.f32.mrb[0].mxu0
    %v2489 = vpop.f32.mrb[0].mxu0
    %v2490 = vpop.f32.mrb[0].mxu0
    %2491 = vdwg.mxu0
    %v2492 = vld [vmem:[#allocation2 + $0xa] sm:$0x1]
    %v2493 = vld [vmem:[#allocation3 + $0x5] sm:$0x1]
    %v2494 = vadd.f32 %v2492, %v2440
    %v2495 = vxor.u32 %v2494, 2147483648
    %v2496 = vmul.f32 %v2495, 1.442695
    %v2497 = vpow.pop %v2496
    %v2498 = vadd.f32 %v2497, 1.0
    %v2499 = vrcp.pop %v2498
    %v2500 = vmul.f32 1.0, %v2499
    %2502 = vrot.lane.b32.xlu0 %v2440, 64
    %v2503 = vpop.permute.xlu0 %2502
    %v2505 = vmul.f32 %v2500, %v2503
    %2507 = vrot.lane.b32.xlu0 %v2505, 64
    %v2508 = vpop.permute.xlu0 %2507
    %v2510 = vadd.f32 %v2492, %v2508
    %v2511 = vtanh.pop %v2510
    %v2512 = vsub.f32 1.0, %v2500
    %2514 = vrot.lane.b32.xlu0 %v2511, 96
    %v2515 = vpop.permute.xlu0 %2514
    %v2517 = vmul.f32 %v2512, %v2515
    %v2518 = vmul.f32 %v2500, %v2361
    %v2519 = vadd.f32 %v2517, %v2518
    %v2520 = vadd.f32 %v2493, %v2487
    %v2521 = vxor.u32 %v2520, 2147483648
    %v2522 = vmul.f32 %v2521, 1.442695
    %v2523 = vpow.pop %v2522
    %v2524 = vadd.f32 %v2523, 1.0
    %v2525 = vrcp.pop %v2524
    %v2526 = vmul.f32 1.0, %v2525
    %2528 = vrot.lane.b32.xlu0 %v2487, 64
    %v2529 = vpop.permute.xlu0 %2528
    %v2531 = vmul.f32 %v2526, %v2529
    %2533 = vrot.lane.b32.xlu0 %v2531, 64
    %v2534 = vpop.permute.xlu0 %2533
    %v2536 = vadd.f32 %v2493, %v2534
    %v2537 = vtanh.pop %v2536
    %v2538 = vsub.f32 1.0, %v2526
    %2540 = vrot.lane.b32.xlu0 %v2537, 96
    %v2541 = vpop.permute.xlu0 %2540
    %v2543 = vmul.f32 %v2538, %v2541
    %v2544 = vmul.f32 %v2526, %v2387
    %v2545 = vadd.f32 %v2543, %v2544
    %2547 = vrot.lane.b32.xlu0 %v2519, 96
    %v2548 = vpop.permute.xlu0 %2547
    %2550 = vst.msk [vmem:[#allocation4 + $0xa] sm:$0x1] %vm969, %v2548
    %2552 = vrot.lane.b32.xlu0 %v2545, 96
    %v2553 = vpop.permute.xlu0 %2552
    %2555 = vst.msk [vmem:[#allocation5 + $0x5] sm:$0x1] %vm969, %v2553
    %v2556 = vpack.c.bf16 %v2519, %v2519
    %2558 = vrot.lane.b32.xlu0 %v2556, 96
    %v2559 = vpop.permute.xlu0 %2558
    %v2561 = vsel %vm450, %v2559, 0
    %2563 = vmatprep.subr.bf16.mxu0 0
    %2564 = vmatpush1.bf16.msra.mxu0 %v812
    %2565 = vmatprep.subr.bf16.mxu0 0
    %2566 = vmatpush1.bf16.msra.mxu0 %v813
    %2567 = vmatprep.subr.bf16.mxu0 0
    %2568 = vmatpush1.bf16.msra.mxu0 0
    %2569 = vmatprep.subr.bf16.mxu0 0
    %2570 = vmatpush1.bf16.msra.mxu0 0
    %2571 = vmatprep.subr.bf16.mxu0 0
    %2572 = vmatpush1.bf16.msra.mxu0 0
    %2573 = vmatprep.subr.bf16.mxu0 0
    %2574 = vmatpush1.bf16.msra.mxu0 0
    %2575 = vmatprep.subr.bf16.mxu0 0
    %2576 = vmatpush1.bf16.msra.mxu0 0
    %2577 = vmatprep.subr.bf16.mxu0 0
    %2578 = vmatpush1.bf16.msra.mxu0 0
    %2579 = vmatprep.subr.bf16.mxu0 0
    %2580 = vmatpush1.bf16.msra.mxu0 0
    %2581 = vmatprep.subr.bf16.mxu0 0
    %2582 = vmatpush1.bf16.msra.mxu0 0
    %2583 = vmatprep.subr.bf16.mxu0 0
    %2584 = vmatpush1.bf16.msra.mxu0 0
    %2585 = vmatprep.subr.bf16.mxu0 0
    %2586 = vmatpush1.bf16.msra.mxu0 0
    %2587 = vmatprep.subr.bf16.mxu0 0
    %2588 = vmatpush1.bf16.msra.mxu0 0
    %2589 = vmatprep.subr.bf16.mxu0 0
    %2590 = vmatpush1.bf16.msra.mxu0 0
    %2591 = vmatprep.subr.bf16.mxu0 0
    %2592 = vmatpush1.bf16.msra.mxu0 0
    %2593 = vmatprep.subr.bf16.mxu0 0
    %2594 = vmatpush1.bf16.msra.mxu0 0
    %2595 = vmatprep.mubr.bf16.mxu0 0
    %2596 = vmatmul.mubr.bf16.gmra.mrb[0].mxu0 %v2561
    %v2597 = vpop.f32.mrb[0].mxu0
    %v2598 = vadd.f32 %v802, %v2597
    %v2599 = vpop.f32.mrb[0].mxu0
    %v2600 = vpop.f32.mrb[0].mxu0
    %v2601 = vpop.f32.mrb[0].mxu0
    %2602 = vdwg.mxu0
    %v2603 = vpack.c.bf16 %v2545, %v2545
    %2605 = vrot.lane.b32.xlu0 %v2603, 96
    %v2606 = vpop.permute.xlu0 %2605
    %v2608 = vsel %vm450, %v2606, 0
    %2610 = vmatprep.subr.bf16.mxu0 0
    %2611 = vmatpush1.bf16.msra.mxu0 %v867
    %2612 = vmatprep.subr.bf16.mxu0 0
    %2613 = vmatpush1.bf16.msra.mxu0 %v868
    %2614 = vmatprep.subr.bf16.mxu0 0
    %2615 = vmatpush1.bf16.msra.mxu0 0
    %2616 = vmatprep.subr.bf16.mxu0 0
    %2617 = vmatpush1.bf16.msra.mxu0 0
    %2618 = vmatprep.subr.bf16.mxu0 0
    %2619 = vmatpush1.bf16.msra.mxu0 0
    %2620 = vmatprep.subr.bf16.mxu0 0
    %2621 = vmatpush1.bf16.msra.mxu0 0
    %2622 = vmatprep.subr.bf16.mxu0 0
    %2623 = vmatpush1.bf16.msra.mxu0 0
    %2624 = vmatprep.subr.bf16.mxu0 0
    %2625 = vmatpush1.bf16.msra.mxu0 0
    %2626 = vmatprep.subr.bf16.mxu0 0
    %2627 = vmatpush1.bf16.msra.mxu0 0
    %2628 = vmatprep.subr.bf16.mxu0 0
    %2629 = vmatpush1.bf16.msra.mxu0 0
    %2630 = vmatprep.subr.bf16.mxu0 0
    %2631 = vmatpush1.bf16.msra.mxu0 0
    %2632 = vmatprep.subr.bf16.mxu0 0
    %2633 = vmatpush1.bf16.msra.mxu0 0
    %2634 = vmatprep.subr.bf16.mxu0 0
    %2635 = vmatpush1.bf16.msra.mxu0 0
    %2636 = vmatprep.subr.bf16.mxu0 0
    %2637 = vmatpush1.bf16.msra.mxu0 0
    %2638 = vmatprep.subr.bf16.mxu0 0
    %2639 = vmatpush1.bf16.msra.mxu0 0
    %2640 = vmatprep.subr.bf16.mxu0 0
    %2641 = vmatpush1.bf16.msra.mxu0 0
    %2642 = vmatprep.mubr.bf16.mxu0 0
    %2643 = vmatmul.mubr.bf16.gmra.mrb[0].mxu0 %v2608
    %v2644 = vpop.f32.mrb[0].mxu0
    %v2645 = vadd.f32 %v803, %v2644
    %v2646 = vpop.f32.mrb[0].mxu0
    %v2647 = vpop.f32.mrb[0].mxu0
    %v2648 = vpop.f32.mrb[0].mxu0
    %2649 = vdwg.mxu0
    %v2650 = vld [vmem:[#allocation2 + $0xb] sm:$0x1]
    %v2651 = vld [vmem:[#allocation3 + $0x4] sm:$0x1]
    %v2652 = vadd.f32 %v2650, %v2598
    %v2653 = vxor.u32 %v2652, 2147483648
    %v2654 = vmul.f32 %v2653, 1.442695
    %v2655 = vpow.pop %v2654
    %v2656 = vadd.f32 %v2655, 1.0
    %v2657 = vrcp.pop %v2656
    %v2658 = vmul.f32 1.0, %v2657
    %2660 = vrot.lane.b32.xlu0 %v2598, 64
    %v2661 = vpop.permute.xlu0 %2660
    %v2663 = vmul.f32 %v2658, %v2661
    %2665 = vrot.lane.b32.xlu0 %v2663, 64
    %v2666 = vpop.permute.xlu0 %2665
    %v2668 = vadd.f32 %v2650, %v2666
    %v2669 = vtanh.pop %v2668
    %v2670 = vsub.f32 1.0, %v2658
    %2672 = vrot.lane.b32.xlu0 %v2669, 96
    %v2673 = vpop.permute.xlu0 %2672
    %v2675 = vmul.f32 %v2670, %v2673
    %v2676 = vmul.f32 %v2658, %v2519
    %v2677 = vadd.f32 %v2675, %v2676
    %v2678 = vadd.f32 %v2651, %v2645
    %v2679 = vxor.u32 %v2678, 2147483648
    %v2680 = vmul.f32 %v2679, 1.442695
    %v2681 = vpow.pop %v2680
    %v2682 = vadd.f32 %v2681, 1.0
    %v2683 = vrcp.pop %v2682
    %v2684 = vmul.f32 1.0, %v2683
    %2686 = vrot.lane.b32.xlu0 %v2645, 64
    %v2687 = vpop.permute.xlu0 %2686
    %v2689 = vmul.f32 %v2684, %v2687
    %2691 = vrot.lane.b32.xlu0 %v2689, 64
    %v2692 = vpop.permute.xlu0 %2691
    %v2694 = vadd.f32 %v2651, %v2692
    %v2695 = vtanh.pop %v2694
    %v2696 = vsub.f32 1.0, %v2684
    %2698 = vrot.lane.b32.xlu0 %v2695, 96
    %v2699 = vpop.permute.xlu0 %2698
    %v2701 = vmul.f32 %v2696, %v2699
    %v2702 = vmul.f32 %v2684, %v2545
    %v2703 = vadd.f32 %v2701, %v2702
    %2705 = vrot.lane.b32.xlu0 %v2677, 96
    %v2706 = vpop.permute.xlu0 %2705
    %2708 = vst.msk [vmem:[#allocation4 + $0xb] sm:$0x1] %vm969, %v2706
    %2710 = vrot.lane.b32.xlu0 %v2703, 96
    %v2711 = vpop.permute.xlu0 %2710
    %2713 = vst.msk [vmem:[#allocation5 + $0x4] sm:$0x1] %vm969, %v2711
    %v2714 = vpack.c.bf16 %v2677, %v2677
    %2716 = vrot.lane.b32.xlu0 %v2714, 96
    %v2717 = vpop.permute.xlu0 %2716
    %v2719 = vsel %vm450, %v2717, 0
    %2721 = vmatprep.subr.bf16.mxu0 0
    %2722 = vmatpush1.bf16.msra.mxu0 %v812
    %2723 = vmatprep.subr.bf16.mxu0 0
    %2724 = vmatpush1.bf16.msra.mxu0 %v813
    %2725 = vmatprep.subr.bf16.mxu0 0
    %2726 = vmatpush1.bf16.msra.mxu0 0
    %2727 = vmatprep.subr.bf16.mxu0 0
    %2728 = vmatpush1.bf16.msra.mxu0 0
    %2729 = vmatprep.subr.bf16.mxu0 0
    %2730 = vmatpush1.bf16.msra.mxu0 0
    %2731 = vmatprep.subr.bf16.mxu0 0
    %2732 = vmatpush1.bf16.msra.mxu0 0
    %2733 = vmatprep.subr.bf16.mxu0 0
    %2734 = vmatpush1.bf16.msra.mxu0 0
    %2735 = vmatprep.subr.bf16.mxu0 0
    %2736 = vmatpush1.bf16.msra.mxu0 0
    %2737 = vmatprep.subr.bf16.mxu0 0
    %2738 = vmatpush1.bf16.msra.mxu0 0
    %2739 = vmatprep.subr.bf16.mxu0 0
    %2740 = vmatpush1.bf16.msra.mxu0 0
    %2741 = vmatprep.subr.bf16.mxu0 0
    %2742 = vmatpush1.bf16.msra.mxu0 0
    %2743 = vmatprep.subr.bf16.mxu0 0
    %2744 = vmatpush1.bf16.msra.mxu0 0
    %2745 = vmatprep.subr.bf16.mxu0 0
    %2746 = vmatpush1.bf16.msra.mxu0 0
    %2747 = vmatprep.subr.bf16.mxu0 0
    %2748 = vmatpush1.bf16.msra.mxu0 0
    %2749 = vmatprep.subr.bf16.mxu0 0
    %2750 = vmatpush1.bf16.msra.mxu0 0
    %2751 = vmatprep.subr.bf16.mxu0 0
    %2752 = vmatpush1.bf16.msra.mxu0 0
    %2753 = vmatprep.mubr.bf16.mxu0 0
    %2754 = vmatmul.mubr.bf16.gmra.mrb[0].mxu0 %v2719
    %v2755 = vpop.f32.mrb[0].mxu0
    %v2756 = vadd.f32 %v802, %v2755
    %v2757 = vpop.f32.mrb[0].mxu0
    %v2758 = vpop.f32.mrb[0].mxu0
    %v2759 = vpop.f32.mrb[0].mxu0
    %2760 = vdwg.mxu0
    %v2761 = vpack.c.bf16 %v2703, %v2703
    %2763 = vrot.lane.b32.xlu0 %v2761, 96
    %v2764 = vpop.permute.xlu0 %2763
    %v2766 = vsel %vm450, %v2764, 0
    %2768 = vmatprep.subr.bf16.mxu0 0
    %2769 = vmatpush1.bf16.msra.mxu0 %v867
    %2770 = vmatprep.subr.bf16.mxu0 0
    %2771 = vmatpush1.bf16.msra.mxu0 %v868
    %2772 = vmatprep.subr.bf16.mxu0 0
    %2773 = vmatpush1.bf16.msra.mxu0 0
    %2774 = vmatprep.subr.bf16.mxu0 0
    %2775 = vmatpush1.bf16.msra.mxu0 0
    %2776 = vmatprep.subr.bf16.mxu0 0
    %2777 = vmatpush1.bf16.msra.mxu0 0
    %2778 = vmatprep.subr.bf16.mxu0 0
    %2779 = vmatpush1.bf16.msra.mxu0 0
    %2780 = vmatprep.subr.bf16.mxu0 0
    %2781 = vmatpush1.bf16.msra.mxu0 0
    %2782 = vmatprep.subr.bf16.mxu0 0
    %2783 = vmatpush1.bf16.msra.mxu0 0
    %2784 = vmatprep.subr.bf16.mxu0 0
    %2785 = vmatpush1.bf16.msra.mxu0 0
    %2786 = vmatprep.subr.bf16.mxu0 0
    %2787 = vmatpush1.bf16.msra.mxu0 0
    %2788 = vmatprep.subr.bf16.mxu0 0
    %2789 = vmatpush1.bf16.msra.mxu0 0
    %2790 = vmatprep.subr.bf16.mxu0 0
    %2791 = vmatpush1.bf16.msra.mxu0 0
    %2792 = vmatprep.subr.bf16.mxu0 0
    %2793 = vmatpush1.bf16.msra.mxu0 0
    %2794 = vmatprep.subr.bf16.mxu0 0
    %2795 = vmatpush1.bf16.msra.mxu0 0
    %2796 = vmatprep.subr.bf16.mxu0 0
    %2797 = vmatpush1.bf16.msra.mxu0 0
    %2798 = vmatprep.subr.bf16.mxu0 0
    %2799 = vmatpush1.bf16.msra.mxu0 0
    %2800 = vmatprep.mubr.bf16.mxu0 0
    %2801 = vmatmul.mubr.bf16.gmra.mrb[0].mxu0 %v2766
    %v2802 = vpop.f32.mrb[0].mxu0
    %v2803 = vadd.f32 %v803, %v2802
    %v2804 = vpop.f32.mrb[0].mxu0
    %v2805 = vpop.f32.mrb[0].mxu0
    %v2806 = vpop.f32.mrb[0].mxu0
    %2807 = vdwg.mxu0
    %v2808 = vld [vmem:[#allocation2 + $0xc] sm:$0x1]
    %v2809 = vld [vmem:[#allocation3 + $0x3] sm:$0x1]
    %v2810 = vadd.f32 %v2808, %v2756
    %v2811 = vxor.u32 %v2810, 2147483648
    %v2812 = vmul.f32 %v2811, 1.442695
    %v2813 = vpow.pop %v2812
    %v2814 = vadd.f32 %v2813, 1.0
    %v2815 = vrcp.pop %v2814
    %v2816 = vmul.f32 1.0, %v2815
    %2818 = vrot.lane.b32.xlu0 %v2756, 64
    %v2819 = vpop.permute.xlu0 %2818
    %v2821 = vmul.f32 %v2816, %v2819
    %2823 = vrot.lane.b32.xlu0 %v2821, 64
    %v2824 = vpop.permute.xlu0 %2823
    %v2826 = vadd.f32 %v2808, %v2824
    %v2827 = vtanh.pop %v2826
    %v2828 = vsub.f32 1.0, %v2816
    %2830 = vrot.lane.b32.xlu0 %v2827, 96
    %v2831 = vpop.permute.xlu0 %2830
    %v2833 = vmul.f32 %v2828, %v2831
    %v2834 = vmul.f32 %v2816, %v2677
    %v2835 = vadd.f32 %v2833, %v2834
    %v2836 = vadd.f32 %v2809, %v2803
    %v2837 = vxor.u32 %v2836, 2147483648
    %v2838 = vmul.f32 %v2837, 1.442695
    %v2839 = vpow.pop %v2838
    %v2840 = vadd.f32 %v2839, 1.0
    %v2841 = vrcp.pop %v2840
    %v2842 = vmul.f32 1.0, %v2841
    %2844 = vrot.lane.b32.xlu0 %v2803, 64
    %v2845 = vpop.permute.xlu0 %2844
    %v2847 = vmul.f32 %v2842, %v2845
    %2849 = vrot.lane.b32.xlu0 %v2847, 64
    %v2850 = vpop.permute.xlu0 %2849
    %v2852 = vadd.f32 %v2809, %v2850
    %v2853 = vtanh.pop %v2852
    %v2854 = vsub.f32 1.0, %v2842
    %2856 = vrot.lane.b32.xlu0 %v2853, 96
    %v2857 = vpop.permute.xlu0 %2856
    %v2859 = vmul.f32 %v2854, %v2857
    %v2860 = vmul.f32 %v2842, %v2703
    %v2861 = vadd.f32 %v2859, %v2860
    %2863 = vrot.lane.b32.xlu0 %v2835, 96
    %v2864 = vpop.permute.xlu0 %2863
    %2866 = vst.msk [vmem:[#allocation4 + $0xc] sm:$0x1] %vm969, %v2864
    %2868 = vrot.lane.b32.xlu0 %v2861, 96
    %v2869 = vpop.permute.xlu0 %2868
    %2871 = vst.msk [vmem:[#allocation5 + $0x3] sm:$0x1] %vm969, %v2869
    %v2872 = vpack.c.bf16 %v2835, %v2835
    %2874 = vrot.lane.b32.xlu0 %v2872, 96
    %v2875 = vpop.permute.xlu0 %2874
    %v2877 = vsel %vm450, %v2875, 0
    %2879 = vmatprep.subr.bf16.mxu0 0
    %2880 = vmatpush1.bf16.msra.mxu0 %v812
    %2881 = vmatprep.subr.bf16.mxu0 0
    %2882 = vmatpush1.bf16.msra.mxu0 %v813
    %2883 = vmatprep.subr.bf16.mxu0 0
    %2884 = vmatpush1.bf16.msra.mxu0 0
    %2885 = vmatprep.subr.bf16.mxu0 0
    %2886 = vmatpush1.bf16.msra.mxu0 0
    %2887 = vmatprep.subr.bf16.mxu0 0
    %2888 = vmatpush1.bf16.msra.mxu0 0
    %2889 = vmatprep.subr.bf16.mxu0 0
    %2890 = vmatpush1.bf16.msra.mxu0 0
    %2891 = vmatprep.subr.bf16.mxu0 0
    %2892 = vmatpush1.bf16.msra.mxu0 0
    %2893 = vmatprep.subr.bf16.mxu0 0
    %2894 = vmatpush1.bf16.msra.mxu0 0
    %2895 = vmatprep.subr.bf16.mxu0 0
    %2896 = vmatpush1.bf16.msra.mxu0 0
    %2897 = vmatprep.subr.bf16.mxu0 0
    %2898 = vmatpush1.bf16.msra.mxu0 0
    %2899 = vmatprep.subr.bf16.mxu0 0
    %2900 = vmatpush1.bf16.msra.mxu0 0
    %2901 = vmatprep.subr.bf16.mxu0 0
    %2902 = vmatpush1.bf16.msra.mxu0 0
    %2903 = vmatprep.subr.bf16.mxu0 0
    %2904 = vmatpush1.bf16.msra.mxu0 0
    %2905 = vmatprep.subr.bf16.mxu0 0
    %2906 = vmatpush1.bf16.msra.mxu0 0
    %2907 = vmatprep.subr.bf16.mxu0 0
    %2908 = vmatpush1.bf16.msra.mxu0 0
    %2909 = vmatprep.subr.bf16.mxu0 0
    %2910 = vmatpush1.bf16.msra.mxu0 0
    %2911 = vmatprep.mubr.bf16.mxu0 0
    %2912 = vmatmul.mubr.bf16.gmra.mrb[0].mxu0 %v2877
    %v2913 = vpop.f32.mrb[0].mxu0
    %v2914 = vadd.f32 %v802, %v2913
    %v2915 = vpop.f32.mrb[0].mxu0
    %v2916 = vpop.f32.mrb[0].mxu0
    %v2917 = vpop.f32.mrb[0].mxu0
    %2918 = vdwg.mxu0
    %v2919 = vpack.c.bf16 %v2861, %v2861
    %2921 = vrot.lane.b32.xlu0 %v2919, 96
    %v2922 = vpop.permute.xlu0 %2921
    %v2924 = vsel %vm450, %v2922, 0
    %2926 = vmatprep.subr.bf16.mxu0 0
    %2927 = vmatpush1.bf16.msra.mxu0 %v867
    %2928 = vmatprep.subr.bf16.mxu0 0
    %2929 = vmatpush1.bf16.msra.mxu0 %v868
    %2930 = vmatprep.subr.bf16.mxu0 0
    %2931 = vmatpush1.bf16.msra.mxu0 0
    %2932 = vmatprep.subr.bf16.mxu0 0
    %2933 = vmatpush1.bf16.msra.mxu0 0
    %2934 = vmatprep.subr.bf16.mxu0 0
    %2935 = vmatpush1.bf16.msra.mxu0 0
    %2936 = vmatprep.subr.bf16.mxu0 0
    %2937 = vmatpush1.bf16.msra.mxu0 0
    %2938 = vmatprep.subr.bf16.mxu0 0
    %2939 = vmatpush1.bf16.msra.mxu0 0
    %2940 = vmatprep.subr.bf16.mxu0 0
    %2941 = vmatpush1.bf16.msra.mxu0 0
    %2942 = vmatprep.subr.bf16.mxu0 0
    %2943 = vmatpush1.bf16.msra.mxu0 0
    %2944 = vmatprep.subr.bf16.mxu0 0
    %2945 = vmatpush1.bf16.msra.mxu0 0
    %2946 = vmatprep.subr.bf16.mxu0 0
    %2947 = vmatpush1.bf16.msra.mxu0 0
    %2948 = vmatprep.subr.bf16.mxu0 0
    %2949 = vmatpush1.bf16.msra.mxu0 0
    %2950 = vmatprep.subr.bf16.mxu0 0
    %2951 = vmatpush1.bf16.msra.mxu0 0
    %2952 = vmatprep.subr.bf16.mxu0 0
    %2953 = vmatpush1.bf16.msra.mxu0 0
    %2954 = vmatprep.subr.bf16.mxu0 0
    %2955 = vmatpush1.bf16.msra.mxu0 0
    %2956 = vmatprep.subr.bf16.mxu0 0
    %2957 = vmatpush1.bf16.msra.mxu0 0
    %2958 = vmatprep.mubr.bf16.mxu0 0
    %2959 = vmatmul.mubr.bf16.gmra.mrb[0].mxu0 %v2924
    %v2960 = vpop.f32.mrb[0].mxu0
    %v2961 = vadd.f32 %v803, %v2960
    %v2962 = vpop.f32.mrb[0].mxu0
    %v2963 = vpop.f32.mrb[0].mxu0
    %v2964 = vpop.f32.mrb[0].mxu0
    %2965 = vdwg.mxu0
    %v2966 = vld [vmem:[#allocation2 + $0xd] sm:$0x1]
    %v2967 = vld [vmem:[#allocation3 + $0x2] sm:$0x1]
    %v2968 = vadd.f32 %v2966, %v2914
    %v2969 = vxor.u32 %v2968, 2147483648
    %v2970 = vmul.f32 %v2969, 1.442695
    %v2971 = vpow.pop %v2970
    %v2972 = vadd.f32 %v2971, 1.0
    %v2973 = vrcp.pop %v2972
    %v2974 = vmul.f32 1.0, %v2973
    %2976 = vrot.lane.b32.xlu0 %v2914, 64
    %v2977 = vpop.permute.xlu0 %2976
    %v2979 = vmul.f32 %v2974, %v2977
    %2981 = vrot.lane.b32.xlu0 %v2979, 64
    %v2982 = vpop.permute.xlu0 %2981
    %v2984 = vadd.f32 %v2966, %v2982
    %v2985 = vtanh.pop %v2984
    %v2986 = vsub.f32 1.0, %v2974
    %2988 = vrot.lane.b32.xlu0 %v2985, 96
    %v2989 = vpop.permute.xlu0 %2988
    %v2991 = vmul.f32 %v2986, %v2989
    %v2992 = vmul.f32 %v2974, %v2835
    %v2993 = vadd.f32 %v2991, %v2992
    %v2994 = vadd.f32 %v2967, %v2961
    %v2995 = vxor.u32 %v2994, 2147483648
    %v2996 = vmul.f32 %v2995, 1.442695
    %v2997 = vpow.pop %v2996
    %v2998 = vadd.f32 %v2997, 1.0
    %v2999 = vrcp.pop %v2998
    %v3000 = vmul.f32 1.0, %v2999
    %3002 = vrot.lane.b32.xlu0 %v2961, 64
    %v3003 = vpop.permute.xlu0 %3002
    %v3005 = vmul.f32 %v3000, %v3003
    %3007 = vrot.lane.b32.xlu0 %v3005, 64
    %v3008 = vpop.permute.xlu0 %3007
    %v3010 = vadd.f32 %v2967, %v3008
    %v3011 = vtanh.pop %v3010
    %v3012 = vsub.f32 1.0, %v3000
    %3014 = vrot.lane.b32.xlu0 %v3011, 96
    %v3015 = vpop.permute.xlu0 %3014
    %v3017 = vmul.f32 %v3012, %v3015
    %v3018 = vmul.f32 %v3000, %v2861
    %v3019 = vadd.f32 %v3017, %v3018
    %3021 = vrot.lane.b32.xlu0 %v2993, 96
    %v3022 = vpop.permute.xlu0 %3021
    %3024 = vst.msk [vmem:[#allocation4 + $0xd] sm:$0x1] %vm969, %v3022
    %3026 = vrot.lane.b32.xlu0 %v3019, 96
    %v3027 = vpop.permute.xlu0 %3026
    %3029 = vst.msk [vmem:[#allocation5 + $0x2] sm:$0x1] %vm969, %v3027
    %v3030 = vpack.c.bf16 %v2993, %v2993
    %3032 = vrot.lane.b32.xlu0 %v3030, 96
    %v3033 = vpop.permute.xlu0 %3032
    %v3035 = vsel %vm450, %v3033, 0
    %3037 = vmatprep.subr.bf16.mxu0 0
    %3038 = vmatpush1.bf16.msra.mxu0 %v812
    %3039 = vmatprep.subr.bf16.mxu0 0
    %3040 = vmatpush1.bf16.msra.mxu0 %v813
    %3041 = vmatprep.subr.bf16.mxu0 0
    %3042 = vmatpush1.bf16.msra.mxu0 0
    %3043 = vmatprep.subr.bf16.mxu0 0
    %3044 = vmatpush1.bf16.msra.mxu0 0
    %3045 = vmatprep.subr.bf16.mxu0 0
    %3046 = vmatpush1.bf16.msra.mxu0 0
    %3047 = vmatprep.subr.bf16.mxu0 0
    %3048 = vmatpush1.bf16.msra.mxu0 0
    %3049 = vmatprep.subr.bf16.mxu0 0
    %3050 = vmatpush1.bf16.msra.mxu0 0
    %3051 = vmatprep.subr.bf16.mxu0 0
    %3052 = vmatpush1.bf16.msra.mxu0 0
    %3053 = vmatprep.subr.bf16.mxu0 0
    %3054 = vmatpush1.bf16.msra.mxu0 0
    %3055 = vmatprep.subr.bf16.mxu0 0
    %3056 = vmatpush1.bf16.msra.mxu0 0
    %3057 = vmatprep.subr.bf16.mxu0 0
    %3058 = vmatpush1.bf16.msra.mxu0 0
    %3059 = vmatprep.subr.bf16.mxu0 0
    %3060 = vmatpush1.bf16.msra.mxu0 0
    %3061 = vmatprep.subr.bf16.mxu0 0
    %3062 = vmatpush1.bf16.msra.mxu0 0
    %3063 = vmatprep.subr.bf16.mxu0 0
    %3064 = vmatpush1.bf16.msra.mxu0 0
    %3065 = vmatprep.subr.bf16.mxu0 0
    %3066 = vmatpush1.bf16.msra.mxu0 0
    %3067 = vmatprep.subr.bf16.mxu0 0
    %3068 = vmatpush1.bf16.msra.mxu0 0
    %3069 = vmatprep.mubr.bf16.mxu0 0
    %3070 = vmatmul.mubr.bf16.gmra.mrb[0].mxu0 %v3035
    %v3071 = vpop.f32.mrb[0].mxu0
    %v3072 = vadd.f32 %v802, %v3071
    %v3073 = vpop.f32.mrb[0].mxu0
    %v3074 = vpop.f32.mrb[0].mxu0
    %v3075 = vpop.f32.mrb[0].mxu0
    %3076 = vdwg.mxu0
    %v3077 = vpack.c.bf16 %v3019, %v3019
    %3079 = vrot.lane.b32.xlu0 %v3077, 96
    %v3080 = vpop.permute.xlu0 %3079
    %v3082 = vsel %vm450, %v3080, 0
    %3084 = vmatprep.subr.bf16.mxu0 0
    %3085 = vmatpush1.bf16.msra.mxu0 %v867
    %3086 = vmatprep.subr.bf16.mxu0 0
    %3087 = vmatpush1.bf16.msra.mxu0 %v868
    %3088 = vmatprep.subr.bf16.mxu0 0
    %3089 = vmatpush1.bf16.msra.mxu0 0
    %3090 = vmatprep.subr.bf16.mxu0 0
    %3091 = vmatpush1.bf16.msra.mxu0 0
    %3092 = vmatprep.subr.bf16.mxu0 0
    %3093 = vmatpush1.bf16.msra.mxu0 0
    %3094 = vmatprep.subr.bf16.mxu0 0
    %3095 = vmatpush1.bf16.msra.mxu0 0
    %3096 = vmatprep.subr.bf16.mxu0 0
    %3097 = vmatpush1.bf16.msra.mxu0 0
    %3098 = vmatprep.subr.bf16.mxu0 0
    %3099 = vmatpush1.bf16.msra.mxu0 0
    %3100 = vmatprep.subr.bf16.mxu0 0
    %3101 = vmatpush1.bf16.msra.mxu0 0
    %3102 = vmatprep.subr.bf16.mxu0 0
    %3103 = vmatpush1.bf16.msra.mxu0 0
    %3104 = vmatprep.subr.bf16.mxu0 0
    %3105 = vmatpush1.bf16.msra.mxu0 0
    %3106 = vmatprep.subr.bf16.mxu0 0
    %3107 = vmatpush1.bf16.msra.mxu0 0
    %3108 = vmatprep.subr.bf16.mxu0 0
    %3109 = vmatpush1.bf16.msra.mxu0 0
    %3110 = vmatprep.subr.bf16.mxu0 0
    %3111 = vmatpush1.bf16.msra.mxu0 0
    %3112 = vmatprep.subr.bf16.mxu0 0
    %3113 = vmatpush1.bf16.msra.mxu0 0
    %3114 = vmatprep.subr.bf16.mxu0 0
    %3115 = vmatpush1.bf16.msra.mxu0 0
    %3116 = vmatprep.mubr.bf16.mxu0 0
    %3117 = vmatmul.mubr.bf16.gmra.mrb[0].mxu0 %v3082
    %v3118 = vpop.f32.mrb[0].mxu0
    %v3119 = vadd.f32 %v803, %v3118
    %v3120 = vpop.f32.mrb[0].mxu0
    %v3121 = vpop.f32.mrb[0].mxu0
    %v3122 = vpop.f32.mrb[0].mxu0
    %3123 = vdwg.mxu0
    %v3124 = vld [vmem:[#allocation2 + $0xe] sm:$0x1]
    %v3125 = vld [vmem:[#allocation3 + $0x1] sm:$0x1]
    %v3126 = vadd.f32 %v3124, %v3072
    %v3127 = vxor.u32 %v3126, 2147483648
    %v3128 = vmul.f32 %v3127, 1.442695
    %v3129 = vpow.pop %v3128
    %v3130 = vadd.f32 %v3129, 1.0
    %v3131 = vrcp.pop %v3130
    %v3132 = vmul.f32 1.0, %v3131
    %3134 = vrot.lane.b32.xlu0 %v3072, 64
    %v3135 = vpop.permute.xlu0 %3134
    %v3137 = vmul.f32 %v3132, %v3135
    %3139 = vrot.lane.b32.xlu0 %v3137, 64
    %v3140 = vpop.permute.xlu0 %3139
    %v3142 = vadd.f32 %v3124, %v3140
    %v3143 = vtanh.pop %v3142
    %v3144 = vsub.f32 1.0, %v3132
    %3146 = vrot.lane.b32.xlu0 %v3143, 96
    %v3147 = vpop.permute.xlu0 %3146
    %v3149 = vmul.f32 %v3144, %v3147
    %v3150 = vmul.f32 %v3132, %v2993
    %v3151 = vadd.f32 %v3149, %v3150
    %v3152 = vadd.f32 %v3125, %v3119
    %v3153 = vxor.u32 %v3152, 2147483648
    %v3154 = vmul.f32 %v3153, 1.442695
    %v3155 = vpow.pop %v3154
    %v3156 = vadd.f32 %v3155, 1.0
    %v3157 = vrcp.pop %v3156
    %v3158 = vmul.f32 1.0, %v3157
    %3160 = vrot.lane.b32.xlu0 %v3119, 64
    %v3161 = vpop.permute.xlu0 %3160
    %v3163 = vmul.f32 %v3158, %v3161
    %3165 = vrot.lane.b32.xlu0 %v3163, 64
    %v3166 = vpop.permute.xlu0 %3165
    %v3168 = vadd.f32 %v3125, %v3166
    %v3169 = vtanh.pop %v3168
    %v3170 = vsub.f32 1.0, %v3158
    %3172 = vrot.lane.b32.xlu0 %v3169, 96
    %v3173 = vpop.permute.xlu0 %3172
    %v3175 = vmul.f32 %v3170, %v3173
    %v3176 = vmul.f32 %v3158, %v3019
    %v3177 = vadd.f32 %v3175, %v3176
    %3179 = vrot.lane.b32.xlu0 %v3151, 96
    %v3180 = vpop.permute.xlu0 %3179
    %3182 = vst.msk [vmem:[#allocation4 + $0xe] sm:$0x1] %vm969, %v3180
    %3184 = vrot.lane.b32.xlu0 %v3177, 96
    %v3185 = vpop.permute.xlu0 %3184
    %3187 = vst.msk [vmem:[#allocation5 + $0x1] sm:$0x1] %vm969, %v3185
    %v3188 = vpack.c.bf16 %v3151, %v3151
    %3190 = vrot.lane.b32.xlu0 %v3188, 96
    %v3191 = vpop.permute.xlu0 %3190
    %v3193 = vsel %vm450, %v3191, 0
    %3195 = vmatprep.subr.bf16.mxu0 0
    %3196 = vmatpush1.bf16.msra.mxu0 %v812
    %3197 = vmatprep.subr.bf16.mxu0 0
    %3198 = vmatpush1.bf16.msra.mxu0 %v813
    %3199 = vmatprep.subr.bf16.mxu0 0
    %3200 = vmatpush1.bf16.msra.mxu0 0
    %3201 = vmatprep.subr.bf16.mxu0 0
    %3202 = vmatpush1.bf16.msra.mxu0 0
    %3203 = vmatprep.subr.bf16.mxu0 0
    %3204 = vmatpush1.bf16.msra.mxu0 0
    %3205 = vmatprep.subr.bf16.mxu0 0
    %3206 = vmatpush1.bf16.msra.mxu0 0
    %3207 = vmatprep.subr.bf16.mxu0 0
    %3208 = vmatpush1.bf16.msra.mxu0 0
    %3209 = vmatprep.subr.bf16.mxu0 0
    %3210 = vmatpush1.bf16.msra.mxu0 0
    %3211 = vmatprep.subr.bf16.mxu0 0
    %3212 = vmatpush1.bf16.msra.mxu0 0
    %3213 = vmatprep.subr.bf16.mxu0 0
    %3214 = vmatpush1.bf16.msra.mxu0 0
    %3215 = vmatprep.subr.bf16.mxu0 0
    %3216 = vmatpush1.bf16.msra.mxu0 0
    %3217 = vmatprep.subr.bf16.mxu0 0
    %3218 = vmatpush1.bf16.msra.mxu0 0
    %3219 = vmatprep.subr.bf16.mxu0 0
    %3220 = vmatpush1.bf16.msra.mxu0 0
    %3221 = vmatprep.subr.bf16.mxu0 0
    %3222 = vmatpush1.bf16.msra.mxu0 0
    %3223 = vmatprep.subr.bf16.mxu0 0
    %3224 = vmatpush1.bf16.msra.mxu0 0
    %3225 = vmatprep.subr.bf16.mxu0 0
    %3226 = vmatpush1.bf16.msra.mxu0 0
    %3227 = vmatprep.mubr.bf16.mxu0 0
    %3228 = vmatmul.mubr.bf16.gmra.mrb[0].mxu0 %v3193
    %v3229 = vpop.f32.mrb[0].mxu0
    %v3230 = vadd.f32 %v802, %v3229
    %v3231 = vpop.f32.mrb[0].mxu0
    %v3232 = vpop.f32.mrb[0].mxu0
    %v3233 = vpop.f32.mrb[0].mxu0
    %3234 = vdwg.mxu0
    %v3235 = vpack.c.bf16 %v3177, %v3177
    %3237 = vrot.lane.b32.xlu0 %v3235, 96
    %v3238 = vpop.permute.xlu0 %3237
    %v3240 = vsel %vm450, %v3238, 0
    %3242 = vmatprep.subr.bf16.mxu0 0
    %3243 = vmatpush1.bf16.msra.mxu0 %v867
    %3244 = vmatprep.subr.bf16.mxu0 0
    %3245 = vmatpush1.bf16.msra.mxu0 %v868
    %3246 = vmatprep.subr.bf16.mxu0 0
    %3247 = vmatpush1.bf16.msra.mxu0 0
    %3248 = vmatprep.subr.bf16.mxu0 0
    %3249 = vmatpush1.bf16.msra.mxu0 0
    %3250 = vmatprep.subr.bf16.mxu0 0
    %3251 = vmatpush1.bf16.msra.mxu0 0
    %3252 = vmatprep.subr.bf16.mxu0 0
    %3253 = vmatpush1.bf16.msra.mxu0 0
    %3254 = vmatprep.subr.bf16.mxu0 0
    %3255 = vmatpush1.bf16.msra.mxu0 0
    %3256 = vmatprep.subr.bf16.mxu0 0
    %3257 = vmatpush1.bf16.msra.mxu0 0
    %3258 = vmatprep.subr.bf16.mxu0 0
    %3259 = vmatpush1.bf16.msra.mxu0 0
    %3260 = vmatprep.subr.bf16.mxu0 0
    %3261 = vmatpush1.bf16.msra.mxu0 0
    %3262 = vmatprep.subr.bf16.mxu0 0
    %3263 = vmatpush1.bf16.msra.mxu0 0
    %3264 = vmatprep.subr.bf16.mxu0 0
    %3265 = vmatpush1.bf16.msra.mxu0 0
    %3266 = vmatprep.subr.bf16.mxu0 0
    %3267 = vmatpush1.bf16.msra.mxu0 0
    %3268 = vmatprep.subr.bf16.mxu0 0
    %3269 = vmatpush1.bf16.msra.mxu0 0
    %3270 = vmatprep.subr.bf16.mxu0 0
    %3271 = vmatpush1.bf16.msra.mxu0 0
    %3272 = vmatprep.subr.bf16.mxu0 0
    %3273 = vmatpush1.bf16.msra.mxu0 0
    %3274 = vmatprep.mubr.bf16.mxu0 0
    %3275 = vmatmul.mubr.bf16.gmra.mrb[0].mxu0 %v3240
    %v3276 = vpop.f32.mrb[0].mxu0
    %v3277 = vadd.f32 %v803, %v3276
    %v3278 = vpop.f32.mrb[0].mxu0
    %v3279 = vpop.f32.mrb[0].mxu0
    %v3280 = vpop.f32.mrb[0].mxu0
    %3281 = vdwg.mxu0
    %v3282 = vld [vmem:[#allocation2 + $0xf] sm:$0x1]
    %v3283 = vld [vmem:[#allocation3] sm:$0x1]
    %v3284 = vadd.f32 %v3282, %v3230
    %v3285 = vxor.u32 %v3284, 2147483648
    %v3286 = vmul.f32 %v3285, 1.442695
    %v3287 = vpow.pop %v3286
    %v3288 = vadd.f32 %v3287, 1.0
    %v3289 = vrcp.pop %v3288
    %v3290 = vmul.f32 1.0, %v3289
    %3292 = vrot.lane.b32.xlu0 %v3230, 64
    %v3293 = vpop.permute.xlu0 %3292
    %v3295 = vmul.f32 %v3290, %v3293
    %3297 = vrot.lane.b32.xlu0 %v3295, 64
    %v3298 = vpop.permute.xlu0 %3297
    %v3300 = vadd.f32 %v3282, %v3298
    %v3301 = vtanh.pop %v3300
    %v3302 = vsub.f32 1.0, %v3290
    %3304 = vrot.lane.b32.xlu0 %v3301, 96
    %v3305 = vpop.permute.xlu0 %3304
    %v3307 = vmul.f32 %v3302, %v3305
    %v3308 = vmul.f32 %v3290, %v3151
    %v3309 = vadd.f32 %v3307, %v3308
    %v3310 = vadd.f32 %v3283, %v3277
    %v3311 = vxor.u32 %v3310, 2147483648
    %v3312 = vmul.f32 %v3311, 1.442695
    %v3313 = vpow.pop %v3312
    %v3314 = vadd.f32 %v3313, 1.0
    %v3315 = vrcp.pop %v3314
    %v3316 = vmul.f32 1.0, %v3315
    %3318 = vrot.lane.b32.xlu0 %v3277, 64
    %v3319 = vpop.permute.xlu0 %3318
    %v3321 = vmul.f32 %v3316, %v3319
    %3323 = vrot.lane.b32.xlu0 %v3321, 64
    %v3324 = vpop.permute.xlu0 %3323
    %v3326 = vadd.f32 %v3283, %v3324
    %v3327 = vtanh.pop %v3326
    %v3328 = vsub.f32 1.0, %v3316
    %3330 = vrot.lane.b32.xlu0 %v3327, 96
    %v3331 = vpop.permute.xlu0 %3330
    %v3333 = vmul.f32 %v3328, %v3331
    %v3334 = vmul.f32 %v3316, %v3177
    %v3335 = vadd.f32 %v3333, %v3334
    %3337 = vrot.lane.b32.xlu0 %v3309, 96
    %v3338 = vpop.permute.xlu0 %3337
    %3340 = vst.msk [vmem:[#allocation4 + $0xf] sm:$0x1] %vm969, %v3338
    %3342 = vrot.lane.b32.xlu0 %v3335, 96
    %v3343 = vpop.permute.xlu0 %3342
    %3345 = vst.msk [vmem:[#allocation5] sm:$0x1] %vm969, %v3343
    %v3346 = vld [vmem:[#allocation4] sm:$0xff]
    %v3347 = vld [vmem:[#allocation4 + $0x8] sm:$0xff]
    %v3348 = vpack.c.bf16 %v3347, %v3346
    %v3349 = vld [vmem:[#allocation5] sm:$0xff]
    %v3350 = vld [vmem:[#allocation5 + $0x8] sm:$0xff]
    %v3351 = vpack.c.bf16 %v3350, %v3349
    %v3352 = vld [vmem:[#allocation35] sm:$0xf]
    %v3353 = vld [vmem:[#allocation35 + $0x4] sm:$0xf]
    %v3354 = vld [vmem:[#allocation35 + $0x8] sm:$0xf]
    %v3355 = vld [vmem:[#allocation35 + $0xc] sm:$0xf]
    %v3356 = vld [vmem:[#allocation36] sm:$0xf]
    %v3357 = vld [vmem:[#allocation36 + $0x4] sm:$0xf]
    %v3358 = vld [vmem:[#allocation36 + $0x8] sm:$0xf]
    %v3359 = vld [vmem:[#allocation36 + $0xc] sm:$0xf]
    %v3364 = vunpack.c.l.b16 %v3356
    %v3365 = vunpack.c.l.b16 %v3357
    %v3366 = vunpack.c.l.b16 %v3358
    %v3367 = vunpack.c.l.b16 %v3359
    %v3368 = vpack.c.b16 %v3365, %v3364
    %v3369 = vpack.c.b16 %v3367, %v3366
    %v3373 = vsel %vm450, %v3351, 0
    %3375 = vmatprep.subr.bf16.mxu0 0
    %3376 = vmatpush1.bf16.msra.mxu0 %v3368
    %3377 = vmatprep.subr.bf16.mxu0 0
    %3378 = vmatpush1.bf16.msra.mxu0 %v3369
    %3379 = vmatprep.subr.bf16.mxu0 0
    %3380 = vmatpush1.bf16.msra.mxu0 0
    %3381 = vmatprep.subr.bf16.mxu0 0
    %3382 = vmatpush1.bf16.msra.mxu0 0
    %3383 = vmatprep.subr.bf16.mxu0 0
    %3384 = vmatpush1.bf16.msra.mxu0 0
    %3385 = vmatprep.subr.bf16.mxu0 0
    %3386 = vmatpush1.bf16.msra.mxu0 0
    %3387 = vmatprep.subr.bf16.mxu0 0
    %3388 = vmatpush1.bf16.msra.mxu0 0
    %3389 = vmatprep.subr.bf16.mxu0 0
    %3390 = vmatpush1.bf16.msra.mxu0 0
    %3391 = vmatprep.subr.bf16.mxu0 0
    %3392 = vmatpush1.bf16.msra.mxu0 0
    %3393 = vmatprep.subr.bf16.mxu0 0
    %3394 = vmatpush1.bf16.msra.mxu0 0
    %3395 = vmatprep.subr.bf16.mxu0 0
    %3396 = vmatpush1.bf16.msra.mxu0 0
    %3397 = vmatprep.subr.bf16.mxu0 0
    %3398 = vmatpush1.bf16.msra.mxu0 0
    %3399 = vmatprep.subr.bf16.mxu0 0
    %3400 = vmatpush1.bf16.msra.mxu0 0
    %3401 = vmatprep.subr.bf16.mxu0 0
    %3402 = vmatpush1.bf16.msra.mxu0 0
    %3403 = vmatprep.subr.bf16.mxu0 0
    %3404 = vmatpush1.bf16.msra.mxu0 0
    %3405 = vmatprep.subr.bf16.mxu0 0
    %3406 = vmatpush1.bf16.msra.mxu0 0
    %3407 = vmatprep.mubr.bf16.mxu0 0
    %3408 = vmatmul.mubr.bf16.gmra.mrb[0].mxu0 %v3373
    %v3409 = vpop.f32.mrb[0].mxu0
    %v3410 = vadd.f32 0.0, %v3409
    %v3411 = vpop.f32.mrb[0].mxu0
    %v3412 = vpop.f32.mrb[0].mxu0
    %v3413 = vadd.f32 0.0, %v3412
    %v3414 = vpop.f32.mrb[0].mxu0
    %3415 = vdwg.mxu0
    %v3420 = vunpack.c.l.b16 %v3352
    %v3421 = vunpack.c.l.b16 %v3353
    %v3422 = vunpack.c.l.b16 %v3354
    %v3423 = vunpack.c.l.b16 %v3355
    %v3424 = vpack.c.b16 %v3421, %v3420
    %v3425 = vpack.c.b16 %v3423, %v3422
    %v3429 = vsel %vm450, %v3348, 0
    %3431 = vmatprep.subr.bf16.mxu0 0
    %3432 = vmatpush1.bf16.msra.mxu0 %v3424
    %3433 = vmatprep.subr.bf16.mxu0 0
    %3434 = vmatpush1.bf16.msra.mxu0 %v3425
    %3435 = vmatprep.subr.bf16.mxu0 0
    %3436 = vmatpush1.bf16.msra.mxu0 0
    %3437 = vmatprep.subr.bf16.mxu0 0
    %3438 = vmatpush1.bf16.msra.mxu0 0
    %3439 = vmatprep.subr.bf16.mxu0 0
    %3440 = vmatpush1.bf16.msra.mxu0 0
    %3441 = vmatprep.subr.bf16.mxu0 0
    %3442 = vmatpush1.bf16.msra.mxu0 0
    %3443 = vmatprep.subr.bf16.mxu0 0
    %3444 = vmatpush1.bf16.msra.mxu0 0
    %3445 = vmatprep.subr.bf16.mxu0 0
    %3446 = vmatpush1.bf16.msra.mxu0 0
    %3447 = vmatprep.subr.bf16.mxu0 0
    %3448 = vmatpush1.bf16.msra.mxu0 0
    %3449 = vmatprep.subr.bf16.mxu0 0
    %3450 = vmatpush1.bf16.msra.mxu0 0
    %3451 = vmatprep.subr.bf16.mxu0 0
    %3452 = vmatpush1.bf16.msra.mxu0 0
    %3453 = vmatprep.subr.bf16.mxu0 0
    %3454 = vmatpush1.bf16.msra.mxu0 0
    %3455 = vmatprep.subr.bf16.mxu0 0
    %3456 = vmatpush1.bf16.msra.mxu0 0
    %3457 = vmatprep.subr.bf16.mxu0 0
    %3458 = vmatpush1.bf16.msra.mxu0 0
    %3459 = vmatprep.subr.bf16.mxu0 0
    %3460 = vmatpush1.bf16.msra.mxu0 0
    %3461 = vmatprep.subr.bf16.mxu0 0
    %3462 = vmatpush1.bf16.msra.mxu0 0
    %3463 = vmatprep.mubr.bf16.mxu0 0
    %3464 = vmatmul.mubr.bf16.gmra.mrb[0].mxu0 %v3429
    %v3465 = vpop.f32.mrb[0].mxu0
    %v3466 = vadd.f32 %v3410, %v3465
    %v3467 = vpop.f32.mrb[0].mxu0
    %v3468 = vpop.f32.mrb[0].mxu0
    %v3469 = vadd.f32 %v3413, %v3468
    %v3470 = vpop.f32.mrb[0].mxu0
    %3471 = vdwg.mxu0
    %v3472 = vld [vmem:[#allocation38] sm:$0x1]
    %v3474 = vlaneseq
    %v3475 = vshrl.u32 %v3474, 7
    %v3476 = vsub.s32 0, %v3475
    %v3477 = vrot.slane %v3472, %v3476
    %v3479 = vadd.f32 %v3466, %v3477
    %v3480 = vadd.f32 %v3469, %v3477
    %3481 = vst.msk [vmem:[#allocation39] sm:$0xff] %vm401, %v3479
    %3482 = vst.msk [vmem:[#allocation39 + $0x8] sm:$0xff] %vm401, %v3480
    // Predicated region
    $region170: #{forward.1} parent=1 // pred_check
      _
    $region171: #{forward.1} parent=1 // pred_check_branch
      %3484 = sbr.rel (0) target = $region173
    $region172: #{forward.1} parent=1 // pred_region
      %s3486 = ssub.s32 256, 256
      %3487 = vsyncadd [#allocation8], %s3486
      %s3488 = sshll.u32 [#allocation39], 4
      %s3489 = int_to_ptr.vmem [resolvable:$true] %s3488
      %3494 = dma.vmem_to_hbm [thread:$0]  %s3489, 256, %s21, [#allocation8], 128, 128, 8
    $region173: #{forward.1} parent=1 // pred_fallthru
      _
    // Predicated region
    $region174: #{forward.1} parent=1 // pred_check
      _
    $region175: #{forward.1} parent=1 // pred_check_branch
      %3496 = sbr.rel (0) target = $region177
    $region176: #{forward.1} parent=1 // pred_region
      %3497 = dma.done [#allocation8], 256
    $region177: #{forward.1} parent=1 // pred_fallthru
      _
    %3498 = vsyncpa [#allocation7], 1
    %3499 = vsyncpa [#allocation10], 1
    %3500 = vsyncpa [#allocation13], 1
    %3501 = vsyncpa [#allocation16], 1
    %3502 = vsyncpa [#allocation19], 1
    %3503 = vsyncpa [#allocation22], 1
    %3504 = vsyncpa [#allocation25], 1
    %3505 = vsyncpa [#allocation28], 1
    %3506 = vsyncpa [#allocation31], 1
    %3507 = vsyncpa [#allocation34], 1
    %3508 = vsyncpa [#allocation37], 1
    %3509 = vsyncpa [#allocation8], 1

</llo_original>
